<compile_context>
chip_gen: v6e
topology: v6e:2x2x1
jax: 0.10.0
libtpu: 0.0.40
codegen_flags: <defaults>
</compile_context>

<pallas_src>
import functools

import numpy as np
import jax
import jax.numpy as jnp
from jax import lax
from jax.experimental import pallas as pl
from jax.experimental.pallas import tpu as pltpu

MASK = 4
QSCALE = 2.0 ** (4 - MASK)   # math.pow(2, 4 - mask)
BN_EPS = 1e-5

_LAYER_DEFS = [
    # (cin, cout, k, stride, pad, activation)
    (3, 16, 5, 1, 2, "leaky_relu"),
    (16, 32, 5, 2, 2, "leaky_relu"),
    (32, 32, 3, 2, 1, "leaky_relu"),
    (32, 6, 3, 1, 1, "tanh"),
]


# ---------------------------------------------------------------------------
# Fused Pallas kernel: entire Encoder forward for one image per grid step.
# ---------------------------------------------------------------------------
def _encoder_kernel(x_ref, w1, b1, w2, s2, b2, w3, s3, b3, w4, b4,
                    enc_ref, pre_ref, *, geom, qscale):
    g1, g2, g3, g4 = geom

    def conv(xp, w_ref, b_ref, ho, sel_ref=None):
        # xp      : (Hp, Wp*Cin) f32 activation (row-flattened, zero padded)
        # w_ref   : (k, Wp*Cin(+pad), Wo*Cout) bf16 banded conv-as-matmul weights
        # sel_ref : (k, Ho, Hp) bf16 0/1 row-selection matrices (stride-2 layers)
        k, n = w_ref.shape[0], w_ref.shape[2]
        acc = jnp.zeros((ho, n), jnp.float32)
        xpb = xp.astype(jnp.bfloat16) if sel_ref is not None else None
        for i in range(k):
            if sel_ref is None:                         # stride 1: contiguous rows
                rows = xp[i:i + ho, :].astype(jnp.bfloat16)
            else:                                       # stride 2: 0/1 select matmul
                rows = jnp.dot(sel_ref[i], xpb,
                               preferred_element_type=jnp.float32
                               ).astype(jnp.bfloat16)
            acc = acc + jnp.dot(rows, w_ref[i],
                                preferred_element_type=jnp.float32)   # MXU, f32 acc
        return acc + b_ref[...]                          # folded BN bias (broadcast)

    def lrelu(v):
        return jnp.where(v >= 0.0, v, 0.01 * v)          # PyTorch default slope

    def pad_rowflat(y, h, w, c, p):
        # (h, w*c) f32 -> zero-padded (h+2p, (w+2p)*c) f32, row-flattened layout
        zc = jnp.zeros((h, p * c), jnp.float32)
        y = jnp.concatenate([zc, y, zc], axis=1)
        zr = jnp.zeros((p, (w + 2 * p) * c), jnp.float32)
        return jnp.concatenate([zr, y, zr], axis=0)

    xp1 = x_ref[0]                                                     # (Hp1, K1pad)
    y1 = lrelu(conv(xp1, w1, b1, g1["ho"]))                            # (16, 256)
    xp2 = pad_rowflat(y1, g1["ho"], g1["wo"], g1["cout"], g2["p"])     # (20, 320)
    y2 = lrelu(conv(xp2, w2, b2, g2["ho"], s2))                        # (8, 256)
    xp3 = pad_rowflat(y2, g2["ho"], g2["wo"], g2["cout"], g3["p"])     # (10, 320)
    y3 = lrelu(conv(xp3, w3, b3, g3["ho"], s3))                        # (4, 128)
    xp4 = pad_rowflat(y3, g3["ho"], g3["wo"], g3["cout"], g4["p"])     # (6, 192)
    y4 = jnp.tanh(conv(xp4, w4, b4, g4["ho"]))                         # (4, 24)

    pre_ref[0] = y4                                   # pre-quantization activations
    enc_ref[0] = jnp.ceil(y4 * qscale)                # (out * 2**(4-mask)).ceil()


# ---------------------------------------------------------------------------
# Deterministic synthetic parameters (shapes follow Encoder._convolutional_layer)
# ---------------------------------------------------------------------------
def init_raw_params(key):
    params = []
    for (cin, cout, k, s, p, act) in _LAYER_DEFS:
        key, k1, k2, k3, k4, k5, k6 = jax.random.split(key, 7)
        w = jax.random.normal(k1, (cout, cin, k, k), jnp.float32) / jnp.sqrt(cin * k * k)
        b = 0.1 * jax.random.normal(k2, (cout,), jnp.float32)
        gamma = 1.0 + 0.1 * jax.random.normal(k3, (cout,), jnp.float32)
        beta = 0.1 * jax.random.normal(k4, (cout,), jnp.float32)
        rmean = 0.1 * jax.random.normal(k5, (cout,), jnp.float32)
        rvar = 0.5 + jax.random.uniform(k6, (cout,), jnp.float32)
        params.append(dict(w=w, b=b, gamma=gamma, beta=beta, rmean=rmean, rvar=rvar,
                           cin=cin, cout=cout, k=k, s=s, p=p, act=act))
    return params


def build_kernel_params(raw, height, width):
    """Offline prep: geometry + matmul-form weights (BN folded, bf16) for a
    fixed input spatial size."""
    geom = []
    h, w = height, width
    for lp in raw:
        k, s, p = lp["k"], lp["s"], lp["p"]
        hp, wp = h + 2 * p, w + 2 * p
        ho = (h + 2 * p - k) // s + 1
        wo = (w + 2 * p - k) // s + 1
        geom.append(dict(k=k, s=s, p=p, cin=lp["cin"], cout=lp["cout"],
                         h=h, w=w, hp=hp, wp=wp, ho=ho, wo=wo))
        h, w = ho, wo

    # pad layer-1's K (Wp*Cin) up to a multiple of 8 for aligned loads
    k1 = geom[0]["wp"] * geom[0]["cin"]
    k1_pad = -(-k1 // 8) * 8

    wmats, sels, biases = [], [], []
    for li, (lp, g) in enumerate(zip(raw, geom)):
        scale = np.asarray(lp["gamma"]) / np.sqrt(np.asarray(lp["rvar"]) + BN_EPS)
        bias_eff = ((np.asarray(lp["b"]) - np.asarray(lp["rmean"])) * scale
                    + np.asarray(lp["beta"]))
        ws = np.asarray(lp["w"], np.float32) * scale[:, None, None, None]  # (co,ci,kh,kw)

        kdim = g["wp"] * g["cin"]
        kdim_pad = k1_pad if li == 0 else kdim
        m = np.zeros((g["k"], kdim_pad, g["wo"] * g["cout"]), np.float32)
        for i in range(g["k"]):
            for j in range(g["k"]):
                blk = ws[:, :, i, j].T                                     # (cin, cout)
                for o in range(g["wo"]):
                    wprime = g["s"] * o + j
                    m[i, wprime * g["cin"]:(wprime + 1) * g["cin"],
                      o * g["cout"]:(o + 1) * g["cout"]] = blk
        wmats.append(jnp.asarray(m, jnp.bfloat16))

        if g["s"] == 1:
            sels.append(None)
        else:
            sm = np.zeros((g["k"], g["ho"], g["hp"]), np.float32)
            for i in range(g["k"]):
                for o in range(g["ho"]):
                    sm[i, o, g["s"] * o + i] = 1.0
            sels.append(jnp.asarray(sm, jnp.bfloat16))

        biases.append(jnp.asarray(np.tile(bias_eff, g["wo"]).astype(np.float32)
                                  ).reshape(1, g["wo"] * g["cout"]))

    return dict(geom=geom, w=wmats, S=sels, b=biases, k1_pad=k1_pad)


# ---------------------------------------------------------------------------
# Encoder forward (eval path).  Returns (encoded, pre_quantization) in NCHW.
# ---------------------------------------------------------------------------
def encoder_forward(x_nchw, kp):
    geom = kp["geom"]
    g1, g4 = geom[0], geom[3]
    n = x_nchw.shape[0]

    # NCHW -> NHWC -> zero-pad for layer 1 -> row-flatten (H, W*C) -> lane-pad
    x = jnp.transpose(x_nchw, (0, 2, 3, 1))
    x = jnp.pad(x, ((0, 0), (g1["p"], g1["p"]), (g1["p"], g1["p"]), (0, 0)))
    x = x.reshape(n, g1["hp"], g1["wp"] * g1["cin"])
    x = jnp.pad(x, ((0, 0), (0, 0), (0, kp["k1_pad"] - g1["wp"] * g1["cin"])))
    x = x.astype(jnp.float32)

    out_flat = (g4["ho"], g4["wo"] * g4["cout"])
    kernel = functools.partial(_encoder_kernel, geom=tuple(geom), qscale=QSCALE)

    def full(arr):
        nd = arr.ndim
        return pl.BlockSpec(arr.shape, lambda i, _nd=nd: (0,) * _nd)

    w, S, b = kp["w"], kp["S"], kp["b"]
    in_specs = [
        pl.BlockSpec((1, g1["hp"], kp["k1_pad"]), lambda i: (i, 0, 0)),
        full(w[0]), full(b[0]),
        full(w[1]), full(S[1]), full(b[1]),
        full(w[2]), full(S[2]), full(b[2]),
        full(w[3]), full(b[3]),
    ]
    out_spec = pl.BlockSpec((1,) + out_flat, lambda i: (i, 0, 0))

    enc, pre = pl.pallas_call(
        kernel,
        out_shape=(jax.ShapeDtypeStruct((n,) + out_flat, jnp.float32),
                   jax.ShapeDtypeStruct((n,) + out_flat, jnp.float32)),
        grid=(n,),
        in_specs=in_specs,
        out_specs=(out_spec, out_spec),
        compiler_params=pltpu.CompilerParams(dimension_semantics=("parallel",)),
    )(x, w[0], b[0], w[1], S[1], b[1], w[2], S[2], b[2], w[3], b[3])

    def unflatten(a):
        a = a.reshape(n, g4["ho"], g4["wo"], g4["cout"])
        return jnp.transpose(a, (0, 3, 1, 2))            # NHWC -> NCHW

    return unflatten(enc), unflatten(pre)


# ---------------------------------------------------------------------------
# Pure-JAX reference (XLA convs, f32) for correctness checking.
# ---------------------------------------------------------------------------
def reference_forward(x_nchw, raw):
    x = x_nchw
    for p in raw:
        y = lax.conv_general_dilated(
            x, p["w"], (p["s"], p["s"]), [(p["p"], p["p"])] * 2,
            dimension_numbers=("NCHW", "OIHW", "NCHW"))
        y = y + p["b"][None, :, None, None]
        y = (y - p["rmean"][None, :, None, None]) / jnp.sqrt(
            p["rvar"] + BN_EPS)[None, :, None, None]
        y = y * p["gamma"][None, :, None, None] + p["beta"][None, :, None, None]
        if p["act"] == "leaky_relu":
            y = jnp.where(y >= 0, y, 0.01 * y)
        else:
            y = jnp.tanh(y)
        x = y
    return x, jnp.ceil(x * QSCALE)    # (pre-quantization activations, encoded)


if __name__ == "__main__":
    key = jax.random.PRNGKey(0)
    key, pkey, xkey = jax.random.split(key, 3)
    raw = init_raw_params(pkey)

    # Small input consistent with the module: NCHW, 3 channels, 16x16 spatial.
    x = jax.random.normal(xkey, (2, 3, 16, 16), jnp.float32)
    kp = build_kernel_params(raw, 16, 16)

    enc, pre = encoder_forward(x, kp)
    enc = jax.block_until_ready(enc)
    pre = jax.block_until_ready(pre)
    assert enc.shape == (2, 6, 4, 4), enc.shape

    ref_pre, ref_enc = reference_forward(x, raw)
    ref_pre = jax.block_until_ready(ref_pre)

    # Tight pre-quantization check (bf16 MXU operands, f32 accumulation).
    pre_diff = float(jnp.max(jnp.abs(pre - ref_pre)))
    assert pre_diff < 0.15, f"pre-quantization mismatch vs reference: {pre_diff}"
    # ceil() may flip by exactly 1 near integer boundaries under bf16 rounding.
    enc_diff = float(jnp.max(jnp.abs(enc - ref_enc)))
    assert enc_diff <= 1.0, f"encoded mismatch vs reference: {enc_diff}"

    print("KERNEL_OK")
</pallas_src>

<mosaic_0001>
module attributes {stable_mosaic.version = 11 : i64} {
  func.func @_encoder_kernel(%arg0: i32, %arg1: memref<1x20x64xf32, #tpu.memory_space<vmem>>, %arg2: memref<5x64x256xbf16, #tpu.memory_space<vmem>>, %arg3: memref<1x256xf32, #tpu.memory_space<vmem>>, %arg4: memref<5x320x256xbf16, #tpu.memory_space<vmem>>, %arg5: memref<5x8x20xbf16, #tpu.memory_space<vmem>>, %arg6: memref<1x256xf32, #tpu.memory_space<vmem>>, %arg7: memref<3x320x128xbf16, #tpu.memory_space<vmem>>, %arg8: memref<3x4x10xbf16, #tpu.memory_space<vmem>>, %arg9: memref<1x128xf32, #tpu.memory_space<vmem>>, %arg10: memref<3x192x24xbf16, #tpu.memory_space<vmem>>, %arg11: memref<1x24xf32, #tpu.memory_space<vmem>>, %arg12: memref<1x4x24xf32, #tpu.memory_space<vmem>>, %arg13: memref<1x4x24xf32, #tpu.memory_space<vmem>>) attributes {dimension_semantics = [#tpu.dimension_semantics<parallel>], iteration_bounds = array<i64: 2>, scalar_prefetch = 0 : i64, scratch_operands = 0 : i64, tpu.core_type = #tpu.core_type<tc>, window_params = [{transform_indices = @transform_0, window_bounds = array<i64: 1, 20, 64>}, {pipeline_mode = #tpu.pipeline_mode<synchronous>, transform_indices = @transform_1, window_bounds = array<i64: 5, 64, 256>}, {pipeline_mode = #tpu.pipeline_mode<synchronous>, transform_indices = @transform_2, window_bounds = array<i64: 1, 256>}, {pipeline_mode = #tpu.pipeline_mode<synchronous>, transform_indices = @transform_3, window_bounds = array<i64: 5, 320, 256>}, {pipeline_mode = #tpu.pipeline_mode<synchronous>, transform_indices = @transform_4, window_bounds = array<i64: 5, 8, 20>}, {pipeline_mode = #tpu.pipeline_mode<synchronous>, transform_indices = @transform_5, window_bounds = array<i64: 1, 256>}, {pipeline_mode = #tpu.pipeline_mode<synchronous>, transform_indices = @transform_6, window_bounds = array<i64: 3, 320, 128>}, {pipeline_mode = #tpu.pipeline_mode<synchronous>, transform_indices = @transform_7, window_bounds = array<i64: 3, 4, 10>}, {pipeline_mode = #tpu.pipeline_mode<synchronous>, transform_indices = @transform_8, window_bounds = array<i64: 1, 128>}, {pipeline_mode = #tpu.pipeline_mode<synchronous>, transform_indices = @transform_9, window_bounds = array<i64: 3, 192, 24>}, {pipeline_mode = #tpu.pipeline_mode<synchronous>, transform_indices = @transform_10, window_bounds = array<i64: 1, 24>}, {transform_indices = @transform_11, window_bounds = array<i64: 1, 4, 24>}, {transform_indices = @transform_12, window_bounds = array<i64: 1, 4, 24>}]} {
    %c0 = arith.constant 0 : index
    %c0_0 = arith.constant 0 : index
    %c0_1 = arith.constant 0 : index
    %0 = vector.load %arg1[%c0, %c0_0, %c0_1] : memref<1x20x64xf32, #tpu.memory_space<vmem>>, vector<1x20x64xf32>
    %1 = vector.shape_cast %0 : vector<1x20x64xf32> to vector<20x64xf32>
    %cst = arith.constant 0.000000e+00 : f32
    %2 = vector.broadcast %cst : f32 to vector<16x256xf32>
    %3 = vector.extract_strided_slice %1 {offsets = [0, 0], sizes = [16, 64], strides = [1, 1]} : vector<20x64xf32> to vector<16x64xf32>
    %4 = arith.truncf %3 : vector<16x64xf32> to vector<16x64xbf16>
    %c0_2 = arith.constant 0 : index
    %c0_3 = arith.constant 0 : index
    %c0_4 = arith.constant 0 : index
    %5 = vector.load %arg2[%c0_2, %c0_3, %c0_4] : memref<5x64x256xbf16, #tpu.memory_space<vmem>>, vector<1x64x256xbf16>
    %6 = vector.shape_cast %5 : vector<1x64x256xbf16> to vector<64x256xbf16>
    %cst_5 = arith.constant dense<0.000000e+00> : vector<16x256xf32>
    %7 = tpu.matmul %4, %6, %cst_5 {dimension_numbers = #tpu.dot_dimension_numbers<[1], [0], [0], [1], [0, 0, 1, 1], [], []>} : vector<16x64xbf16>, vector<64x256xbf16>, vector<16x256xf32> -> vector<16x256xf32>
    %8 = arith.addf %2, %7 : vector<16x256xf32>
    %9 = vector.extract_strided_slice %1 {offsets = [1, 0], sizes = [16, 64], strides = [1, 1]} : vector<20x64xf32> to vector<16x64xf32>
    %10 = arith.truncf %9 : vector<16x64xf32> to vector<16x64xbf16>
    %c1 = arith.constant 1 : index
    %c0_6 = arith.constant 0 : index
    %c0_7 = arith.constant 0 : index
    %11 = vector.load %arg2[%c1, %c0_6, %c0_7] : memref<5x64x256xbf16, #tpu.memory_space<vmem>>, vector<1x64x256xbf16>
    %12 = vector.shape_cast %11 : vector<1x64x256xbf16> to vector<64x256xbf16>
    %cst_8 = arith.constant dense<0.000000e+00> : vector<16x256xf32>
    %13 = tpu.matmul %10, %12, %cst_8 {dimension_numbers = #tpu.dot_dimension_numbers<[1], [0], [0], [1], [0, 0, 1, 1], [], []>} : vector<16x64xbf16>, vector<64x256xbf16>, vector<16x256xf32> -> vector<16x256xf32>
    %14 = arith.addf %8, %13 : vector<16x256xf32>
    %15 = vector.extract_strided_slice %1 {offsets = [2, 0], sizes = [16, 64], strides = [1, 1]} : vector<20x64xf32> to vector<16x64xf32>
    %16 = arith.truncf %15 : vector<16x64xf32> to vector<16x64xbf16>
    %c2 = arith.constant 2 : index
    %c0_9 = arith.constant 0 : index
    %c0_10 = arith.constant 0 : index
    %17 = vector.load %arg2[%c2, %c0_9, %c0_10] : memref<5x64x256xbf16, #tpu.memory_space<vmem>>, vector<1x64x256xbf16>
    %18 = vector.shape_cast %17 : vector<1x64x256xbf16> to vector<64x256xbf16>
    %cst_11 = arith.constant dense<0.000000e+00> : vector<16x256xf32>
    %19 = tpu.matmul %16, %18, %cst_11 {dimension_numbers = #tpu.dot_dimension_numbers<[1], [0], [0], [1], [0, 0, 1, 1], [], []>} : vector<16x64xbf16>, vector<64x256xbf16>, vector<16x256xf32> -> vector<16x256xf32>
    %20 = arith.addf %14, %19 : vector<16x256xf32>
    %21 = vector.extract_strided_slice %1 {offsets = [3, 0], sizes = [16, 64], strides = [1, 1]} : vector<20x64xf32> to vector<16x64xf32>
    %22 = arith.truncf %21 : vector<16x64xf32> to vector<16x64xbf16>
    %c3 = arith.constant 3 : index
    %c0_12 = arith.constant 0 : index
    %c0_13 = arith.constant 0 : index
    %23 = vector.load %arg2[%c3, %c0_12, %c0_13] : memref<5x64x256xbf16, #tpu.memory_space<vmem>>, vector<1x64x256xbf16>
    %24 = vector.shape_cast %23 : vector<1x64x256xbf16> to vector<64x256xbf16>
    %cst_14 = arith.constant dense<0.000000e+00> : vector<16x256xf32>
    %25 = tpu.matmul %22, %24, %cst_14 {dimension_numbers = #tpu.dot_dimension_numbers<[1], [0], [0], [1], [0, 0, 1, 1], [], []>} : vector<16x64xbf16>, vector<64x256xbf16>, vector<16x256xf32> -> vector<16x256xf32>
    %26 = arith.addf %20, %25 : vector<16x256xf32>
    %27 = vector.extract_strided_slice %1 {offsets = [4, 0], sizes = [16, 64], strides = [1, 1]} : vector<20x64xf32> to vector<16x64xf32>
    %28 = arith.truncf %27 : vector<16x64xf32> to vector<16x64xbf16>
    %c4 = arith.constant 4 : index
    %c0_15 = arith.constant 0 : index
    %c0_16 = arith.constant 0 : index
    %29 = vector.load %arg2[%c4, %c0_15, %c0_16] : memref<5x64x256xbf16, #tpu.memory_space<vmem>>, vector<1x64x256xbf16>
    %30 = vector.shape_cast %29 : vector<1x64x256xbf16> to vector<64x256xbf16>
    %cst_17 = arith.constant dense<0.000000e+00> : vector<16x256xf32>
    %31 = tpu.matmul %28, %30, %cst_17 {dimension_numbers = #tpu.dot_dimension_numbers<[1], [0], [0], [1], [0, 0, 1, 1], [], []>} : vector<16x64xbf16>, vector<64x256xbf16>, vector<16x256xf32> -> vector<16x256xf32>
    %32 = arith.addf %26, %31 : vector<16x256xf32>
    %c0_18 = arith.constant 0 : index
    %c0_19 = arith.constant 0 : index
    %33 = vector.load %arg3[%c0_18, %c0_19] : memref<1x256xf32, #tpu.memory_space<vmem>>, vector<1x256xf32>
    %34 = vector.broadcast %33 : vector<1x256xf32> to vector<16x256xf32>
    %35 = arith.addf %32, %34 : vector<16x256xf32>
    %cst_20 = arith.constant 0.000000e+00 : f32
    %36 = vector.broadcast %cst_20 : f32 to vector<16x256xf32>
    %37 = arith.cmpf oge, %35, %36 : vector<16x256xf32>
    %cst_21 = arith.constant 0.00999999977 : f32
    %38 = vector.broadcast %cst_21 : f32 to vector<16x256xf32>
    %39 = arith.mulf %38, %35 : vector<16x256xf32>
    %40 = arith.select %37, %35, %39 : vector<16x256xi1>, vector<16x256xf32>
    %cst_22 = arith.constant 0.000000e+00 : f32
    %41 = vector.broadcast %cst_22 : f32 to vector<16x32xf32>
    %42 = tpu.concatenate %41, %40, %41 in 1 : vector<16x32xf32>, vector<16x256xf32>, vector<16x32xf32> -> vector<16x320xf32>
    %cst_23 = arith.constant 0.000000e+00 : f32
    %43 = vector.broadcast %cst_23 : f32 to vector<2x320xf32>
    %44 = tpu.concatenate %43, %42, %43 in 0 : vector<2x320xf32>, vector<16x320xf32>, vector<2x320xf32> -> vector<20x320xf32>
    %cst_24 = arith.constant 0.000000e+00 : f32
    %45 = vector.broadcast %cst_24 : f32 to vector<8x256xf32>
    %46 = arith.truncf %44 : vector<20x320xf32> to vector<20x320xbf16>
    %c0_25 = arith.constant 0 : index
    %c0_26 = arith.constant 0 : index
    %c0_27 = arith.constant 0 : index
    %47 = vector.load %arg5[%c0_25, %c0_26, %c0_27] : memref<5x8x20xbf16, #tpu.memory_space<vmem>>, vector<1x8x20xbf16>
    %48 = vector.shape_cast %47 : vector<1x8x20xbf16> to vector<8x20xbf16>
    %cst_28 = arith.constant dense<0.000000e+00> : vector<8x320xf32>
    %49 = tpu.matmul %48, %46, %cst_28 {dimension_numbers = #tpu.dot_dimension_numbers<[1], [0], [0], [1], [0, 0, 1, 1], [], []>} : vector<8x20xbf16>, vector<20x320xbf16>, vector<8x320xf32> -> vector<8x320xf32>
    %50 = arith.truncf %49 : vector<8x320xf32> to vector<8x320xbf16>
    %c0_29 = arith.constant 0 : index
    %c0_30 = arith.constant 0 : index
    %c0_31 = arith.constant 0 : index
    %51 = vector.load %arg4[%c0_29, %c0_30, %c0_31] : memref<5x320x256xbf16, #tpu.memory_space<vmem>>, vector<1x320x256xbf16>
    %52 = vector.shape_cast %51 : vector<1x320x256xbf16> to vector<320x256xbf16>
    %cst_32 = arith.constant dense<0.000000e+00> : vector<8x256xf32>
    %53 = tpu.matmul %50, %52, %cst_32 {dimension_numbers = #tpu.dot_dimension_numbers<[1], [0], [0], [1], [0, 0, 1, 1], [], []>} : vector<8x320xbf16>, vector<320x256xbf16>, vector<8x256xf32> -> vector<8x256xf32>
    %54 = arith.addf %45, %53 : vector<8x256xf32>
    %c1_33 = arith.constant 1 : index
    %c0_34 = arith.constant 0 : index
    %c0_35 = arith.constant 0 : index
    %55 = vector.load %arg5[%c1_33, %c0_34, %c0_35] : memref<5x8x20xbf16, #tpu.memory_space<vmem>>, vector<1x8x20xbf16>
    %56 = vector.shape_cast %55 : vector<1x8x20xbf16> to vector<8x20xbf16>
    %cst_36 = arith.constant dense<0.000000e+00> : vector<8x320xf32>
    %57 = tpu.matmul %56, %46, %cst_36 {dimension_numbers = #tpu.dot_dimension_numbers<[1], [0], [0], [1], [0, 0, 1, 1], [], []>} : vector<8x20xbf16>, vector<20x320xbf16>, vector<8x320xf32> -> vector<8x320xf32>
    %58 = arith.truncf %57 : vector<8x320xf32> to vector<8x320xbf16>
    %c1_37 = arith.constant 1 : index
    %c0_38 = arith.constant 0 : index
    %c0_39 = arith.constant 0 : index
    %59 = vector.load %arg4[%c1_37, %c0_38, %c0_39] : memref<5x320x256xbf16, #tpu.memory_space<vmem>>, vector<1x320x256xbf16>
    %60 = vector.shape_cast %59 : vector<1x320x256xbf16> to vector<320x256xbf16>
    %cst_40 = arith.constant dense<0.000000e+00> : vector<8x256xf32>
    %61 = tpu.matmul %58, %60, %cst_40 {dimension_numbers = #tpu.dot_dimension_numbers<[1], [0], [0], [1], [0, 0, 1, 1], [], []>} : vector<8x320xbf16>, vector<320x256xbf16>, vector<8x256xf32> -> vector<8x256xf32>
    %62 = arith.addf %54, %61 : vector<8x256xf32>
    %c2_41 = arith.constant 2 : index
    %c0_42 = arith.constant 0 : index
    %c0_43 = arith.constant 0 : index
    %63 = vector.load %arg5[%c2_41, %c0_42, %c0_43] : memref<5x8x20xbf16, #tpu.memory_space<vmem>>, vector<1x8x20xbf16>
    %64 = vector.shape_cast %63 : vector<1x8x20xbf16> to vector<8x20xbf16>
    %cst_44 = arith.constant dense<0.000000e+00> : vector<8x320xf32>
    %65 = tpu.matmul %64, %46, %cst_44 {dimension_numbers = #tpu.dot_dimension_numbers<[1], [0], [0], [1], [0, 0, 1, 1], [], []>} : vector<8x20xbf16>, vector<20x320xbf16>, vector<8x320xf32> -> vector<8x320xf32>
    %66 = arith.truncf %65 : vector<8x320xf32> to vector<8x320xbf16>
    %c2_45 = arith.constant 2 : index
    %c0_46 = arith.constant 0 : index
    %c0_47 = arith.constant 0 : index
    %67 = vector.load %arg4[%c2_45, %c0_46, %c0_47] : memref<5x320x256xbf16, #tpu.memory_space<vmem>>, vector<1x320x256xbf16>
    %68 = vector.shape_cast %67 : vector<1x320x256xbf16> to vector<320x256xbf16>
    %cst_48 = arith.constant dense<0.000000e+00> : vector<8x256xf32>
    %69 = tpu.matmul %66, %68, %cst_48 {dimension_numbers = #tpu.dot_dimension_numbers<[1], [0], [0], [1], [0, 0, 1, 1], [], []>} : vector<8x320xbf16>, vector<320x256xbf16>, vector<8x256xf32> -> vector<8x256xf32>
    %70 = arith.addf %62, %69 : vector<8x256xf32>
    %c3_49 = arith.constant 3 : index
    %c0_50 = arith.constant 0 : index
    %c0_51 = arith.constant 0 : index
    %71 = vector.load %arg5[%c3_49, %c0_50, %c0_51] : memref<5x8x20xbf16, #tpu.memory_space<vmem>>, vector<1x8x20xbf16>
    %72 = vector.shape_cast %71 : vector<1x8x20xbf16> to vector<8x20xbf16>
    %cst_52 = arith.constant dense<0.000000e+00> : vector<8x320xf32>
    %73 = tpu.matmul %72, %46, %cst_52 {dimension_numbers = #tpu.dot_dimension_numbers<[1], [0], [0], [1], [0, 0, 1, 1], [], []>} : vector<8x20xbf16>, vector<20x320xbf16>, vector<8x320xf32> -> vector<8x320xf32>
    %74 = arith.truncf %73 : vector<8x320xf32> to vector<8x320xbf16>
    %c3_53 = arith.constant 3 : index
    %c0_54 = arith.constant 0 : index
    %c0_55 = arith.constant 0 : index
    %75 = vector.load %arg4[%c3_53, %c0_54, %c0_55] : memref<5x320x256xbf16, #tpu.memory_space<vmem>>, vector<1x320x256xbf16>
    %76 = vector.shape_cast %75 : vector<1x320x256xbf16> to vector<320x256xbf16>
    %cst_56 = arith.constant dense<0.000000e+00> : vector<8x256xf32>
    %77 = tpu.matmul %74, %76, %cst_56 {dimension_numbers = #tpu.dot_dimension_numbers<[1], [0], [0], [1], [0, 0, 1, 1], [], []>} : vector<8x320xbf16>, vector<320x256xbf16>, vector<8x256xf32> -> vector<8x256xf32>
    %78 = arith.addf %70, %77 : vector<8x256xf32>
    %c4_57 = arith.constant 4 : index
    %c0_58 = arith.constant 0 : index
    %c0_59 = arith.constant 0 : index
    %79 = vector.load %arg5[%c4_57, %c0_58, %c0_59] : memref<5x8x20xbf16, #tpu.memory_space<vmem>>, vector<1x8x20xbf16>
    %80 = vector.shape_cast %79 : vector<1x8x20xbf16> to vector<8x20xbf16>
    %cst_60 = arith.constant dense<0.000000e+00> : vector<8x320xf32>
    %81 = tpu.matmul %80, %46, %cst_60 {dimension_numbers = #tpu.dot_dimension_numbers<[1], [0], [0], [1], [0, 0, 1, 1], [], []>} : vector<8x20xbf16>, vector<20x320xbf16>, vector<8x320xf32> -> vector<8x320xf32>
    %82 = arith.truncf %81 : vector<8x320xf32> to vector<8x320xbf16>
    %c4_61 = arith.constant 4 : index
    %c0_62 = arith.constant 0 : index
    %c0_63 = arith.constant 0 : index
    %83 = vector.load %arg4[%c4_61, %c0_62, %c0_63] : memref<5x320x256xbf16, #tpu.memory_space<vmem>>, vector<1x320x256xbf16>
    %84 = vector.shape_cast %83 : vector<1x320x256xbf16> to vector<320x256xbf16>
    %cst_64 = arith.constant dense<0.000000e+00> : vector<8x256xf32>
    %85 = tpu.matmul %82, %84, %cst_64 {dimension_numbers = #tpu.dot_dimension_numbers<[1], [0], [0], [1], [0, 0, 1, 1], [], []>} : vector<8x320xbf16>, vector<320x256xbf16>, vector<8x256xf32> -> vector<8x256xf32>
    %86 = arith.addf %78, %85 : vector<8x256xf32>
    %c0_65 = arith.constant 0 : index
    %c0_66 = arith.constant 0 : index
    %87 = vector.load %arg6[%c0_65, %c0_66] : memref<1x256xf32, #tpu.memory_space<vmem>>, vector<1x256xf32>
    %88 = vector.broadcast %87 : vector<1x256xf32> to vector<8x256xf32>
    %89 = arith.addf %86, %88 : vector<8x256xf32>
    %cst_67 = arith.constant 0.000000e+00 : f32
    %90 = vector.broadcast %cst_67 : f32 to vector<8x256xf32>
    %91 = arith.cmpf oge, %89, %90 : vector<8x256xf32>
    %cst_68 = arith.constant 0.00999999977 : f32
    %92 = vector.broadcast %cst_68 : f32 to vector<8x256xf32>
    %93 = arith.mulf %92, %89 : vector<8x256xf32>
    %94 = arith.select %91, %89, %93 : vector<8x256xi1>, vector<8x256xf32>
    %cst_69 = arith.constant 0.000000e+00 : f32
    %95 = vector.broadcast %cst_69 : f32 to vector<8x32xf32>
    %96 = tpu.concatenate %95, %94, %95 in 1 : vector<8x32xf32>, vector<8x256xf32>, vector<8x32xf32> -> vector<8x320xf32>
    %cst_70 = arith.constant 0.000000e+00 : f32
    %97 = vector.broadcast %cst_70 : f32 to vector<1x320xf32>
    %98 = tpu.concatenate %97, %96, %97 in 0 : vector<1x320xf32>, vector<8x320xf32>, vector<1x320xf32> -> vector<10x320xf32>
    %cst_71 = arith.constant 0.000000e+00 : f32
    %99 = vector.broadcast %cst_71 : f32 to vector<4x128xf32>
    %100 = arith.truncf %98 : vector<10x320xf32> to vector<10x320xbf16>
    %c0_72 = arith.constant 0 : index
    %c0_73 = arith.constant 0 : index
    %c0_74 = arith.constant 0 : index
    %101 = vector.load %arg8[%c0_72, %c0_73, %c0_74] : memref<3x4x10xbf16, #tpu.memory_space<vmem>>, vector<1x4x10xbf16>
    %102 = vector.shape_cast %101 : vector<1x4x10xbf16> to vector<4x10xbf16>
    %cst_75 = arith.constant dense<0.000000e+00> : vector<4x320xf32>
    %103 = tpu.matmul %102, %100, %cst_75 {dimension_numbers = #tpu.dot_dimension_numbers<[1], [0], [0], [1], [0, 0, 1, 1], [], []>} : vector<4x10xbf16>, vector<10x320xbf16>, vector<4x320xf32> -> vector<4x320xf32>
    %104 = arith.truncf %103 : vector<4x320xf32> to vector<4x320xbf16>
    %c0_76 = arith.constant 0 : index
    %c0_77 = arith.constant 0 : index
    %c0_78 = arith.constant 0 : index
    %105 = vector.load %arg7[%c0_76, %c0_77, %c0_78] : memref<3x320x128xbf16, #tpu.memory_space<vmem>>, vector<1x320x128xbf16>
    %106 = vector.shape_cast %105 : vector<1x320x128xbf16> to vector<320x128xbf16>
    %cst_79 = arith.constant dense<0.000000e+00> : vector<4x128xf32>
    %107 = tpu.matmul %104, %106, %cst_79 {dimension_numbers = #tpu.dot_dimension_numbers<[1], [0], [0], [1], [0, 0, 1, 1], [], []>} : vector<4x320xbf16>, vector<320x128xbf16>, vector<4x128xf32> -> vector<4x128xf32>
    %108 = arith.addf %99, %107 : vector<4x128xf32>
    %c1_80 = arith.constant 1 : index
    %c0_81 = arith.constant 0 : index
    %c0_82 = arith.constant 0 : index
    %109 = vector.load %arg8[%c1_80, %c0_81, %c0_82] : memref<3x4x10xbf16, #tpu.memory_space<vmem>>, vector<1x4x10xbf16>
    %110 = vector.shape_cast %109 : vector<1x4x10xbf16> to vector<4x10xbf16>
    %cst_83 = arith.constant dense<0.000000e+00> : vector<4x320xf32>
    %111 = tpu.matmul %110, %100, %cst_83 {dimension_numbers = #tpu.dot_dimension_numbers<[1], [0], [0], [1], [0, 0, 1, 1], [], []>} : vector<4x10xbf16>, vector<10x320xbf16>, vector<4x320xf32> -> vector<4x320xf32>
    %112 = arith.truncf %111 : vector<4x320xf32> to vector<4x320xbf16>
    %c1_84 = arith.constant 1 : index
    %c0_85 = arith.constant 0 : index
    %c0_86 = arith.constant 0 : index
    %113 = vector.load %arg7[%c1_84, %c0_85, %c0_86] : memref<3x320x128xbf16, #tpu.memory_space<vmem>>, vector<1x320x128xbf16>
    %114 = vector.shape_cast %113 : vector<1x320x128xbf16> to vector<320x128xbf16>
    %cst_87 = arith.constant dense<0.000000e+00> : vector<4x128xf32>
    %115 = tpu.matmul %112, %114, %cst_87 {dimension_numbers = #tpu.dot_dimension_numbers<[1], [0], [0], [1], [0, 0, 1, 1], [], []>} : vector<4x320xbf16>, vector<320x128xbf16>, vector<4x128xf32> -> vector<4x128xf32>
    %116 = arith.addf %108, %115 : vector<4x128xf32>
    %c2_88 = arith.constant 2 : index
    %c0_89 = arith.constant 0 : index
    %c0_90 = arith.constant 0 : index
    %117 = vector.load %arg8[%c2_88, %c0_89, %c0_90] : memref<3x4x10xbf16, #tpu.memory_space<vmem>>, vector<1x4x10xbf16>
    %118 = vector.shape_cast %117 : vector<1x4x10xbf16> to vector<4x10xbf16>
    %cst_91 = arith.constant dense<0.000000e+00> : vector<4x320xf32>
    %119 = tpu.matmul %118, %100, %cst_91 {dimension_numbers = #tpu.dot_dimension_numbers<[1], [0], [0], [1], [0, 0, 1, 1], [], []>} : vector<4x10xbf16>, vector<10x320xbf16>, vector<4x320xf32> -> vector<4x320xf32>
    %120 = arith.truncf %119 : vector<4x320xf32> to vector<4x320xbf16>
    %c2_92 = arith.constant 2 : index
    %c0_93 = arith.constant 0 : index
    %c0_94 = arith.constant 0 : index
    %121 = vector.load %arg7[%c2_92, %c0_93, %c0_94] : memref<3x320x128xbf16, #tpu.memory_space<vmem>>, vector<1x320x128xbf16>
    %122 = vector.shape_cast %121 : vector<1x320x128xbf16> to vector<320x128xbf16>
    %cst_95 = arith.constant dense<0.000000e+00> : vector<4x128xf32>
    %123 = tpu.matmul %120, %122, %cst_95 {dimension_numbers = #tpu.dot_dimension_numbers<[1], [0], [0], [1], [0, 0, 1, 1], [], []>} : vector<4x320xbf16>, vector<320x128xbf16>, vector<4x128xf32> -> vector<4x128xf32>
    %124 = arith.addf %116, %123 : vector<4x128xf32>
    %c0_96 = arith.constant 0 : index
    %c0_97 = arith.constant 0 : index
    %125 = vector.load %arg9[%c0_96, %c0_97] : memref<1x128xf32, #tpu.memory_space<vmem>>, vector<1x128xf32>
    %126 = vector.broadcast %125 : vector<1x128xf32> to vector<4x128xf32>
    %127 = arith.addf %124, %126 : vector<4x128xf32>
    %cst_98 = arith.constant 0.000000e+00 : f32
    %128 = vector.broadcast %cst_98 : f32 to vector<4x128xf32>
    %129 = arith.cmpf oge, %127, %128 : vector<4x128xf32>
    %cst_99 = arith.constant 0.00999999977 : f32
    %130 = vector.broadcast %cst_99 : f32 to vector<4x128xf32>
    %131 = arith.mulf %130, %127 : vector<4x128xf32>
    %132 = arith.select %129, %127, %131 : vector<4x128xi1>, vector<4x128xf32>
    %cst_100 = arith.constant 0.000000e+00 : f32
    %133 = vector.broadcast %cst_100 : f32 to vector<4x32xf32>
    %134 = tpu.concatenate %133, %132, %133 in 1 : vector<4x32xf32>, vector<4x128xf32>, vector<4x32xf32> -> vector<4x192xf32>
    %cst_101 = arith.constant 0.000000e+00 : f32
    %135 = vector.broadcast %cst_101 : f32 to vector<1x192xf32>
    %136 = tpu.concatenate %135, %134, %135 in 0 : vector<1x192xf32>, vector<4x192xf32>, vector<1x192xf32> -> vector<6x192xf32>
    %cst_102 = arith.constant 0.000000e+00 : f32
    %137 = vector.broadcast %cst_102 : f32 to vector<4x24xf32>
    %138 = vector.extract_strided_slice %136 {offsets = [0, 0], sizes = [4, 192], strides = [1, 1]} : vector<6x192xf32> to vector<4x192xf32>
    %139 = arith.truncf %138 : vector<4x192xf32> to vector<4x192xbf16>
    %c0_103 = arith.constant 0 : index
    %c0_104 = arith.constant 0 : index
    %c0_105 = arith.constant 0 : index
    %140 = vector.load %arg10[%c0_103, %c0_104, %c0_105] : memref<3x192x24xbf16, #tpu.memory_space<vmem>>, vector<1x192x24xbf16>
    %141 = vector.shape_cast %140 : vector<1x192x24xbf16> to vector<192x24xbf16>
    %cst_106 = arith.constant dense<0.000000e+00> : vector<4x24xf32>
    %142 = tpu.matmul %139, %141, %cst_106 {dimension_numbers = #tpu.dot_dimension_numbers<[1], [0], [0], [1], [0, 0, 1, 1], [], []>} : vector<4x192xbf16>, vector<192x24xbf16>, vector<4x24xf32> -> vector<4x24xf32>
    %143 = arith.addf %137, %142 : vector<4x24xf32>
    %144 = vector.extract_strided_slice %136 {offsets = [1, 0], sizes = [4, 192], strides = [1, 1]} : vector<6x192xf32> to vector<4x192xf32>
    %145 = arith.truncf %144 : vector<4x192xf32> to vector<4x192xbf16>
    %c1_107 = arith.constant 1 : index
    %c0_108 = arith.constant 0 : index
    %c0_109 = arith.constant 0 : index
    %146 = vector.load %arg10[%c1_107, %c0_108, %c0_109] : memref<3x192x24xbf16, #tpu.memory_space<vmem>>, vector<1x192x24xbf16>
    %147 = vector.shape_cast %146 : vector<1x192x24xbf16> to vector<192x24xbf16>
    %cst_110 = arith.constant dense<0.000000e+00> : vector<4x24xf32>
    %148 = tpu.matmul %145, %147, %cst_110 {dimension_numbers = #tpu.dot_dimension_numbers<[1], [0], [0], [1], [0, 0, 1, 1], [], []>} : vector<4x192xbf16>, vector<192x24xbf16>, vector<4x24xf32> -> vector<4x24xf32>
    %149 = arith.addf %143, %148 : vector<4x24xf32>
    %150 = vector.extract_strided_slice %136 {offsets = [2, 0], sizes = [4, 192], strides = [1, 1]} : vector<6x192xf32> to vector<4x192xf32>
    %151 = arith.truncf %150 : vector<4x192xf32> to vector<4x192xbf16>
    %c2_111 = arith.constant 2 : index
    %c0_112 = arith.constant 0 : index
    %c0_113 = arith.constant 0 : index
    %152 = vector.load %arg10[%c2_111, %c0_112, %c0_113] : memref<3x192x24xbf16, #tpu.memory_space<vmem>>, vector<1x192x24xbf16>
    %153 = vector.shape_cast %152 : vector<1x192x24xbf16> to vector<192x24xbf16>
    %cst_114 = arith.constant dense<0.000000e+00> : vector<4x24xf32>
    %154 = tpu.matmul %151, %153, %cst_114 {dimension_numbers = #tpu.dot_dimension_numbers<[1], [0], [0], [1], [0, 0, 1, 1], [], []>} : vector<4x192xbf16>, vector<192x24xbf16>, vector<4x24xf32> -> vector<4x24xf32>
    %155 = arith.addf %149, %154 : vector<4x24xf32>
    %c0_115 = arith.constant 0 : index
    %c0_116 = arith.constant 0 : index
    %156 = vector.load %arg11[%c0_115, %c0_116] : memref<1x24xf32, #tpu.memory_space<vmem>>, vector<1x24xf32>
    %157 = vector.broadcast %156 : vector<1x24xf32> to vector<4x24xf32>
    %158 = arith.addf %155, %157 : vector<4x24xf32>
    %159 = math.tanh %158 : vector<4x24xf32>
    %c0_117 = arith.constant 0 : index
    %c0_118 = arith.constant 0 : index
    %c0_119 = arith.constant 0 : index
    %160 = vector.load %arg13[%c0_117, %c0_118, %c0_119] : memref<1x4x24xf32, #tpu.memory_space<vmem>>, vector<1x4x24xf32>
    %161 = vector.shape_cast %160 : vector<1x4x24xf32> to vector<4x24xf32>
    %162 = vector.shape_cast %159 : vector<4x24xf32> to vector<1x4x24xf32>
    tpu.vector_store %arg13[%c0_117, %c0_118, %c0_119], %162 {strides = array<i32>} : memref<1x4x24xf32, #tpu.memory_space<vmem>>, vector<1x4x24xf32>,
    %cst_120 = arith.constant 1.000000e+00 : f32
    %163 = vector.broadcast %cst_120 : f32 to vector<4x24xf32>
    %164 = arith.mulf %159, %163 : vector<4x24xf32>
    %165 = math.ceil %164 : vector<4x24xf32>
    %c0_121 = arith.constant 0 : index
    %c0_122 = arith.constant 0 : index
    %c0_123 = arith.constant 0 : index
    %166 = vector.load %arg12[%c0_121, %c0_122, %c0_123] : memref<1x4x24xf32, #tpu.memory_space<vmem>>, vector<1x4x24xf32>
    %167 = vector.shape_cast %166 : vector<1x4x24xf32> to vector<4x24xf32>
    %168 = vector.shape_cast %165 : vector<4x24xf32> to vector<1x4x24xf32>
    tpu.vector_store %arg12[%c0_121, %c0_122, %c0_123], %168 {strides = array<i32>} : memref<1x4x24xf32, #tpu.memory_space<vmem>>, vector<1x4x24xf32>,
    return
  }
  func.func @transform_0(%arg0: i32) -> (i32, i32, i32) {
    %c0_i32 = arith.constant 0 : i32
    %c0_i32_0 = arith.constant 0 : i32
    %c0_i32_1 = arith.constant 0 : i32
    return %arg0, %c0_i32, %c0_i32_0 : i32, i32, i32
  }
  func.func @transform_1(%arg0: i32) -> (i32, i32, i32) {
    %c0_i32 = arith.constant 0 : i32
    %c0_i32_0 = arith.constant 0 : i32
    %c0_i32_1 = arith.constant 0 : i32
    %c0_i32_2 = arith.constant 0 : i32
    return %c0_i32, %c0_i32_0, %c0_i32_1 : i32, i32, i32
  }
  func.func @transform_2(%arg0: i32) -> (i32, i32) {
    %c0_i32 = arith.constant 0 : i32
    %c0_i32_0 = arith.constant 0 : i32
    %c0_i32_1 = arith.constant 0 : i32
    return %c0_i32, %c0_i32_0 : i32, i32
  }
  func.func @transform_3(%arg0: i32) -> (i32, i32, i32) {
    %c0_i32 = arith.constant 0 : i32
    %c0_i32_0 = arith.constant 0 : i32
    %c0_i32_1 = arith.constant 0 : i32
    %c0_i32_2 = arith.constant 0 : i32
    return %c0_i32, %c0_i32_0, %c0_i32_1 : i32, i32, i32
  }
  func.func @transform_4(%arg0: i32) -> (i32, i32, i32) {
    %c0_i32 = arith.constant 0 : i32
    %c0_i32_0 = arith.constant 0 : i32
    %c0_i32_1 = arith.constant 0 : i32
    %c0_i32_2 = arith.constant 0 : i32
    return %c0_i32, %c0_i32_0, %c0_i32_1 : i32, i32, i32
  }
  func.func @transform_5(%arg0: i32) -> (i32, i32) {
    %c0_i32 = arith.constant 0 : i32
    %c0_i32_0 = arith.constant 0 : i32
    %c0_i32_1 = arith.constant 0 : i32
    return %c0_i32, %c0_i32_0 : i32, i32
  }
  func.func @transform_6(%arg0: i32) -> (i32, i32, i32) {
    %c0_i32 = arith.constant 0 : i32
    %c0_i32_0 = arith.constant 0 : i32
    %c0_i32_1 = arith.constant 0 : i32
    %c0_i32_2 = arith.constant 0 : i32
    return %c0_i32, %c0_i32_0, %c0_i32_1 : i32, i32, i32
  }
  func.func @transform_7(%arg0: i32) -> (i32, i32, i32) {
    %c0_i32 = arith.constant 0 : i32
    %c0_i32_0 = arith.constant 0 : i32
    %c0_i32_1 = arith.constant 0 : i32
    %c0_i32_2 = arith.constant 0 : i32
    return %c0_i32, %c0_i32_0, %c0_i32_1 : i32, i32, i32
  }
  func.func @transform_8(%arg0: i32) -> (i32, i32) {
    %c0_i32 = arith.constant 0 : i32
    %c0_i32_0 = arith.constant 0 : i32
    %c0_i32_1 = arith.constant 0 : i32
    return %c0_i32, %c0_i32_0 : i32, i32
  }
  func.func @transform_9(%arg0: i32) -> (i32, i32, i32) {
    %c0_i32 = arith.constant 0 : i32
    %c0_i32_0 = arith.constant 0 : i32
    %c0_i32_1 = arith.constant 0 : i32
    %c0_i32_2 = arith.constant 0 : i32
    return %c0_i32, %c0_i32_0, %c0_i32_1 : i32, i32, i32
  }
  func.func @transform_10(%arg0: i32) -> (i32, i32) {
    %c0_i32 = arith.constant 0 : i32
    %c0_i32_0 = arith.constant 0 : i32
    %c0_i32_1 = arith.constant 0 : i32
    return %c0_i32, %c0_i32_0 : i32, i32
  }
  func.func @transform_11(%arg0: i32) -> (i32, i32, i32) {
    %c0_i32 = arith.constant 0 : i32
    %c0_i32_0 = arith.constant 0 : i32
    %c0_i32_1 = arith.constant 0 : i32
    return %arg0, %c0_i32, %c0_i32_0 : i32, i32, i32
  }
  func.func @transform_12(%arg0: i32) -> (i32, i32, i32) {
    %c0_i32 = arith.constant 0 : i32
    %c0_i32_0 = arith.constant 0 : i32
    %c0_i32_1 = arith.constant 0 : i32
    return %arg0, %c0_i32, %c0_i32_0 : i32, i32, i32
  }
}

</mosaic_0001>

<llo_original>
// kernel: tpu_custom_call.1
$region0: #{tpu_custom_call.1}
  #allocation0 [shape = 'u32[]', space=smem, size = 0x4, offset = 0x4, fixed_abs, tag = 'smem constant byte address 0x4 - core index']
  #allocation1 [shape = 'u32[144,128]{1,0:T(1,128)}', space=vmem, size = 0x12000, scoped, tag = 'internal scratch']
  %s0 = inlined_call_operand.vmem [shape: f32[2,20,64], index: 0, kind: input, shape index: {}]
  %s1 = inlined_call_operand.vmem [shape: bf16[5,64,256], index: 1, kind: input, shape index: {}]
  %s2 = inlined_call_operand.vmem [shape: f32[1,256], index: 2, kind: input, shape index: {}]
  %s3 = inlined_call_operand.hbm [shape: bf16[5,320,256], index: 3, kind: input, shape index: {}]
  %s4 = inlined_call_operand.vmem [shape: bf16[5,8,20], index: 4, kind: input, shape index: {}]
  %s5 = inlined_call_operand.vmem [shape: f32[1,256], index: 5, kind: input, shape index: {}]
  %s6 = inlined_call_operand.hbm [shape: bf16[3,320,128], index: 6, kind: input, shape index: {}]
  %s7 = inlined_call_operand.vmem [shape: bf16[3,4,10], index: 7, kind: input, shape index: {}]
  %s8 = inlined_call_operand.vmem [shape: f32[1,128], index: 8, kind: input, shape index: {}]
  %s9 = inlined_call_operand.vmem [shape: bf16[3,192,24], index: 9, kind: input, shape index: {}]
  %s10 = inlined_call_operand.vmem [shape: f32[1,24], index: 10, kind: input, shape index: {}]
  %s11 = inlined_call_operand.hbm [shape: f32[2,4,24], index: 11, kind: output, shape index: {0}]
  %s12 = inlined_call_operand.hbm [shape: f32[2,4,24], index: 12, kind: output, shape index: {1}]
  %13 = xla_tuple %s11, %s12
  %s14 = sld [smem:[#allocation0]]
  $region93: #{tpu_custom_call.1} parent=0
    _
  %s16 = ssub.s32 1, %s14
  %s17 = scalar_select 0, %s16, %s14
  $region1: #{tpu_custom_call.1} parent=0
    #allocation2 [shape = 'u8[819200]{0}', space=vmem, size = 0xc8000, scoped, tag = 'input window, operand 3, single buffered']
    #allocation3 [shape = 's32[2]{0}', space=sflag, size = 0x8, scoped, tag = 'scoped memory for tpu_custom_call.1']
    #allocation4 [shape = 's32[2]{0}', space=sflag, size = 0x8, scoped, tag = 'scoped memory for tpu_custom_call.1']
    #allocation5 [shape = 'u8[245760]{0}', space=vmem, size = 0x3c000, scoped, tag = 'input window, operand 6, single buffered']
    #allocation6 [shape = 's32[1]{0}', space=sflag, size = 0x4, scoped, tag = 'scoped memory for tpu_custom_call.1']
    #allocation7 [shape = 'u8[4096]{0}', space=vmem, size = 0x1000, scoped, tag = 'output window, operand 0']
    #allocation8 [shape = 'u8[4096]{0}', space=vmem, size = 0x1000, scoped, tag = 'output window, operand 1']
    #allocation9 [shape = 's32[2]{0}', space=sflag, size = 0x8, scoped, tag = 'scoped memory for tpu_custom_call.1']
    %18 = vsyncpa [#allocation3], 0
    %19 = vsyncpa [#allocation6], 0
    %20 = vsyncpa [#allocation4], 0
    %s21 = scalar_lea.sflag [#allocation4], 1
    %22 = vsyncpa %s21, 0
    %23 = vsyncpa [#allocation9], 0
    %s24 = scalar_lea.sflag [#allocation9], 1
    %25 = vsyncpa %s24, 0
    loop: start=0, step=1, limit=4
    $region2: #{tpu_custom_call.1} parent=1 // loop_pre_header
      _
    $region3: #{tpu_custom_call.1} parent=1 // loop_header
      %s27 = sphi 0, %s31
      %p28 = scmp.ge.s32.totalorder %s27, 4
      %s37 = sphi 0, %s39
      %s40 = sphi 0, %s37
      %s41 = sphi 0, %s40
      %s57 = sphi 0, %s41
      %s61 = sphi 0, %s61
      %s63 = sphi 0, %s61
      %s64 = sphi 0, %s63
      %s78 = sphi 0, %s64
      %s82 = sphi 0, %s82
      %s84 = sphi 0, %s82
      %s85 = sphi 0, %s84
      %s99 = sphi 0, %s85
      %s103 = sphi 0, %s103
      %s105 = sphi 0, %s103
      %s106 = sphi 0, %s105
      %s120 = sphi 0, %s106
      %s124 = sphi 0, %s124
      %s126 = sphi 0, %s124
      %s127 = sphi 0, %s126
      %s141 = sphi 0, %s127
      %s145 = sphi 0, %s145
      %s147 = sphi 0, %s145
      %s148 = sphi 0, %s147
      %s162 = sphi 0, %s148
      %s166 = sphi 0, %s166
      %s168 = sphi 0, %s166
      %s169 = sphi 0, %s168
      %s183 = sphi 0, %s169
      %s187 = sphi 0, %s187
      %s189 = sphi 0, %s187
      %s190 = sphi 0, %s189
      %s204 = sphi 0, %s190
      %s208 = sphi 0, %s208
      %s210 = sphi 0, %s208
      %s211 = sphi 0, %s210
      %s225 = sphi 0, %s211
      %s229 = sphi 0, %s229
      %s231 = sphi 0, %s229
      %s232 = sphi 0, %s231
      %s246 = sphi 0, %s232
      %s250 = sphi 0, %s250
      %s252 = sphi 0, %s250
      %s253 = sphi 0, %s252
      %s267 = sphi 0, %s253
      %s273 = sphi 0, %s275
      %s276 = sphi 0, %s273
      %s277 = sphi 0, %s276
      %s293 = sphi 0, %s277
      %s299 = sphi 0, %s301
      %s302 = sphi 0, %s299
      %s303 = sphi 0, %s302
      %s319 = sphi 0, %s303
    $region4: #{tpu_custom_call.1} parent=1 // loop_header_branch
      %30 = sbr.rel (%p28) target = $region8
    $region5: #{tpu_custom_call.1} parent=1 // loop_body
      %s32 = ssub.s32 %s27, 1
      %s33 = ssub.s32 %s27, 2
      %s34 = sadd.s32 %s27, 1
      %s35 = ssub.s32 %s27, %s34
      %p36 = scmp.eq.s32.totalorder %s35, 0
      %s38 = sadd.s32 %s37, 1
      %s39 = scalar_select %p36, %s37, %s38
      %p42 = pneg %p36
      %p43 = scmp.eq.s32.totalorder %s27, 1
      %p44 = por %p42, %p43
      %p45 = scmp.ne.s32.totalorder %s37, %s40
      %p46 = scmp.eq.s32.totalorder %s27, 0
      %p47 = por %p45, %p46
      %p48 = scmp.ne.s32.totalorder %s37, %s40
      %p49 = scmp.eq.s32.totalorder %s32, 1
      %p50 = por %p48, %p49
      %p51 = scmp.ne.s32.totalorder %s40, %s41
      %p52 = scmp.eq.s32.totalorder %s32, 0
      %p53 = por %p51, %p52
      %p54 = scmp.ne.s32.totalorder %s40, %s41
      %p55 = scmp.eq.s32.totalorder %s33, 1
      %p56 = por %p54, %p55
      %p58 = scmp.ne.s32.totalorder %s41, %s57
      %p59 = scmp.eq.s32.totalorder %s33, 0
      %p60 = por %p58, %p59
      %s62 = sadd.s32 %s61, 1
      %p65 = scmp.eq.s32.totalorder %s27, 1
      %p66 = scmp.ne.s32.totalorder %s61, %s63
      %p67 = scmp.eq.s32.totalorder %s27, 0
      %p68 = por %p66, %p67
      %p69 = scmp.ne.s32.totalorder %s61, %s63
      %p70 = scmp.eq.s32.totalorder %s32, 1
      %p71 = por %p69, %p70
      %p72 = scmp.ne.s32.totalorder %s63, %s64
      %p73 = scmp.eq.s32.totalorder %s32, 0
      %p74 = por %p72, %p73
      %p75 = scmp.ne.s32.totalorder %s63, %s64
      %p76 = scmp.eq.s32.totalorder %s33, 1
      %p77 = por %p75, %p76
      %p79 = scmp.ne.s32.totalorder %s64, %s78
      %p80 = scmp.eq.s32.totalorder %s33, 0
      %p81 = por %p79, %p80
      %s83 = sadd.s32 %s82, 1
      %p86 = scmp.eq.s32.totalorder %s27, 1
      %p87 = scmp.ne.s32.totalorder %s82, %s84
      %p88 = scmp.eq.s32.totalorder %s27, 0
      %p89 = por %p87, %p88
      %p90 = scmp.ne.s32.totalorder %s82, %s84
      %p91 = scmp.eq.s32.totalorder %s32, 1
      %p92 = por %p90, %p91
      %p93 = scmp.ne.s32.totalorder %s84, %s85
      %p94 = scmp.eq.s32.totalorder %s32, 0
      %p95 = por %p93, %p94
      %p96 = scmp.ne.s32.totalorder %s84, %s85
      %p97 = scmp.eq.s32.totalorder %s33, 1
      %p98 = por %p96, %p97
      %p100 = scmp.ne.s32.totalorder %s85, %s99
      %p101 = scmp.eq.s32.totalorder %s33, 0
      %p102 = por %p100, %p101
      %s104 = sadd.s32 %s103, 1
      %p107 = scmp.eq.s32.totalorder %s27, 1
      %p108 = scmp.ne.s32.totalorder %s103, %s105
      %p109 = scmp.eq.s32.totalorder %s27, 0
      %p110 = por %p108, %p109
      %p111 = scmp.ne.s32.totalorder %s103, %s105
      %p112 = scmp.eq.s32.totalorder %s32, 1
      %p113 = por %p111, %p112
      %p114 = scmp.ne.s32.totalorder %s105, %s106
      %p115 = scmp.eq.s32.totalorder %s32, 0
      %p116 = por %p114, %p115
      %p117 = scmp.ne.s32.totalorder %s105, %s106
      %p118 = scmp.eq.s32.totalorder %s33, 1
      %p119 = por %p117, %p118
      %p121 = scmp.ne.s32.totalorder %s106, %s120
      %p122 = scmp.eq.s32.totalorder %s33, 0
      %p123 = por %p121, %p122
      %s125 = sadd.s32 %s124, 1
      %p128 = scmp.eq.s32.totalorder %s27, 1
      %p129 = scmp.ne.s32.totalorder %s124, %s126
      %p130 = scmp.eq.s32.totalorder %s27, 0
      %p131 = por %p129, %p130
      %p132 = scmp.ne.s32.totalorder %s124, %s126
      %p133 = scmp.eq.s32.totalorder %s32, 1
      %p134 = por %p132, %p133
      %p135 = scmp.ne.s32.totalorder %s126, %s127
      %p136 = scmp.eq.s32.totalorder %s32, 0
      %p137 = por %p135, %p136
      %p138 = scmp.ne.s32.totalorder %s126, %s127
      %p139 = scmp.eq.s32.totalorder %s33, 1
      %p140 = por %p138, %p139
      %p142 = scmp.ne.s32.totalorder %s127, %s141
      %p143 = scmp.eq.s32.totalorder %s33, 0
      %p144 = por %p142, %p143
      %s146 = sadd.s32 %s145, 1
      %p149 = scmp.eq.s32.totalorder %s27, 1
      %p150 = scmp.ne.s32.totalorder %s145, %s147
      %p151 = scmp.eq.s32.totalorder %s27, 0
      %p152 = por %p150, %p151
      %p153 = scmp.ne.s32.totalorder %s145, %s147
      %p154 = scmp.eq.s32.totalorder %s32, 1
      %p155 = por %p153, %p154
      %p156 = scmp.ne.s32.totalorder %s147, %s148
      %p157 = scmp.eq.s32.totalorder %s32, 0
      %p158 = por %p156, %p157
      %p159 = scmp.ne.s32.totalorder %s147, %s148
      %p160 = scmp.eq.s32.totalorder %s33, 1
      %p161 = por %p159, %p160
      %p163 = scmp.ne.s32.totalorder %s148, %s162
      %p164 = scmp.eq.s32.totalorder %s33, 0
      %p165 = por %p163, %p164
      %s167 = sadd.s32 %s166, 1
      %p170 = scmp.eq.s32.totalorder %s27, 1
      %p171 = scmp.ne.s32.totalorder %s166, %s168
      %p172 = scmp.eq.s32.totalorder %s27, 0
      %p173 = por %p171, %p172
      %p174 = scmp.ne.s32.totalorder %s166, %s168
      %p175 = scmp.eq.s32.totalorder %s32, 1
      %p176 = por %p174, %p175
      %p177 = scmp.ne.s32.totalorder %s168, %s169
      %p178 = scmp.eq.s32.totalorder %s32, 0
      %p179 = por %p177, %p178
      %p180 = scmp.ne.s32.totalorder %s168, %s169
      %p181 = scmp.eq.s32.totalorder %s33, 1
      %p182 = por %p180, %p181
      %p184 = scmp.ne.s32.totalorder %s169, %s183
      %p185 = scmp.eq.s32.totalorder %s33, 0
      %p186 = por %p184, %p185
      %s188 = sadd.s32 %s187, 1
      %p191 = scmp.eq.s32.totalorder %s27, 1
      %p192 = scmp.ne.s32.totalorder %s187, %s189
      %p193 = scmp.eq.s32.totalorder %s27, 0
      %p194 = por %p192, %p193
      %p195 = scmp.ne.s32.totalorder %s187, %s189
      %p196 = scmp.eq.s32.totalorder %s32, 1
      %p197 = por %p195, %p196
      %p198 = scmp.ne.s32.totalorder %s189, %s190
      %p199 = scmp.eq.s32.totalorder %s32, 0
      %p200 = por %p198, %p199
      %p201 = scmp.ne.s32.totalorder %s189, %s190
      %p202 = scmp.eq.s32.totalorder %s33, 1
      %p203 = por %p201, %p202
      %p205 = scmp.ne.s32.totalorder %s190, %s204
      %p206 = scmp.eq.s32.totalorder %s33, 0
      %p207 = por %p205, %p206
      %s209 = sadd.s32 %s208, 1
      %p212 = scmp.eq.s32.totalorder %s27, 1
      %p213 = scmp.ne.s32.totalorder %s208, %s210
      %p214 = scmp.eq.s32.totalorder %s27, 0
      %p215 = por %p213, %p214
      %p216 = scmp.ne.s32.totalorder %s208, %s210
      %p217 = scmp.eq.s32.totalorder %s32, 1
      %p218 = por %p216, %p217
      %p219 = scmp.ne.s32.totalorder %s210, %s211
      %p220 = scmp.eq.s32.totalorder %s32, 0
      %p221 = por %p219, %p220
      %p222 = scmp.ne.s32.totalorder %s210, %s211
      %p223 = scmp.eq.s32.totalorder %s33, 1
      %p224 = por %p222, %p223
      %p226 = scmp.ne.s32.totalorder %s211, %s225
      %p227 = scmp.eq.s32.totalorder %s33, 0
      %p228 = por %p226, %p227
      %s230 = sadd.s32 %s229, 1
      %p233 = scmp.eq.s32.totalorder %s27, 1
      %p234 = scmp.ne.s32.totalorder %s229, %s231
      %p235 = scmp.eq.s32.totalorder %s27, 0
      %p236 = por %p234, %p235
      %p237 = scmp.ne.s32.totalorder %s229, %s231
      %p238 = scmp.eq.s32.totalorder %s32, 1
      %p239 = por %p237, %p238
      %p240 = scmp.ne.s32.totalorder %s231, %s232
      %p241 = scmp.eq.s32.totalorder %s32, 0
      %p242 = por %p240, %p241
      %p243 = scmp.ne.s32.totalorder %s231, %s232
      %p244 = scmp.eq.s32.totalorder %s33, 1
      %p245 = por %p243, %p244
      %p247 = scmp.ne.s32.totalorder %s232, %s246
      %p248 = scmp.eq.s32.totalorder %s33, 0
      %p249 = por %p247, %p248
      %s251 = sadd.s32 %s250, 1
      %p254 = scmp.eq.s32.totalorder %s27, 1
      %p255 = scmp.ne.s32.totalorder %s250, %s252
      %p256 = scmp.eq.s32.totalorder %s27, 0
      %p257 = por %p255, %p256
      %p258 = scmp.ne.s32.totalorder %s250, %s252
      %p259 = scmp.eq.s32.totalorder %s32, 1
      %p260 = por %p258, %p259
      %p261 = scmp.ne.s32.totalorder %s252, %s253
      %p262 = scmp.eq.s32.totalorder %s32, 0
      %p263 = por %p261, %p262
      %p264 = scmp.ne.s32.totalorder %s252, %s253
      %p265 = scmp.eq.s32.totalorder %s33, 1
      %p266 = por %p264, %p265
      %p268 = scmp.ne.s32.totalorder %s253, %s267
      %p269 = scmp.eq.s32.totalorder %s33, 0
      %p270 = por %p268, %p269
      %s271 = ssub.s32 %s27, %s34
      %p272 = scmp.eq.s32.totalorder %s271, 0
      %s274 = sadd.s32 %s273, 1
      %s275 = scalar_select %p272, %s273, %s274
      %p278 = pneg %p272
      %p279 = scmp.eq.s32.totalorder %s27, 1
      %p280 = por %p278, %p279
      %p281 = scmp.ne.s32.totalorder %s273, %s276
      %p282 = scmp.eq.s32.totalorder %s27, 0
      %p283 = por %p281, %p282
      %p284 = scmp.ne.s32.totalorder %s273, %s276
      %p285 = scmp.eq.s32.totalorder %s32, 1
      %p286 = por %p284, %p285
      %p287 = scmp.ne.s32.totalorder %s276, %s277
      %p288 = scmp.eq.s32.totalorder %s32, 0
      %p289 = por %p287, %p288
      %p290 = scmp.ne.s32.totalorder %s276, %s277
      %p291 = scmp.eq.s32.totalorder %s33, 1
      %p292 = por %p290, %p291
      %p294 = scmp.ne.s32.totalorder %s277, %s293
      %p295 = scmp.eq.s32.totalorder %s33, 0
      %p296 = por %p294, %p295
      %s297 = ssub.s32 %s27, %s34
      %p298 = scmp.eq.s32.totalorder %s297, 0
      %s300 = sadd.s32 %s299, 1
      %s301 = scalar_select %p298, %s299, %s300
      %p304 = pneg %p298
      %p305 = scmp.eq.s32.totalorder %s27, 1
      %p306 = por %p304, %p305
      %p307 = scmp.ne.s32.totalorder %s299, %s302
      %p308 = scmp.eq.s32.totalorder %s27, 0
      %p309 = por %p307, %p308
      %p310 = scmp.ne.s32.totalorder %s299, %s302
      %p311 = scmp.eq.s32.totalorder %s32, 1
      %p312 = por %p310, %p311
      %p313 = scmp.ne.s32.totalorder %s302, %s303
      %p314 = scmp.eq.s32.totalorder %s32, 0
      %p315 = por %p313, %p314
      %p316 = scmp.ne.s32.totalorder %s302, %s303
      %p317 = scmp.eq.s32.totalorder %s33, 1
      %p318 = por %p316, %p317
      %p320 = scmp.ne.s32.totalorder %s303, %s319
      %p321 = scmp.eq.s32.totalorder %s33, 0
      %p322 = por %p320, %p321
      %p323 = scmp.le.s32.totalorder 1, %s27
      %p324 = scmp.lt.s32.totalorder %s27, 3
      %p325 = pnand %p323, %p324
      %p326 = pneg %p325
      // Predicated region
      $region9: #{tpu_custom_call.1} parent=5 // pred_check
        _
      $region10: #{tpu_custom_call.1} parent=5 // pred_check_branch
        %328 = sbr.rel (%p325) target = $region12
      $region11: #{tpu_custom_call.1} parent=5 // pred_region
        %s329 = ssub.s32 %s27, 1
        // Predicated region
        $region13: #{tpu_custom_call.1} parent=11 // pred_check
          %p330 = pneg %p74
        $region14: #{tpu_custom_call.1} parent=11 // pred_check_branch
          %332 = sbr.rel (%p330) target = $region16
        $region15: #{tpu_custom_call.1} parent=11 // pred_region
          _
        $region16: #{tpu_custom_call.1} parent=11 // pred_fallthru
          _
        // Predicated region
        $region17: #{tpu_custom_call.1} parent=11 // pred_check
          %p333 = pneg %p95
        $region18: #{tpu_custom_call.1} parent=11 // pred_check_branch
          %335 = sbr.rel (%p333) target = $region20
        $region19: #{tpu_custom_call.1} parent=11 // pred_region
          _
        $region20: #{tpu_custom_call.1} parent=11 // pred_fallthru
          _
        // Predicated region
        $region21: #{tpu_custom_call.1} parent=11 // pred_check
          %p336 = pneg %p116
        $region22: #{tpu_custom_call.1} parent=11 // pred_check_branch
          %338 = sbr.rel (%p336) target = $region24
        $region23: #{tpu_custom_call.1} parent=11 // pred_region
          %s340 = ssub.s32 25600, 25600
          %341 = vsyncadd [#allocation3], %s340
          %s342 = sshll.u32 [#allocation2], 4
          %s343 = int_to_ptr.vmem [resolvable:$true] %s342
          %348 = dma.hbm_to_vmem [thread:$0]  %s3, 25600, %s343, [#allocation3], 128, 128, 8
        $region24: #{tpu_custom_call.1} parent=11 // pred_fallthru
          _
        // Predicated region
        $region25: #{tpu_custom_call.1} parent=11 // pred_check
          %p349 = pneg %p137
        $region26: #{tpu_custom_call.1} parent=11 // pred_check_branch
          %351 = sbr.rel (%p349) target = $region28
        $region27: #{tpu_custom_call.1} parent=11 // pred_region
          _
        $region28: #{tpu_custom_call.1} parent=11 // pred_fallthru
          _
        // Predicated region
        $region29: #{tpu_custom_call.1} parent=11 // pred_check
          %p352 = pneg %p158
        $region30: #{tpu_custom_call.1} parent=11 // pred_check_branch
          %354 = sbr.rel (%p352) target = $region32
        $region31: #{tpu_custom_call.1} parent=11 // pred_region
          _
        $region32: #{tpu_custom_call.1} parent=11 // pred_fallthru
          _
        // Predicated region
        $region33: #{tpu_custom_call.1} parent=11 // pred_check
          %p355 = pneg %p179
        $region34: #{tpu_custom_call.1} parent=11 // pred_check_branch
          %357 = sbr.rel (%p355) target = $region36
        $region35: #{tpu_custom_call.1} parent=11 // pred_region
          %s359 = ssub.s32 7680, 7680
          %360 = vsyncadd [#allocation6], %s359
          %s361 = sshll.u32 [#allocation5], 4
          %s362 = int_to_ptr.vmem [resolvable:$true] %s361
          %367 = dma.hbm_to_vmem [thread:$0]  %s6, 7680, %s362, [#allocation6], 64, 64, 4
        $region36: #{tpu_custom_call.1} parent=11 // pred_fallthru
          _
        // Predicated region
        $region37: #{tpu_custom_call.1} parent=11 // pred_check
          %p368 = pneg %p200
        $region38: #{tpu_custom_call.1} parent=11 // pred_check_branch
          %370 = sbr.rel (%p368) target = $region40
        $region39: #{tpu_custom_call.1} parent=11 // pred_region
          _
        $region40: #{tpu_custom_call.1} parent=11 // pred_fallthru
          _
        // Predicated region
        $region41: #{tpu_custom_call.1} parent=11 // pred_check
          %p371 = pneg %p221
        $region42: #{tpu_custom_call.1} parent=11 // pred_check_branch
          %373 = sbr.rel (%p371) target = $region44
        $region43: #{tpu_custom_call.1} parent=11 // pred_region
          _
        $region44: #{tpu_custom_call.1} parent=11 // pred_fallthru
          _
        // Predicated region
        $region45: #{tpu_custom_call.1} parent=11 // pred_check
          %p374 = pneg %p242
        $region46: #{tpu_custom_call.1} parent=11 // pred_check_branch
          %376 = sbr.rel (%p374) target = $region48
        $region47: #{tpu_custom_call.1} parent=11 // pred_region
          _
        $region48: #{tpu_custom_call.1} parent=11 // pred_fallthru
          _
        // Predicated region
        $region49: #{tpu_custom_call.1} parent=11 // pred_check
          %p377 = pneg %p263
        $region50: #{tpu_custom_call.1} parent=11 // pred_check_branch
          %379 = sbr.rel (%p377) target = $region52
        $region51: #{tpu_custom_call.1} parent=11 // pred_region
          _
        $region52: #{tpu_custom_call.1} parent=11 // pred_fallthru
          _
      $region12: #{tpu_custom_call.1} parent=5 // pred_fallthru
        _
      %p380 = scmp.lt.s32.totalorder %s27, 2
      // Predicated region
      $region53: #{tpu_custom_call.1} parent=5 // pred_check
        %p381 = pneg %p380
      $region54: #{tpu_custom_call.1} parent=5 // pred_check_branch
        %383 = sbr.rel (%p381) target = $region56
      $region55: #{tpu_custom_call.1} parent=5 // pred_region
        // Predicated region
        $region57: #{tpu_custom_call.1} parent=55 // pred_check
          %p384 = pneg %p47
        $region58: #{tpu_custom_call.1} parent=55 // pred_check_branch
          %386 = sbr.rel (%p384) target = $region60
        $region59: #{tpu_custom_call.1} parent=55 // pred_region
          %p387 = scmp.lt.s32.totalorder %s27, 1
          %s388 = scalar_select %p387, %s27, 1
          %s389 = smul.addr %s388, 3
          %s390 = smul.addr %s389, 8
          %s391 = scalar_lea.vmem %s0, %s390
        $region60: #{tpu_custom_call.1} parent=55 // pred_fallthru
          _
      $region56: #{tpu_custom_call.1} parent=5 // pred_fallthru
        _
      %p392 = scmp.le.s32.totalorder 1, %s27
      %p393 = scmp.lt.s32.totalorder %s27, 3
      %p394 = pnand %p392, %p393
      %p395 = pneg %p394
      // Predicated region
      $region61: #{tpu_custom_call.1} parent=5 // pred_check
        _
      $region62: #{tpu_custom_call.1} parent=5 // pred_check_branch
        %397 = sbr.rel (%p394) target = $region64
      $region63: #{tpu_custom_call.1} parent=5 // pred_region
        %s398 = ssub.s32 %s27, 1
        // Predicated region
        $region65: #{tpu_custom_call.1} parent=63 // pred_check
          %p399 = pneg %p116
        $region66: #{tpu_custom_call.1} parent=63 // pred_check_branch
          %401 = sbr.rel (%p399) target = $region68
        $region67: #{tpu_custom_call.1} parent=63 // pred_region
          %402 = dma.done [#allocation3], 25600
        $region68: #{tpu_custom_call.1} parent=63 // pred_fallthru
          _
        // Predicated region
        $region69: #{tpu_custom_call.1} parent=63 // pred_check
          %p403 = pneg %p179
        $region70: #{tpu_custom_call.1} parent=63 // pred_check_branch
          %405 = sbr.rel (%p403) target = $region72
        $region71: #{tpu_custom_call.1} parent=63 // pred_region
          %406 = dma.done [#allocation6], 7680
        $region72: #{tpu_custom_call.1} parent=63 // pred_fallthru
          _
        %p407 = scmp.lt.s32.totalorder %s32, 1
        %s408 = scalar_select %p407, %s32, 1
        %s409 = smul.addr %s408, 3
        %s410 = smul.addr %s409, 8
        %s411 = scalar_lea.vmem %s0, %s410
        %p412 = pneg %p53
        %p413 = pneg %p50
        %p414 = pneg %p74
        %p415 = pneg %p71
        %p416 = pneg %p95
        %p417 = pneg %p92
        %p418 = pneg %p116
        %p419 = pneg %p113
        %p420 = pneg %p137
        %p421 = pneg %p134
        %p422 = pneg %p158
        %p423 = pneg %p155
        %p424 = pneg %p179
        %p425 = pneg %p176
        %p426 = pneg %p200
        %p427 = pneg %p197
        %p428 = pneg %p221
        %p429 = pneg %p218
        %p430 = pneg %p242
        %p431 = pneg %p239
        %p432 = pneg %p263
        %p433 = pneg %p260
        %p434 = pneg %p289
        %p435 = pneg %p286
        %s436 = sand.u32 %s276, 1
        %s437 = scalar_lea.sflag [#allocation4], %s436
        %s438 = sand.u32 %s276, 1
        %s439 = smul.addr %s438, 4
        %s440 = scalar_lea.vmem [#allocation7], %s439
        %p441 = pneg %p315
        %p442 = pneg %p312
        %s443 = sand.u32 %s302, 1
        %s444 = scalar_lea.sflag [#allocation9], %s443
        %s445 = sand.u32 %s302, 1
        %s446 = smul.addr %s445, 4
        %s447 = scalar_lea.vmem [#allocation8], %s446
        %p448 = scmp.lt.s32.totalorder %s32, 1
        %s449 = scalar_select %p448, %s32, 1
        %s450 = smul.addr %s449, 3
        %s451 = smul.addr %s450, 8
        %s452 = scalar_lea.vmem %s0, %s451
        %v454 = vld [vmem:[%s452] sm:$0xff]
        %v455 = vld [vmem:[%s452 + $0x8] sm:$0xff]
        %v456 = vld [vmem:[%s452 + $0x10] sm:$0xf]
        %v457 = vpack.c.bf16 %v455, %v454
        %v458 = vld [vmem:[%s1] sm:$0xff]
        %v459 = vld [vmem:[%s1 + $0x8] sm:$0xff]
        %v460 = vld [vmem:[%s1 + $0x10] sm:$0xff]
        %v461 = vld [vmem:[%s1 + $0x18] sm:$0xff]
        %v462 = vld [vmem:[%s1 + $0x20] sm:$0xff]
        %v463 = vld [vmem:[%s1 + $0x28] sm:$0xff]
        %v464 = vld [vmem:[%s1 + $0x30] sm:$0xff]
        %v465 = vld [vmem:[%s1 + $0x38] sm:$0xff]
        %v466 = vpack.c.bf16 %v456, %v456
        %s467 = scalar_lea.vmem %s1, 64
        %v468 = vld [vmem:[%s467] sm:$0xff]
        %v469 = vld [vmem:[%s467 + $0x8] sm:$0xff]
        %v470 = vld [vmem:[%s467 + $0x10] sm:$0xff]
        %v471 = vld [vmem:[%s467 + $0x18] sm:$0xff]
        %v472 = vld [vmem:[%s467 + $0x20] sm:$0xff]
        %v473 = vld [vmem:[%s467 + $0x28] sm:$0xff]
        %v474 = vld [vmem:[%s467 + $0x30] sm:$0xff]
        %v475 = vld [vmem:[%s467 + $0x38] sm:$0xff]
        %vm476 = vsmask.f32 7424
        %v478 = vshrl.u32 %v457, 16
        %v480 = vshll.u32 %v457, 16
        %v482 = vrot.slane %v480, 1
        %v483 = vor.u32 %v478, %v482
        %v485 = vshll.u32 %v466, 16
        %v487 = vrot.slane %v485, 1
        %v488 = vsel %vm476, %v483, %v487
        %v497 = vunpack.c.l.b16 %v468
        %v498 = vunpack.c.h.b16 %v468
        %v499 = vunpack.c.l.b16 %v469
        %v500 = vunpack.c.h.b16 %v469
        %v501 = vunpack.c.l.b16 %v470
        %v502 = vunpack.c.h.b16 %v470
        %v503 = vunpack.c.l.b16 %v471
        %v504 = vunpack.c.h.b16 %v471
        %v505 = vunpack.c.l.b16 %v472
        %v506 = vunpack.c.h.b16 %v472
        %v507 = vunpack.c.l.b16 %v473
        %v508 = vunpack.c.h.b16 %v473
        %v509 = vunpack.c.l.b16 %v474
        %v510 = vunpack.c.h.b16 %v474
        %v511 = vunpack.c.l.b16 %v475
        %v512 = vunpack.c.h.b16 %v475
        %v513 = vpack.c.b16 %v499, %v497
        %v514 = vpack.c.b16 %v500, %v498
        %v515 = vpack.c.b16 %v503, %v501
        %v516 = vpack.c.b16 %v504, %v502
        %v517 = vpack.c.b16 %v507, %v505
        %v518 = vpack.c.b16 %v508, %v506
        %v519 = vpack.c.b16 %v511, %v509
        %v520 = vpack.c.b16 %v512, %v510
        %vm529 = vcmask 523264
        %v531 = vsel %vm529, %v488, 0
        %533 = vmatprep.subr.bf16.mxu0 0
        %534 = vmatpush1.bf16.msra.mxu0 0
        %535 = vmatprep.subr.bf16.mxu0 0
        %536 = vmatpush1.bf16.msra.mxu0 0
        %537 = vmatprep.subr.bf16.mxu0 0
        %538 = vmatpush1.bf16.msra.mxu0 0
        %539 = vmatprep.subr.bf16.mxu0 0
        %540 = vmatpush1.bf16.msra.mxu0 0
        %541 = vmatprep.subr.bf16.mxu0 %v520
        %542 = vmatpush1.bf16.msra.mxu0 %v519
        %543 = vmatprep.subr.bf16.mxu0 %v518
        %544 = vmatpush1.bf16.msra.mxu0 %v517
        %545 = vmatprep.subr.bf16.mxu0 %v516
        %546 = vmatpush1.bf16.msra.mxu0 %v515
        %547 = vmatprep.subr.bf16.mxu0 %v514
        %548 = vmatpush1.bf16.msra.mxu0 %v513
        %549 = vmatprep.subr.bf16.mxu0 0
        %550 = vmatpush2.bf16.msra.mxu0 0
        %551 = vmatprep.subr.bf16.mxu0 0
        %552 = vmatpush2.bf16.msra.mxu0 0
        %553 = vmatprep.subr.bf16.mxu0 0
        %554 = vmatpush2.bf16.msra.mxu0 0
        %555 = vmatprep.subr.bf16.mxu0 0
        %556 = vmatpush2.bf16.msra.mxu0 0
        %557 = vmatprep.subr.bf16.mxu0 0
        %558 = vmatpush2.bf16.msra.mxu0 0
        %559 = vmatprep.subr.bf16.mxu0 0
        %560 = vmatpush2.bf16.msra.mxu0 0
        %561 = vmatprep.subr.bf16.mxu0 0
        %562 = vmatpush2.bf16.msra.mxu0 0
        %563 = vmatprep.subr.bf16.mxu0 0
        %564 = vmatpush2.bf16.msra.mxu0 0
        %565 = vmatprep.mubr.bf16.mxu0 0
        %566 = vmatmul.mubr.bf16.gmra.mxu0 %v531
        %v567 = vpop.f32.mrf.mxu0
        %v568 = vadd.f32 0.0, %v567
        %v569 = vpop.f32.mrf.mxu0
        %v570 = vadd.f32 0.0, %v569
        %v571 = vpop.f32.mrf.mxu0
        %v572 = vadd.f32 0.0, %v571
        %v573 = vpop.f32.mrf.mxu0
        %v574 = vadd.f32 0.0, %v573
        %575 = vdwg.mxu0
        %v584 = vunpack.c.l.b16 %v458
        %v585 = vunpack.c.h.b16 %v458
        %v586 = vunpack.c.l.b16 %v459
        %v587 = vunpack.c.h.b16 %v459
        %v588 = vunpack.c.l.b16 %v460
        %v589 = vunpack.c.h.b16 %v460
        %v590 = vunpack.c.l.b16 %v461
        %v591 = vunpack.c.h.b16 %v461
        %v592 = vunpack.c.l.b16 %v462
        %v593 = vunpack.c.h.b16 %v462
        %v594 = vunpack.c.l.b16 %v463
        %v595 = vunpack.c.h.b16 %v463
        %v596 = vunpack.c.l.b16 %v464
        %v597 = vunpack.c.h.b16 %v464
        %v598 = vunpack.c.l.b16 %v465
        %v599 = vunpack.c.h.b16 %v465
        %v600 = vpack.c.b16 %v586, %v584
        %v601 = vpack.c.b16 %v587, %v585
        %v602 = vpack.c.b16 %v590, %v588
        %v603 = vpack.c.b16 %v591, %v589
        %v604 = vpack.c.b16 %v594, %v592
        %v605 = vpack.c.b16 %v595, %v593
        %v606 = vpack.c.b16 %v598, %v596
        %v607 = vpack.c.b16 %v599, %v597
        %v616 = vsel %vm529, %v457, 0
        %618 = vmatprep.subr.bf16.mxu0 0
        %619 = vmatpush1.bf16.msra.mxu0 0
        %620 = vmatprep.subr.bf16.mxu0 0
        %621 = vmatpush1.bf16.msra.mxu0 0
        %622 = vmatprep.subr.bf16.mxu0 0
        %623 = vmatpush1.bf16.msra.mxu0 0
        %624 = vmatprep.subr.bf16.mxu0 0
        %625 = vmatpush1.bf16.msra.mxu0 0
        %626 = vmatprep.subr.bf16.mxu0 %v607
        %627 = vmatpush1.bf16.msra.mxu0 %v606
        %628 = vmatprep.subr.bf16.mxu0 %v605
        %629 = vmatpush1.bf16.msra.mxu0 %v604
        %630 = vmatprep.subr.bf16.mxu0 %v603
        %631 = vmatpush1.bf16.msra.mxu0 %v602
        %632 = vmatprep.subr.bf16.mxu0 %v601
        %633 = vmatpush1.bf16.msra.mxu0 %v600
        %634 = vmatprep.subr.bf16.mxu0 0
        %635 = vmatpush2.bf16.msra.mxu0 0
        %636 = vmatprep.subr.bf16.mxu0 0
        %637 = vmatpush2.bf16.msra.mxu0 0
        %638 = vmatprep.subr.bf16.mxu0 0
        %639 = vmatpush2.bf16.msra.mxu0 0
        %640 = vmatprep.subr.bf16.mxu0 0
        %641 = vmatpush2.bf16.msra.mxu0 0
        %642 = vmatprep.subr.bf16.mxu0 0
        %643 = vmatpush2.bf16.msra.mxu0 0
        %644 = vmatprep.subr.bf16.mxu0 0
        %645 = vmatpush2.bf16.msra.mxu0 0
        %646 = vmatprep.subr.bf16.mxu0 0
        %647 = vmatpush2.bf16.msra.mxu0 0
        %648 = vmatprep.subr.bf16.mxu0 0
        %649 = vmatpush2.bf16.msra.mxu0 0
        %650 = vmatprep.mubr.bf16.mxu0 0
        %651 = vmatmul.mubr.bf16.gmra.mxu0 %v616
        %v652 = vpop.f32.mrf.mxu0
        %v653 = vadd.f32 %v568, %v652
        %v654 = vpop.f32.mrf.mxu0
        %v655 = vadd.f32 %v570, %v654
        %v656 = vpop.f32.mrf.mxu0
        %v657 = vadd.f32 %v572, %v656
        %v658 = vpop.f32.mrf.mxu0
        %v659 = vadd.f32 %v574, %v658
        %660 = vdwg.mxu0
        %s661 = scalar_lea.vmem %s1, 128
        %v662 = vld [vmem:[%s661] sm:$0xff]
        %v663 = vld [vmem:[%s661 + $0x8] sm:$0xff]
        %v664 = vld [vmem:[%s661 + $0x10] sm:$0xff]
        %v665 = vld [vmem:[%s661 + $0x18] sm:$0xff]
        %v666 = vld [vmem:[%s661 + $0x20] sm:$0xff]
        %v667 = vld [vmem:[%s661 + $0x28] sm:$0xff]
        %v668 = vld [vmem:[%s661 + $0x30] sm:$0xff]
        %v669 = vld [vmem:[%s661 + $0x38] sm:$0xff]
        %vm672 = vcmask 1046528
        %v673 = vrot.slane %v457, 1
        %v674 = vrot.slane %v466, 1
        %v675 = vsel %vm672, %v673, %v674
        %v684 = vunpack.c.l.b16 %v662
        %v685 = vunpack.c.h.b16 %v662
        %v686 = vunpack.c.l.b16 %v663
        %v687 = vunpack.c.h.b16 %v663
        %v688 = vunpack.c.l.b16 %v664
        %v689 = vunpack.c.h.b16 %v664
        %v690 = vunpack.c.l.b16 %v665
        %v691 = vunpack.c.h.b16 %v665
        %v692 = vunpack.c.l.b16 %v666
        %v693 = vunpack.c.h.b16 %v666
        %v694 = vunpack.c.l.b16 %v667
        %v695 = vunpack.c.h.b16 %v667
        %v696 = vunpack.c.l.b16 %v668
        %v697 = vunpack.c.h.b16 %v668
        %v698 = vunpack.c.l.b16 %v669
        %v699 = vunpack.c.h.b16 %v669
        %v700 = vpack.c.b16 %v686, %v684
        %v701 = vpack.c.b16 %v687, %v685
        %v702 = vpack.c.b16 %v690, %v688
        %v703 = vpack.c.b16 %v691, %v689
        %v704 = vpack.c.b16 %v694, %v692
        %v705 = vpack.c.b16 %v695, %v693
        %v706 = vpack.c.b16 %v698, %v696
        %v707 = vpack.c.b16 %v699, %v697
        %v717 = vsel %vm529, %v675, 0
        %719 = vmatprep.subr.bf16.mxu0 0
        %720 = vmatpush1.bf16.msra.mxu0 0
        %721 = vmatprep.subr.bf16.mxu0 0
        %722 = vmatpush1.bf16.msra.mxu0 0
        %723 = vmatprep.subr.bf16.mxu0 0
        %724 = vmatpush1.bf16.msra.mxu0 0
        %725 = vmatprep.subr.bf16.mxu0 0
        %726 = vmatpush1.bf16.msra.mxu0 0
        %727 = vmatprep.subr.bf16.mxu0 %v707
        %728 = vmatpush1.bf16.msra.mxu0 %v706
        %729 = vmatprep.subr.bf16.mxu0 %v705
        %730 = vmatpush1.bf16.msra.mxu0 %v704
        %731 = vmatprep.subr.bf16.mxu0 %v703
        %732 = vmatpush1.bf16.msra.mxu0 %v702
        %733 = vmatprep.subr.bf16.mxu0 %v701
        %734 = vmatpush1.bf16.msra.mxu0 %v700
        %735 = vmatprep.subr.bf16.mxu0 0
        %736 = vmatpush2.bf16.msra.mxu0 0
        %737 = vmatprep.subr.bf16.mxu0 0
        %738 = vmatpush2.bf16.msra.mxu0 0
        %739 = vmatprep.subr.bf16.mxu0 0
        %740 = vmatpush2.bf16.msra.mxu0 0
        %741 = vmatprep.subr.bf16.mxu0 0
        %742 = vmatpush2.bf16.msra.mxu0 0
        %743 = vmatprep.subr.bf16.mxu0 0
        %744 = vmatpush2.bf16.msra.mxu0 0
        %745 = vmatprep.subr.bf16.mxu0 0
        %746 = vmatpush2.bf16.msra.mxu0 0
        %747 = vmatprep.subr.bf16.mxu0 0
        %748 = vmatpush2.bf16.msra.mxu0 0
        %749 = vmatprep.subr.bf16.mxu0 0
        %750 = vmatpush2.bf16.msra.mxu0 0
        %751 = vmatprep.mubr.bf16.mxu0 0
        %752 = vmatmul.mubr.bf16.gmra.mxu0 %v717
        %v753 = vpop.f32.mrf.mxu0
        %v754 = vadd.f32 0.0, %v753
        %v755 = vpop.f32.mrf.mxu0
        %v756 = vadd.f32 0.0, %v755
        %v757 = vpop.f32.mrf.mxu0
        %v758 = vadd.f32 0.0, %v757
        %v759 = vpop.f32.mrf.mxu0
        %v760 = vadd.f32 0.0, %v759
        %761 = vdwg.mxu0
        %v762 = vadd.f32 %v653, %v754
        %v763 = vadd.f32 %v655, %v756
        %v764 = vadd.f32 %v657, %v758
        %v765 = vadd.f32 %v659, %v760
        %s766 = scalar_lea.vmem %s1, 192
        %v767 = vld [vmem:[%s766] sm:$0xff]
        %v768 = vld [vmem:[%s766 + $0x8] sm:$0xff]
        %v769 = vld [vmem:[%s766 + $0x10] sm:$0xff]
        %v770 = vld [vmem:[%s766 + $0x18] sm:$0xff]
        %v771 = vld [vmem:[%s766 + $0x20] sm:$0xff]
        %v772 = vld [vmem:[%s766 + $0x28] sm:$0xff]
        %v773 = vld [vmem:[%s766 + $0x30] sm:$0xff]
        %v774 = vld [vmem:[%s766 + $0x38] sm:$0xff]
        %vm775 = vsmask.f32 6400
        %v776 = vrot.slane %v478, 1
        %v777 = vrot.slane %v480, 2
        %v778 = vor.u32 %v776, %v777
        %v779 = vshrl.u32 %v466, 16
        %v781 = vrot.slane %v779, 1
        %v782 = vrot.slane %v485, 2
        %v783 = vor.u32 %v781, %v782
        %v784 = vsel %vm775, %v778, %v783
        %v793 = vunpack.c.l.b16 %v767
        %v794 = vunpack.c.h.b16 %v767
        %v795 = vunpack.c.l.b16 %v768
        %v796 = vunpack.c.h.b16 %v768
        %v797 = vunpack.c.l.b16 %v769
        %v798 = vunpack.c.h.b16 %v769
        %v799 = vunpack.c.l.b16 %v770
        %v800 = vunpack.c.h.b16 %v770
        %v801 = vunpack.c.l.b16 %v771
        %v802 = vunpack.c.h.b16 %v771
        %v803 = vunpack.c.l.b16 %v772
        %v804 = vunpack.c.h.b16 %v772
        %v805 = vunpack.c.l.b16 %v773
        %v806 = vunpack.c.h.b16 %v773
        %v807 = vunpack.c.l.b16 %v774
        %v808 = vunpack.c.h.b16 %v774
        %v809 = vpack.c.b16 %v795, %v793
        %v810 = vpack.c.b16 %v796, %v794
        %v811 = vpack.c.b16 %v799, %v797
        %v812 = vpack.c.b16 %v800, %v798
        %v813 = vpack.c.b16 %v803, %v801
        %v814 = vpack.c.b16 %v804, %v802
        %v815 = vpack.c.b16 %v807, %v805
        %v816 = vpack.c.b16 %v808, %v806
        %v826 = vsel %vm529, %v784, 0
        %828 = vmatprep.subr.bf16.mxu0 0
        %829 = vmatpush1.bf16.msra.mxu0 0
        %830 = vmatprep.subr.bf16.mxu0 0
        %831 = vmatpush1.bf16.msra.mxu0 0
        %832 = vmatprep.subr.bf16.mxu0 0
        %833 = vmatpush1.bf16.msra.mxu0 0
        %834 = vmatprep.subr.bf16.mxu0 0
        %835 = vmatpush1.bf16.msra.mxu0 0
        %836 = vmatprep.subr.bf16.mxu0 %v816
        %837 = vmatpush1.bf16.msra.mxu0 %v815
        %838 = vmatprep.subr.bf16.mxu0 %v814
        %839 = vmatpush1.bf16.msra.mxu0 %v813
        %840 = vmatprep.subr.bf16.mxu0 %v812
        %841 = vmatpush1.bf16.msra.mxu0 %v811
        %842 = vmatprep.subr.bf16.mxu0 %v810
        %843 = vmatpush1.bf16.msra.mxu0 %v809
        %844 = vmatprep.subr.bf16.mxu0 0
        %845 = vmatpush2.bf16.msra.mxu0 0
        %846 = vmatprep.subr.bf16.mxu0 0
        %847 = vmatpush2.bf16.msra.mxu0 0
        %848 = vmatprep.subr.bf16.mxu0 0
        %849 = vmatpush2.bf16.msra.mxu0 0
        %850 = vmatprep.subr.bf16.mxu0 0
        %851 = vmatpush2.bf16.msra.mxu0 0
        %852 = vmatprep.subr.bf16.mxu0 0
        %853 = vmatpush2.bf16.msra.mxu0 0
        %854 = vmatprep.subr.bf16.mxu0 0
        %855 = vmatpush2.bf16.msra.mxu0 0
        %856 = vmatprep.subr.bf16.mxu0 0
        %857 = vmatpush2.bf16.msra.mxu0 0
        %858 = vmatprep.subr.bf16.mxu0 0
        %859 = vmatpush2.bf16.msra.mxu0 0
        %860 = vmatprep.mubr.bf16.mxu0 0
        %861 = vmatmul.mubr.bf16.gmra.mxu0 %v826
        %v862 = vpop.f32.mrf.mxu0
        %v863 = vadd.f32 0.0, %v862
        %v864 = vpop.f32.mrf.mxu0
        %v865 = vadd.f32 0.0, %v864
        %v866 = vpop.f32.mrf.mxu0
        %v867 = vadd.f32 0.0, %v866
        %v868 = vpop.f32.mrf.mxu0
        %v869 = vadd.f32 0.0, %v868
        %870 = vdwg.mxu0
        %v871 = vadd.f32 %v762, %v863
        %v872 = vadd.f32 %v763, %v865
        %v873 = vadd.f32 %v764, %v867
        %v874 = vadd.f32 %v765, %v869
        %s875 = scalar_lea.vmem %s1, 256
        %v876 = vld [vmem:[%s875] sm:$0xff]
        %v877 = vld [vmem:[%s875 + $0x8] sm:$0xff]
        %v878 = vld [vmem:[%s875 + $0x10] sm:$0xff]
        %v879 = vld [vmem:[%s875 + $0x18] sm:$0xff]
        %v880 = vld [vmem:[%s875 + $0x20] sm:$0xff]
        %v881 = vld [vmem:[%s875 + $0x28] sm:$0xff]
        %v882 = vld [vmem:[%s875 + $0x30] sm:$0xff]
        %v883 = vld [vmem:[%s875 + $0x38] sm:$0xff]
        %vm884 = vcmask 1045504
        %v885 = vrot.slane %v457, 2
        %v886 = vrot.slane %v466, 2
        %v887 = vsel %vm884, %v885, %v886
        %v896 = vunpack.c.l.b16 %v876
        %v897 = vunpack.c.h.b16 %v876
        %v898 = vunpack.c.l.b16 %v877
        %v899 = vunpack.c.h.b16 %v877
        %v900 = vunpack.c.l.b16 %v878
        %v901 = vunpack.c.h.b16 %v878
        %v902 = vunpack.c.l.b16 %v879
        %v903 = vunpack.c.h.b16 %v879
        %v904 = vunpack.c.l.b16 %v880
        %v905 = vunpack.c.h.b16 %v880
        %v906 = vunpack.c.l.b16 %v881
        %v907 = vunpack.c.h.b16 %v881
        %v908 = vunpack.c.l.b16 %v882
        %v909 = vunpack.c.h.b16 %v882
        %v910 = vunpack.c.l.b16 %v883
        %v911 = vunpack.c.h.b16 %v883
        %v912 = vpack.c.b16 %v898, %v896
        %v913 = vpack.c.b16 %v899, %v897
        %v914 = vpack.c.b16 %v902, %v900
        %v915 = vpack.c.b16 %v903, %v901
        %v916 = vpack.c.b16 %v906, %v904
        %v917 = vpack.c.b16 %v907, %v905
        %v918 = vpack.c.b16 %v910, %v908
        %v919 = vpack.c.b16 %v911, %v909
        %v929 = vsel %vm529, %v887, 0
        %931 = vmatprep.subr.bf16.mxu0 0
        %932 = vmatpush1.bf16.msra.mxu0 0
        %933 = vmatprep.subr.bf16.mxu0 0
        %934 = vmatpush1.bf16.msra.mxu0 0
        %935 = vmatprep.subr.bf16.mxu0 0
        %936 = vmatpush1.bf16.msra.mxu0 0
        %937 = vmatprep.subr.bf16.mxu0 0
        %938 = vmatpush1.bf16.msra.mxu0 0
        %939 = vmatprep.subr.bf16.mxu0 %v919
        %940 = vmatpush1.bf16.msra.mxu0 %v918
        %941 = vmatprep.subr.bf16.mxu0 %v917
        %942 = vmatpush1.bf16.msra.mxu0 %v916
        %943 = vmatprep.subr.bf16.mxu0 %v915
        %944 = vmatpush1.bf16.msra.mxu0 %v914
        %945 = vmatprep.subr.bf16.mxu0 %v913
        %946 = vmatpush1.bf16.msra.mxu0 %v912
        %947 = vmatprep.subr.bf16.mxu0 0
        %948 = vmatpush2.bf16.msra.mxu0 0
        %949 = vmatprep.subr.bf16.mxu0 0
        %950 = vmatpush2.bf16.msra.mxu0 0
        %951 = vmatprep.subr.bf16.mxu0 0
        %952 = vmatpush2.bf16.msra.mxu0 0
        %953 = vmatprep.subr.bf16.mxu0 0
        %954 = vmatpush2.bf16.msra.mxu0 0
        %955 = vmatprep.subr.bf16.mxu0 0
        %956 = vmatpush2.bf16.msra.mxu0 0
        %957 = vmatprep.subr.bf16.mxu0 0
        %958 = vmatpush2.bf16.msra.mxu0 0
        %959 = vmatprep.subr.bf16.mxu0 0
        %960 = vmatpush2.bf16.msra.mxu0 0
        %961 = vmatprep.subr.bf16.mxu0 0
        %962 = vmatpush2.bf16.msra.mxu0 0
        %963 = vmatprep.mubr.bf16.mxu0 0
        %964 = vmatmul.mubr.bf16.gmra.mxu0 %v929
        %v965 = vpop.f32.mrf.mxu0
        %v966 = vadd.f32 0.0, %v965
        %v967 = vpop.f32.mrf.mxu0
        %v968 = vadd.f32 0.0, %v967
        %v969 = vpop.f32.mrf.mxu0
        %v970 = vadd.f32 0.0, %v969
        %v971 = vpop.f32.mrf.mxu0
        %v972 = vadd.f32 0.0, %v971
        %973 = vdwg.mxu0
        %v974 = vadd.f32 %v871, %v966
        %v975 = vadd.f32 %v872, %v968
        %v976 = vadd.f32 %v873, %v970
        %v977 = vadd.f32 %v874, %v972
        %v978 = vld [vmem:[%s2] sm:$0x3]
        %v980 = vlaneseq
        %v981 = vshrl.u32 %v980, 7
        %v982 = vsub.s32 0, %v981
        %v983 = vrot.slane %v978, %v982
        %v984 = vlaneseq
        %v985 = vshrl.u32 %v984, 7
        %v986 = vsub.s32 1, %v985
        %v987 = vrot.slane %v978, %v986
        %v990 = vadd.f32 %v974, %v983
        %v991 = vadd.f32 %v975, %v987
        %v992 = vadd.f32 %v976, %v983
        %v993 = vadd.f32 %v977, %v987
        %vm994 = vcmp.ge.f32.partialorder %v990, 0.0
        %vm995 = vcmp.ge.f32.partialorder %v991, 0.0
        %vm996 = vcmp.ge.f32.partialorder %v992, 0.0
        %vm997 = vcmp.ge.f32.partialorder %v993, 0.0
        %v998 = vmul.f32 %v990, 0.01
        %v999 = vmul.f32 %v991, 0.01
        %v1000 = vmul.f32 %v992, 0.01
        %v1001 = vmul.f32 %v993, 0.01
        %v1002 = vsel %vm994, %v990, %v998
        %v1003 = vsel %vm995, %v991, %v999
        %v1004 = vsel %vm996, %v992, %v1000
        %v1005 = vsel %vm997, %v993, %v1001
        %1010 = vrot.lane.b32.xlu0 %v1002, 32
        %v1011 = vpop.permute.xlu0 %1010
        %1012 = vrot.lane.b32.xlu0 %v1003, 32
        %v1013 = vpop.permute.xlu0 %1012
        %1014 = vrot.lane.b32.xlu0 %v1004, 32
        %v1015 = vpop.permute.xlu0 %1014
        %1016 = vrot.lane.b32.xlu0 %v1005, 32
        %v1017 = vpop.permute.xlu0 %1016
        %vm1018 = vcmask 261120
        %v1019 = vsel %vm1018, %v1011, %v1013
        %v1020 = vsel %vm1018, %v1015, %v1017
        %v1025 = vsel %vm1018, 0.0, %v1011
        %v1026 = vsel %vm1018, 0.0, %v1015
        %v1027 = vsel %vm1018, %v1013, 0.0
        %v1028 = vsel %vm1018, %v1017, 0.0
        %vm1033 = vcmask 1041408
        %v1034 = vrot.slane %v1025, 6
        %v1035 = vrot.slane %v1019, 6
        %v1036 = vrot.slane %v1027, 6
        %v1037 = vrot.slane %v1026, 6
        %v1038 = vsel %vm1033, %v1034, %v1037
        %v1039 = vrot.slane %v1020, 6
        %v1040 = vsel %vm1033, %v1035, %v1039
        %v1041 = vrot.slane %v1028, 6
        %v1042 = vsel %vm1033, %v1036, %v1041
        %v1052 = vsel %vm1033, 0.0, %v1034
        %v1053 = vsel %vm1033, 0.0, %v1035
        %v1054 = vsel %vm1033, 0.0, %v1036
        %v1055 = vsel %vm1033, %v1037, 0.0
        %v1056 = vsel %vm1033, %v1039, 0.0
        %v1057 = vsel %vm1033, %v1041, 0.0
        %v1058 = vpack.c.bf16 %v1038, %v1052
        %v1059 = vpack.c.bf16 %v1040, %v1053
        %v1060 = vpack.c.bf16 %v1042, %v1054
        %v1061 = vpack.c.bf16 %v1055, %v1055
        %v1062 = vpack.c.bf16 %v1056, %v1056
        %v1063 = vpack.c.bf16 %v1057, %v1057
        %v1064 = vld [vmem:[%s4] sm:$0xf]
        %vm1065 = vcmask 162816
        %v1067 = vsel %vm1065, %v1064, 0
        %v1070 = vsel %vm1033, %v1061, 0
        %v1073 = vsel %vm1033, %v1062, 0
        %v1076 = vsel %vm1033, %v1063, 0
        %1078 = vmatprep.subr.bf16.mxu0 0
        %1079 = vmatpush1.bf16.msra.mxu0 0
        %1080 = vmatprep.subr.bf16.mxu0 0
        %1081 = vmatpush1.bf16.msra.mxu0 0
        %1082 = vmatprep.subr.bf16.mxu0 0
        %1083 = vmatpush1.bf16.msra.mxu0 0
        %1084 = vmatprep.subr.bf16.mxu0 0
        %1085 = vmatpush1.bf16.msra.mxu0 0
        %1086 = vmatprep.subr.bf16.mxu0 0
        %1087 = vmatpush1.bf16.msra.mxu0 0
        %1088 = vmatprep.subr.bf16.mxu0 0
        %1089 = vmatpush1.bf16.msra.mxu0 0
        %1090 = vmatprep.subr.bf16.mxu0 %v1073
        %1091 = vmatpush1.bf16.msra.mxu0 %v1070
        %1092 = vmatprep.subr.bf16.mxu0 %v1059
        %1093 = vmatpush1.bf16.msra.mxu0 %v1058
        %1094 = vmatprep.subr.bf16.mxu0 0
        %1095 = vmatpush2.bf16.msra.mxu0 0
        %1096 = vmatprep.subr.bf16.mxu0 0
        %1097 = vmatpush2.bf16.msra.mxu0 0
        %1098 = vmatprep.subr.bf16.mxu0 0
        %1099 = vmatpush2.bf16.msra.mxu0 0
        %1100 = vmatprep.subr.bf16.mxu0 0
        %1101 = vmatpush2.bf16.msra.mxu0 0
        %1102 = vmatprep.subr.bf16.mxu0 0
        %1103 = vmatpush2.bf16.msra.mxu0 0
        %1104 = vmatprep.subr.bf16.mxu0 0
        %1105 = vmatpush2.bf16.msra.mxu0 0
        %1106 = vmatprep.subr.bf16.mxu0 0
        %1107 = vmatpush2.bf16.msra.mxu0 0
        %1108 = vmatprep.subr.bf16.mxu0 0
        %1109 = vmatpush2.bf16.msra.mxu0 0
        %1110 = vmatprep.mubr.bf16.mxu0 0
        %1111 = vmatmul.mubr.bf16.gmra.mxu0 %v1067
        %v1112 = vpop.f32.mrf.mxu0
        %v1113 = vadd.f32 0.0, %v1112
        %v1114 = vpop.f32.mrf.mxu0
        %v1115 = vadd.f32 0.0, %v1114
        %v1116 = vpop.f32.mrf.mxu0
        %v1117 = vpop.f32.mrf.mxu0
        %1118 = vdwg.mxu0
        %1119 = vmatprep.subr.bf16.mxu0 0
        %1120 = vmatpush1.bf16.msra.mxu0 0
        %1121 = vmatprep.subr.bf16.mxu0 0
        %1122 = vmatpush1.bf16.msra.mxu0 0
        %1123 = vmatprep.subr.bf16.mxu0 0
        %1124 = vmatpush1.bf16.msra.mxu0 0
        %1125 = vmatprep.subr.bf16.mxu0 0
        %1126 = vmatpush1.bf16.msra.mxu0 0
        %1127 = vmatprep.subr.bf16.mxu0 0
        %1128 = vmatpush1.bf16.msra.mxu0 0
        %1129 = vmatprep.subr.bf16.mxu0 0
        %1130 = vmatpush1.bf16.msra.mxu0 0
        %1131 = vmatprep.subr.bf16.mxu0 0
        %1132 = vmatpush1.bf16.msra.mxu0 %v1076
        %1133 = vmatprep.subr.bf16.mxu0 0
        %1134 = vmatpush1.bf16.msra.mxu0 %v1060
        %1135 = vmatprep.subr.bf16.mxu0 0
        %1136 = vmatpush2.bf16.msra.mxu0 0
        %1137 = vmatprep.subr.bf16.mxu0 0
        %1138 = vmatpush2.bf16.msra.mxu0 0
        %1139 = vmatprep.subr.bf16.mxu0 0
        %1140 = vmatpush2.bf16.msra.mxu0 0
        %1141 = vmatprep.subr.bf16.mxu0 0
        %1142 = vmatpush2.bf16.msra.mxu0 0
        %1143 = vmatprep.subr.bf16.mxu0 0
        %1144 = vmatpush2.bf16.msra.mxu0 0
        %1145 = vmatprep.subr.bf16.mxu0 0
        %1146 = vmatpush2.bf16.msra.mxu0 0
        %1147 = vmatprep.subr.bf16.mxu0 0
        %1148 = vmatpush2.bf16.msra.mxu0 0
        %1149 = vmatprep.subr.bf16.mxu0 0
        %1150 = vmatpush2.bf16.msra.mxu0 0
        %1151 = vmatprep.mubr.bf16.mxu0 0
        %1152 = vmatmul.mubr.bf16.gmra.mxu0 %v1067
        %v1153 = vpop.f32.mrf.mxu0
        %v1154 = vadd.f32 0.0, %v1153
        %v1155 = vpop.f32.mrf.mxu0
        %v1156 = vpop.f32.mrf.mxu0
        %v1157 = vpop.f32.mrf.mxu0
        %1158 = vdwg.mxu0
        %v1159 = vpack.c.bf16 %v1113, %v1113
        %v1160 = vpack.c.bf16 %v1115, %v1115
        %v1161 = vpack.c.bf16 %v1154, %v1154
        %v1162 = vld [vmem:[#allocation2] sm:$0xff]
        %v1163 = vld [vmem:[#allocation2 + $0x8] sm:$0xff]
        %v1164 = vld [vmem:[#allocation2 + $0x10] sm:$0xff]
        %v1165 = vld [vmem:[#allocation2 + $0x18] sm:$0xff]
        %v1166 = vld [vmem:[#allocation2 + $0x20] sm:$0xff]
        %v1167 = vld [vmem:[#allocation2 + $0x28] sm:$0xff]
        %v1168 = vld [vmem:[#allocation2 + $0x30] sm:$0xff]
        %v1169 = vld [vmem:[#allocation2 + $0x38] sm:$0xff]
        %v1170 = vld [vmem:[#allocation2 + $0x40] sm:$0xff]
        %v1171 = vld [vmem:[#allocation2 + $0x48] sm:$0xff]
        %v1172 = vld [vmem:[#allocation2 + $0x50] sm:$0xff]
        %v1173 = vld [vmem:[#allocation2 + $0x58] sm:$0xff]
        %v1174 = vld [vmem:[#allocation2 + $0x60] sm:$0xff]
        %v1175 = vld [vmem:[#allocation2 + $0x68] sm:$0xff]
        %v1176 = vld [vmem:[#allocation2 + $0x70] sm:$0xff]
        %v1177 = vld [vmem:[#allocation2 + $0x78] sm:$0xff]
        %v1178 = vld [vmem:[#allocation2 + $0x80] sm:$0xff]
        %v1179 = vld [vmem:[#allocation2 + $0x88] sm:$0xff]
        %v1180 = vld [vmem:[#allocation2 + $0x90] sm:$0xff]
        %v1181 = vld [vmem:[#allocation2 + $0x98] sm:$0xff]
        %v1182 = vld [vmem:[#allocation2 + $0xa0] sm:$0xff]
        %v1183 = vld [vmem:[#allocation2 + $0xa8] sm:$0xff]
        %v1184 = vld [vmem:[#allocation2 + $0xb0] sm:$0xff]
        %v1185 = vld [vmem:[#allocation2 + $0xb8] sm:$0xff]
        %v1186 = vld [vmem:[#allocation2 + $0xc0] sm:$0xff]
        %v1187 = vld [vmem:[#allocation2 + $0xc8] sm:$0xff]
        %v1188 = vld [vmem:[#allocation2 + $0xd0] sm:$0xff]
        %v1189 = vld [vmem:[#allocation2 + $0xd8] sm:$0xff]
        %v1190 = vld [vmem:[#allocation2 + $0xe0] sm:$0xff]
        %v1191 = vld [vmem:[#allocation2 + $0xe8] sm:$0xff]
        %v1192 = vld [vmem:[#allocation2 + $0xf0] sm:$0xff]
        %v1193 = vld [vmem:[#allocation2 + $0xf8] sm:$0xff]
        %v1194 = vld [vmem:[#allocation2 + $0x100] sm:$0xff]
        %v1195 = vld [vmem:[#allocation2 + $0x108] sm:$0xff]
        %v1196 = vld [vmem:[#allocation2 + $0x110] sm:$0xff]
        %v1197 = vld [vmem:[#allocation2 + $0x118] sm:$0xff]
        %v1198 = vld [vmem:[#allocation2 + $0x120] sm:$0xff]
        %v1199 = vld [vmem:[#allocation2 + $0x128] sm:$0xff]
        %v1200 = vld [vmem:[#allocation2 + $0x130] sm:$0xff]
        %v1201 = vld [vmem:[#allocation2 + $0x138] sm:$0xff]
        %s1202 = scalar_lea.vmem %s4, 4
        %v1203 = vld [vmem:[%s1202] sm:$0xf]
        %v1205 = vsel %vm1065, %v1203, 0
        %1207 = vmatprep.subr.bf16.mxu0 0
        %1208 = vmatpush1.bf16.msra.mxu0 0
        %1209 = vmatprep.subr.bf16.mxu0 0
        %1210 = vmatpush1.bf16.msra.mxu0 0
        %1211 = vmatprep.subr.bf16.mxu0 0
        %1212 = vmatpush1.bf16.msra.mxu0 0
        %1213 = vmatprep.subr.bf16.mxu0 0
        %1214 = vmatpush1.bf16.msra.mxu0 0
        %1215 = vmatprep.subr.bf16.mxu0 0
        %1216 = vmatpush1.bf16.msra.mxu0 0
        %1217 = vmatprep.subr.bf16.mxu0 0
        %1218 = vmatpush1.bf16.msra.mxu0 0
        %1219 = vmatprep.subr.bf16.mxu0 %v1073
        %1220 = vmatpush1.bf16.msra.mxu0 %v1070
        %1221 = vmatprep.subr.bf16.mxu0 %v1059
        %1222 = vmatpush1.bf16.msra.mxu0 %v1058
        %1223 = vmatprep.subr.bf16.mxu0 0
        %1224 = vmatpush2.bf16.msra.mxu0 0
        %1225 = vmatprep.subr.bf16.mxu0 0
        %1226 = vmatpush2.bf16.msra.mxu0 0
        %1227 = vmatprep.subr.bf16.mxu0 0
        %1228 = vmatpush2.bf16.msra.mxu0 0
        %1229 = vmatprep.subr.bf16.mxu0 0
        %1230 = vmatpush2.bf16.msra.mxu0 0
        %1231 = vmatprep.subr.bf16.mxu0 0
        %1232 = vmatpush2.bf16.msra.mxu0 0
        %1233 = vmatprep.subr.bf16.mxu0 0
        %1234 = vmatpush2.bf16.msra.mxu0 0
        %1235 = vmatprep.subr.bf16.mxu0 0
        %1236 = vmatpush2.bf16.msra.mxu0 0
        %1237 = vmatprep.subr.bf16.mxu0 0
        %1238 = vmatpush2.bf16.msra.mxu0 0
        %1239 = vmatprep.mubr.bf16.mxu0 0
        %1240 = vmatmul.mubr.bf16.gmra.mxu0 %v1205
        %v1241 = vpop.f32.mrf.mxu0
        %v1242 = vadd.f32 0.0, %v1241
        %v1243 = vpop.f32.mrf.mxu0
        %v1244 = vadd.f32 0.0, %v1243
        %v1245 = vpop.f32.mrf.mxu0
        %v1246 = vpop.f32.mrf.mxu0
        %1247 = vdwg.mxu0
        %1248 = vmatprep.subr.bf16.mxu0 0
        %1249 = vmatpush1.bf16.msra.mxu0 0
        %1250 = vmatprep.subr.bf16.mxu0 0
        %1251 = vmatpush1.bf16.msra.mxu0 0
        %1252 = vmatprep.subr.bf16.mxu0 0
        %1253 = vmatpush1.bf16.msra.mxu0 0
        %1254 = vmatprep.subr.bf16.mxu0 0
        %1255 = vmatpush1.bf16.msra.mxu0 0
        %1256 = vmatprep.subr.bf16.mxu0 0
        %1257 = vmatpush1.bf16.msra.mxu0 0
        %1258 = vmatprep.subr.bf16.mxu0 0
        %1259 = vmatpush1.bf16.msra.mxu0 0
        %1260 = vmatprep.subr.bf16.mxu0 0
        %1261 = vmatpush1.bf16.msra.mxu0 %v1076
        %1262 = vmatprep.subr.bf16.mxu0 0
        %1263 = vmatpush1.bf16.msra.mxu0 %v1060
        %1264 = vmatprep.subr.bf16.mxu0 0
        %1265 = vmatpush2.bf16.msra.mxu0 0
        %1266 = vmatprep.subr.bf16.mxu0 0
        %1267 = vmatpush2.bf16.msra.mxu0 0
        %1268 = vmatprep.subr.bf16.mxu0 0
        %1269 = vmatpush2.bf16.msra.mxu0 0
        %1270 = vmatprep.subr.bf16.mxu0 0
        %1271 = vmatpush2.bf16.msra.mxu0 0
        %1272 = vmatprep.subr.bf16.mxu0 0
        %1273 = vmatpush2.bf16.msra.mxu0 0
        %1274 = vmatprep.subr.bf16.mxu0 0
        %1275 = vmatpush2.bf16.msra.mxu0 0
        %1276 = vmatprep.subr.bf16.mxu0 0
        %1277 = vmatpush2.bf16.msra.mxu0 0
        %1278 = vmatprep.subr.bf16.mxu0 0
        %1279 = vmatpush2.bf16.msra.mxu0 0
        %1280 = vmatprep.mubr.bf16.mxu0 0
        %1281 = vmatmul.mubr.bf16.gmra.mxu0 %v1205
        %v1282 = vpop.f32.mrf.mxu0
        %v1283 = vadd.f32 0.0, %v1282
        %v1284 = vpop.f32.mrf.mxu0
        %v1285 = vpop.f32.mrf.mxu0
        %v1286 = vpop.f32.mrf.mxu0
        %1287 = vdwg.mxu0
        %v1288 = vpack.c.bf16 %v1242, %v1242
        %v1289 = vpack.c.bf16 %v1244, %v1244
        %v1290 = vpack.c.bf16 %v1283, %v1283
        %s1291 = scalar_lea.vmem [#allocation2], 320
        %v1292 = vld [vmem:[%s1291] sm:$0xff]
        %v1293 = vld [vmem:[%s1291 + $0x8] sm:$0xff]
        %v1294 = vld [vmem:[%s1291 + $0x10] sm:$0xff]
        %v1295 = vld [vmem:[%s1291 + $0x18] sm:$0xff]
        %v1296 = vld [vmem:[%s1291 + $0x20] sm:$0xff]
        %v1297 = vld [vmem:[%s1291 + $0x28] sm:$0xff]
        %v1298 = vld [vmem:[%s1291 + $0x30] sm:$0xff]
        %v1299 = vld [vmem:[%s1291 + $0x38] sm:$0xff]
        %v1300 = vld [vmem:[%s1291 + $0x40] sm:$0xff]
        %v1301 = vld [vmem:[%s1291 + $0x48] sm:$0xff]
        %v1302 = vld [vmem:[%s1291 + $0x50] sm:$0xff]
        %v1303 = vld [vmem:[%s1291 + $0x58] sm:$0xff]
        %v1304 = vld [vmem:[%s1291 + $0x60] sm:$0xff]
        %v1305 = vld [vmem:[%s1291 + $0x68] sm:$0xff]
        %v1306 = vld [vmem:[%s1291 + $0x70] sm:$0xff]
        %v1307 = vld [vmem:[%s1291 + $0x78] sm:$0xff]
        %v1308 = vld [vmem:[%s1291 + $0x80] sm:$0xff]
        %v1309 = vld [vmem:[%s1291 + $0x88] sm:$0xff]
        %v1310 = vld [vmem:[%s1291 + $0x90] sm:$0xff]
        %v1311 = vld [vmem:[%s1291 + $0x98] sm:$0xff]
        %v1312 = vld [vmem:[%s1291 + $0xa0] sm:$0xff]
        %v1313 = vld [vmem:[%s1291 + $0xa8] sm:$0xff]
        %v1314 = vld [vmem:[%s1291 + $0xb0] sm:$0xff]
        %v1315 = vld [vmem:[%s1291 + $0xb8] sm:$0xff]
        %v1316 = vld [vmem:[%s1291 + $0xc0] sm:$0xff]
        %v1317 = vld [vmem:[%s1291 + $0xc8] sm:$0xff]
        %v1318 = vld [vmem:[%s1291 + $0xd0] sm:$0xff]
        %v1319 = vld [vmem:[%s1291 + $0xd8] sm:$0xff]
        %v1320 = vld [vmem:[%s1291 + $0xe0] sm:$0xff]
        %v1321 = vld [vmem:[%s1291 + $0xe8] sm:$0xff]
        %v1322 = vld [vmem:[%s1291 + $0xf0] sm:$0xff]
        %v1323 = vld [vmem:[%s1291 + $0xf8] sm:$0xff]
        %v1324 = vld [vmem:[%s1291 + $0x100] sm:$0xff]
        %v1325 = vld [vmem:[%s1291 + $0x108] sm:$0xff]
        %v1326 = vld [vmem:[%s1291 + $0x110] sm:$0xff]
        %v1327 = vld [vmem:[%s1291 + $0x118] sm:$0xff]
        %v1328 = vld [vmem:[%s1291 + $0x120] sm:$0xff]
        %v1329 = vld [vmem:[%s1291 + $0x128] sm:$0xff]
        %v1330 = vld [vmem:[%s1291 + $0x130] sm:$0xff]
        %v1331 = vld [vmem:[%s1291 + $0x138] sm:$0xff]
        %v1372 = vunpack.c.l.b16 %v1292
        %v1373 = vunpack.c.h.b16 %v1292
        %v1374 = vunpack.c.l.b16 %v1293
        %v1375 = vunpack.c.h.b16 %v1293
        %v1376 = vunpack.c.l.b16 %v1294
        %v1377 = vunpack.c.h.b16 %v1294
        %v1378 = vunpack.c.l.b16 %v1295
        %v1379 = vunpack.c.h.b16 %v1295
        %v1380 = vunpack.c.l.b16 %v1296
        %v1381 = vunpack.c.h.b16 %v1296
        %v1382 = vunpack.c.l.b16 %v1297
        %v1383 = vunpack.c.h.b16 %v1297
        %v1384 = vunpack.c.l.b16 %v1298
        %v1385 = vunpack.c.h.b16 %v1298
        %v1386 = vunpack.c.l.b16 %v1299
        %v1387 = vunpack.c.h.b16 %v1299
        %v1388 = vunpack.c.l.b16 %v1300
        %v1389 = vunpack.c.h.b16 %v1300
        %v1390 = vunpack.c.l.b16 %v1301
        %v1391 = vunpack.c.h.b16 %v1301
        %v1392 = vunpack.c.l.b16 %v1302
        %v1393 = vunpack.c.h.b16 %v1302
        %v1394 = vunpack.c.l.b16 %v1303
        %v1395 = vunpack.c.h.b16 %v1303
        %v1396 = vunpack.c.l.b16 %v1304
        %v1397 = vunpack.c.h.b16 %v1304
        %v1398 = vunpack.c.l.b16 %v1305
        %v1399 = vunpack.c.h.b16 %v1305
        %v1400 = vunpack.c.l.b16 %v1306
        %v1401 = vunpack.c.h.b16 %v1306
        %v1402 = vunpack.c.l.b16 %v1307
        %v1403 = vunpack.c.h.b16 %v1307
        %v1404 = vunpack.c.l.b16 %v1308
        %v1405 = vunpack.c.h.b16 %v1308
        %v1406 = vunpack.c.l.b16 %v1309
        %v1407 = vunpack.c.h.b16 %v1309
        %v1408 = vunpack.c.l.b16 %v1310
        %v1409 = vunpack.c.h.b16 %v1310
        %v1410 = vunpack.c.l.b16 %v1311
        %v1411 = vunpack.c.h.b16 %v1311
        %v1412 = vunpack.c.l.b16 %v1312
        %v1413 = vunpack.c.h.b16 %v1312
        %v1414 = vunpack.c.l.b16 %v1313
        %v1415 = vunpack.c.h.b16 %v1313
        %v1416 = vunpack.c.l.b16 %v1314
        %v1417 = vunpack.c.h.b16 %v1314
        %v1418 = vunpack.c.l.b16 %v1315
        %v1419 = vunpack.c.h.b16 %v1315
        %v1420 = vunpack.c.l.b16 %v1316
        %v1421 = vunpack.c.h.b16 %v1316
        %v1422 = vunpack.c.l.b16 %v1317
        %v1423 = vunpack.c.h.b16 %v1317
        %v1424 = vunpack.c.l.b16 %v1318
        %v1425 = vunpack.c.h.b16 %v1318
        %v1426 = vunpack.c.l.b16 %v1319
        %v1427 = vunpack.c.h.b16 %v1319
        %v1428 = vunpack.c.l.b16 %v1320
        %v1429 = vunpack.c.h.b16 %v1320
        %v1430 = vunpack.c.l.b16 %v1321
        %v1431 = vunpack.c.h.b16 %v1321
        %v1432 = vunpack.c.l.b16 %v1322
        %v1433 = vunpack.c.h.b16 %v1322
        %v1434 = vunpack.c.l.b16 %v1323
        %v1435 = vunpack.c.h.b16 %v1323
        %v1436 = vunpack.c.l.b16 %v1324
        %v1437 = vunpack.c.h.b16 %v1324
        %v1438 = vunpack.c.l.b16 %v1325
        %v1439 = vunpack.c.h.b16 %v1325
        %v1440 = vunpack.c.l.b16 %v1326
        %v1441 = vunpack.c.h.b16 %v1326
        %v1442 = vunpack.c.l.b16 %v1327
        %v1443 = vunpack.c.h.b16 %v1327
        %v1444 = vunpack.c.l.b16 %v1328
        %v1445 = vunpack.c.h.b16 %v1328
        %v1446 = vunpack.c.l.b16 %v1329
        %v1447 = vunpack.c.h.b16 %v1329
        %v1448 = vunpack.c.l.b16 %v1330
        %v1449 = vunpack.c.h.b16 %v1330
        %v1450 = vunpack.c.l.b16 %v1331
        %v1451 = vunpack.c.h.b16 %v1331
        %v1452 = vpack.c.b16 %v1374, %v1372
        %v1453 = vpack.c.b16 %v1375, %v1373
        %v1454 = vpack.c.b16 %v1378, %v1376
        %v1455 = vpack.c.b16 %v1379, %v1377
        %v1456 = vpack.c.b16 %v1382, %v1380
        %v1457 = vpack.c.b16 %v1383, %v1381
        %v1458 = vpack.c.b16 %v1386, %v1384
        %v1459 = vpack.c.b16 %v1387, %v1385
        %v1460 = vpack.c.b16 %v1390, %v1388
        %v1461 = vpack.c.b16 %v1391, %v1389
        %v1462 = vpack.c.b16 %v1394, %v1392
        %v1463 = vpack.c.b16 %v1395, %v1393
        %v1464 = vpack.c.b16 %v1398, %v1396
        %v1465 = vpack.c.b16 %v1399, %v1397
        %v1466 = vpack.c.b16 %v1402, %v1400
        %v1467 = vpack.c.b16 %v1403, %v1401
        %v1468 = vpack.c.b16 %v1406, %v1404
        %v1469 = vpack.c.b16 %v1407, %v1405
        %v1470 = vpack.c.b16 %v1410, %v1408
        %v1471 = vpack.c.b16 %v1411, %v1409
        %v1472 = vpack.c.b16 %v1414, %v1412
        %v1473 = vpack.c.b16 %v1415, %v1413
        %v1474 = vpack.c.b16 %v1418, %v1416
        %v1475 = vpack.c.b16 %v1419, %v1417
        %v1476 = vpack.c.b16 %v1422, %v1420
        %v1477 = vpack.c.b16 %v1423, %v1421
        %v1478 = vpack.c.b16 %v1426, %v1424
        %v1479 = vpack.c.b16 %v1427, %v1425
        %v1480 = vpack.c.b16 %v1430, %v1428
        %v1481 = vpack.c.b16 %v1431, %v1429
        %v1482 = vpack.c.b16 %v1434, %v1432
        %v1483 = vpack.c.b16 %v1435, %v1433
        %v1484 = vpack.c.b16 %v1438, %v1436
        %v1485 = vpack.c.b16 %v1439, %v1437
        %v1486 = vpack.c.b16 %v1442, %v1440
        %v1487 = vpack.c.b16 %v1443, %v1441
        %v1488 = vpack.c.b16 %v1446, %v1444
        %v1489 = vpack.c.b16 %v1447, %v1445
        %v1490 = vpack.c.b16 %v1450, %v1448
        %v1491 = vpack.c.b16 %v1451, %v1449
        %v1533 = vsel %vm529, %v1290, 0
        %1535 = vmatprep.subr.bf16.mxu0 %v1467
        %1536 = vmatpush1.bf16.msra.mxu0 %v1466
        %1537 = vmatprep.subr.bf16.mxu0 %v1465
        %1538 = vmatpush1.bf16.msra.mxu0 %v1464
        %1539 = vmatprep.subr.bf16.mxu0 %v1463
        %1540 = vmatpush1.bf16.msra.mxu0 %v1462
        %1541 = vmatprep.subr.bf16.mxu0 %v1461
        %1542 = vmatpush1.bf16.msra.mxu0 %v1460
        %1543 = vmatprep.subr.bf16.mxu0 %v1459
        %1544 = vmatpush1.bf16.msra.mxu0 %v1458
        %1545 = vmatprep.subr.bf16.mxu0 %v1457
        %1546 = vmatpush1.bf16.msra.mxu0 %v1456
        %1547 = vmatprep.subr.bf16.mxu0 %v1455
        %1548 = vmatpush1.bf16.msra.mxu0 %v1454
        %1549 = vmatprep.subr.bf16.mxu0 %v1453
        %1550 = vmatpush1.bf16.msra.mxu0 %v1452
        %1551 = vmatprep.subr.bf16.mxu0 %v1483
        %1552 = vmatpush2.bf16.msra.mxu0 %v1482
        %1553 = vmatprep.subr.bf16.mxu0 %v1481
        %1554 = vmatpush2.bf16.msra.mxu0 %v1480
        %1555 = vmatprep.subr.bf16.mxu0 %v1479
        %1556 = vmatpush2.bf16.msra.mxu0 %v1478
        %1557 = vmatprep.subr.bf16.mxu0 %v1477
        %1558 = vmatpush2.bf16.msra.mxu0 %v1476
        %1559 = vmatprep.subr.bf16.mxu0 %v1475
        %1560 = vmatpush2.bf16.msra.mxu0 %v1474
        %1561 = vmatprep.subr.bf16.mxu0 %v1473
        %1562 = vmatpush2.bf16.msra.mxu0 %v1472
        %1563 = vmatprep.subr.bf16.mxu0 %v1471
        %1564 = vmatpush2.bf16.msra.mxu0 %v1470
        %1565 = vmatprep.subr.bf16.mxu0 %v1469
        %1566 = vmatpush2.bf16.msra.mxu0 %v1468
        %1567 = vmatprep.mubr.bf16.mxu0 %v1289
        %1568 = vmatmul.mubr.bf16.gmra.mxu0 %v1288
        %v1569 = vpop.f32.mrf.mxu0
        %v1570 = vadd.f32 0.0, %v1569
        %v1571 = vpop.f32.mrf.mxu0
        %v1572 = vadd.f32 0.0, %v1571
        %v1573 = vpop.f32.mrf.mxu0
        %v1574 = vpop.f32.mrf.mxu0
        %1575 = vdwg.mxu0
        %1576 = vmatprep.subr.bf16.mxu0 0
        %1577 = vmatpush1.bf16.msra.mxu0 0
        %1578 = vmatprep.subr.bf16.mxu0 0
        %1579 = vmatpush1.bf16.msra.mxu0 0
        %1580 = vmatprep.subr.bf16.mxu0 0
        %1581 = vmatpush1.bf16.msra.mxu0 0
        %1582 = vmatprep.subr.bf16.mxu0 0
        %1583 = vmatpush1.bf16.msra.mxu0 0
        %1584 = vmatprep.subr.bf16.mxu0 %v1491
        %1585 = vmatpush1.bf16.msra.mxu0 %v1490
        %1586 = vmatprep.subr.bf16.mxu0 %v1489
        %1587 = vmatpush1.bf16.msra.mxu0 %v1488
        %1588 = vmatprep.subr.bf16.mxu0 %v1487
        %1589 = vmatpush1.bf16.msra.mxu0 %v1486
        %1590 = vmatprep.subr.bf16.mxu0 %v1485
        %1591 = vmatpush1.bf16.msra.mxu0 %v1484
        %1592 = vmatprep.subr.bf16.mxu0 0
        %1593 = vmatpush2.bf16.msra.mxu0 0
        %1594 = vmatprep.subr.bf16.mxu0 0
        %1595 = vmatpush2.bf16.msra.mxu0 0
        %1596 = vmatprep.subr.bf16.mxu0 0
        %1597 = vmatpush2.bf16.msra.mxu0 0
        %1598 = vmatprep.subr.bf16.mxu0 0
        %1599 = vmatpush2.bf16.msra.mxu0 0
        %1600 = vmatprep.subr.bf16.mxu0 0
        %1601 = vmatpush2.bf16.msra.mxu0 0
        %1602 = vmatprep.subr.bf16.mxu0 0
        %1603 = vmatpush2.bf16.msra.mxu0 0
        %1604 = vmatprep.subr.bf16.mxu0 0
        %1605 = vmatpush2.bf16.msra.mxu0 0
        %1606 = vmatprep.subr.bf16.mxu0 0
        %1607 = vmatpush2.bf16.msra.mxu0 0
        %1608 = vmatprep.mubr.bf16.mxu0 0
        %1609 = vmatmul.mubr.bf16.gmra.mxu0 %v1533
        %v1610 = vpop.f32.mrf.mxu0
        %v1611 = vadd.f32 %v1570, %v1610
        %v1612 = vpop.f32.mrf.mxu0
        %v1613 = vadd.f32 %v1572, %v1612
        %v1614 = vpop.f32.mrf.mxu0
        %v1615 = vpop.f32.mrf.mxu0
        %1616 = vdwg.mxu0
        %v1657 = vunpack.c.l.b16 %v1162
        %v1658 = vunpack.c.h.b16 %v1162
        %v1659 = vunpack.c.l.b16 %v1163
        %v1660 = vunpack.c.h.b16 %v1163
        %v1661 = vunpack.c.l.b16 %v1164
        %v1662 = vunpack.c.h.b16 %v1164
        %v1663 = vunpack.c.l.b16 %v1165
        %v1664 = vunpack.c.h.b16 %v1165
        %v1665 = vunpack.c.l.b16 %v1166
        %v1666 = vunpack.c.h.b16 %v1166
        %v1667 = vunpack.c.l.b16 %v1167
        %v1668 = vunpack.c.h.b16 %v1167
        %v1669 = vunpack.c.l.b16 %v1168
        %v1670 = vunpack.c.h.b16 %v1168
        %v1671 = vunpack.c.l.b16 %v1169
        %v1672 = vunpack.c.h.b16 %v1169
        %v1673 = vunpack.c.l.b16 %v1170
        %v1674 = vunpack.c.h.b16 %v1170
        %v1675 = vunpack.c.l.b16 %v1171
        %v1676 = vunpack.c.h.b16 %v1171
        %v1677 = vunpack.c.l.b16 %v1172
        %v1678 = vunpack.c.h.b16 %v1172
        %v1679 = vunpack.c.l.b16 %v1173
        %v1680 = vunpack.c.h.b16 %v1173
        %v1681 = vunpack.c.l.b16 %v1174
        %v1682 = vunpack.c.h.b16 %v1174
        %v1683 = vunpack.c.l.b16 %v1175
        %v1684 = vunpack.c.h.b16 %v1175
        %v1685 = vunpack.c.l.b16 %v1176
        %v1686 = vunpack.c.h.b16 %v1176
        %v1687 = vunpack.c.l.b16 %v1177
        %v1688 = vunpack.c.h.b16 %v1177
        %v1689 = vunpack.c.l.b16 %v1178
        %v1690 = vunpack.c.h.b16 %v1178
        %v1691 = vunpack.c.l.b16 %v1179
        %v1692 = vunpack.c.h.b16 %v1179
        %v1693 = vunpack.c.l.b16 %v1180
        %v1694 = vunpack.c.h.b16 %v1180
        %v1695 = vunpack.c.l.b16 %v1181
        %v1696 = vunpack.c.h.b16 %v1181
        %v1697 = vunpack.c.l.b16 %v1182
        %v1698 = vunpack.c.h.b16 %v1182
        %v1699 = vunpack.c.l.b16 %v1183
        %v1700 = vunpack.c.h.b16 %v1183
        %v1701 = vunpack.c.l.b16 %v1184
        %v1702 = vunpack.c.h.b16 %v1184
        %v1703 = vunpack.c.l.b16 %v1185
        %v1704 = vunpack.c.h.b16 %v1185
        %v1705 = vunpack.c.l.b16 %v1186
        %v1706 = vunpack.c.h.b16 %v1186
        %v1707 = vunpack.c.l.b16 %v1187
        %v1708 = vunpack.c.h.b16 %v1187
        %v1709 = vunpack.c.l.b16 %v1188
        %v1710 = vunpack.c.h.b16 %v1188
        %v1711 = vunpack.c.l.b16 %v1189
        %v1712 = vunpack.c.h.b16 %v1189
        %v1713 = vunpack.c.l.b16 %v1190
        %v1714 = vunpack.c.h.b16 %v1190
        %v1715 = vunpack.c.l.b16 %v1191
        %v1716 = vunpack.c.h.b16 %v1191
        %v1717 = vunpack.c.l.b16 %v1192
        %v1718 = vunpack.c.h.b16 %v1192
        %v1719 = vunpack.c.l.b16 %v1193
        %v1720 = vunpack.c.h.b16 %v1193
        %v1721 = vunpack.c.l.b16 %v1194
        %v1722 = vunpack.c.h.b16 %v1194
        %v1723 = vunpack.c.l.b16 %v1195
        %v1724 = vunpack.c.h.b16 %v1195
        %v1725 = vunpack.c.l.b16 %v1196
        %v1726 = vunpack.c.h.b16 %v1196
        %v1727 = vunpack.c.l.b16 %v1197
        %v1728 = vunpack.c.h.b16 %v1197
        %v1729 = vunpack.c.l.b16 %v1198
        %v1730 = vunpack.c.h.b16 %v1198
        %v1731 = vunpack.c.l.b16 %v1199
        %v1732 = vunpack.c.h.b16 %v1199
        %v1733 = vunpack.c.l.b16 %v1200
        %v1734 = vunpack.c.h.b16 %v1200
        %v1735 = vunpack.c.l.b16 %v1201
        %v1736 = vunpack.c.h.b16 %v1201
        %v1737 = vpack.c.b16 %v1659, %v1657
        %v1738 = vpack.c.b16 %v1660, %v1658
        %v1739 = vpack.c.b16 %v1663, %v1661
        %v1740 = vpack.c.b16 %v1664, %v1662
        %v1741 = vpack.c.b16 %v1667, %v1665
        %v1742 = vpack.c.b16 %v1668, %v1666
        %v1743 = vpack.c.b16 %v1671, %v1669
        %v1744 = vpack.c.b16 %v1672, %v1670
        %v1745 = vpack.c.b16 %v1675, %v1673
        %v1746 = vpack.c.b16 %v1676, %v1674
        %v1747 = vpack.c.b16 %v1679, %v1677
        %v1748 = vpack.c.b16 %v1680, %v1678
        %v1749 = vpack.c.b16 %v1683, %v1681
        %v1750 = vpack.c.b16 %v1684, %v1682
        %v1751 = vpack.c.b16 %v1687, %v1685
        %v1752 = vpack.c.b16 %v1688, %v1686
        %v1753 = vpack.c.b16 %v1691, %v1689
        %v1754 = vpack.c.b16 %v1692, %v1690
        %v1755 = vpack.c.b16 %v1695, %v1693
        %v1756 = vpack.c.b16 %v1696, %v1694
        %v1757 = vpack.c.b16 %v1699, %v1697
        %v1758 = vpack.c.b16 %v1700, %v1698
        %v1759 = vpack.c.b16 %v1703, %v1701
        %v1760 = vpack.c.b16 %v1704, %v1702
        %v1761 = vpack.c.b16 %v1707, %v1705
        %v1762 = vpack.c.b16 %v1708, %v1706
        %v1763 = vpack.c.b16 %v1711, %v1709
        %v1764 = vpack.c.b16 %v1712, %v1710
        %v1765 = vpack.c.b16 %v1715, %v1713
        %v1766 = vpack.c.b16 %v1716, %v1714
        %v1767 = vpack.c.b16 %v1719, %v1717
        %v1768 = vpack.c.b16 %v1720, %v1718
        %v1769 = vpack.c.b16 %v1723, %v1721
        %v1770 = vpack.c.b16 %v1724, %v1722
        %v1771 = vpack.c.b16 %v1727, %v1725
        %v1772 = vpack.c.b16 %v1728, %v1726
        %v1773 = vpack.c.b16 %v1731, %v1729
        %v1774 = vpack.c.b16 %v1732, %v1730
        %v1775 = vpack.c.b16 %v1735, %v1733
        %v1776 = vpack.c.b16 %v1736, %v1734
        %v1818 = vsel %vm529, %v1161, 0
        %1820 = vmatprep.subr.bf16.mxu0 %v1752
        %1821 = vmatpush1.bf16.msra.mxu0 %v1751
        %1822 = vmatprep.subr.bf16.mxu0 %v1750
        %1823 = vmatpush1.bf16.msra.mxu0 %v1749
        %1824 = vmatprep.subr.bf16.mxu0 %v1748
        %1825 = vmatpush1.bf16.msra.mxu0 %v1747
        %1826 = vmatprep.subr.bf16.mxu0 %v1746
        %1827 = vmatpush1.bf16.msra.mxu0 %v1745
        %1828 = vmatprep.subr.bf16.mxu0 %v1744
        %1829 = vmatpush1.bf16.msra.mxu0 %v1743
        %1830 = vmatprep.subr.bf16.mxu0 %v1742
        %1831 = vmatpush1.bf16.msra.mxu0 %v1741
        %1832 = vmatprep.subr.bf16.mxu0 %v1740
        %1833 = vmatpush1.bf16.msra.mxu0 %v1739
        %1834 = vmatprep.subr.bf16.mxu0 %v1738
        %1835 = vmatpush1.bf16.msra.mxu0 %v1737
        %1836 = vmatprep.subr.bf16.mxu0 %v1768
        %1837 = vmatpush2.bf16.msra.mxu0 %v1767
        %1838 = vmatprep.subr.bf16.mxu0 %v1766
        %1839 = vmatpush2.bf16.msra.mxu0 %v1765
        %1840 = vmatprep.subr.bf16.mxu0 %v1764
        %1841 = vmatpush2.bf16.msra.mxu0 %v1763
        %1842 = vmatprep.subr.bf16.mxu0 %v1762
        %1843 = vmatpush2.bf16.msra.mxu0 %v1761
        %1844 = vmatprep.subr.bf16.mxu0 %v1760
        %1845 = vmatpush2.bf16.msra.mxu0 %v1759
        %1846 = vmatprep.subr.bf16.mxu0 %v1758
        %1847 = vmatpush2.bf16.msra.mxu0 %v1757
        %1848 = vmatprep.subr.bf16.mxu0 %v1756
        %1849 = vmatpush2.bf16.msra.mxu0 %v1755
        %1850 = vmatprep.subr.bf16.mxu0 %v1754
        %1851 = vmatpush2.bf16.msra.mxu0 %v1753
        %1852 = vmatprep.mubr.bf16.mxu0 %v1160
        %1853 = vmatmul.mubr.bf16.gmra.mxu0 %v1159
        %v1854 = vpop.f32.mrf.mxu0
        %v1855 = vadd.f32 %v1611, %v1854
        %v1856 = vpop.f32.mrf.mxu0
        %v1857 = vadd.f32 %v1613, %v1856
        %v1858 = vpop.f32.mrf.mxu0
        %v1859 = vpop.f32.mrf.mxu0
        %1860 = vdwg.mxu0
        %1861 = vmatprep.subr.bf16.mxu0 0
        %1862 = vmatpush1.bf16.msra.mxu0 0
        %1863 = vmatprep.subr.bf16.mxu0 0
        %1864 = vmatpush1.bf16.msra.mxu0 0
        %1865 = vmatprep.subr.bf16.mxu0 0
        %1866 = vmatpush1.bf16.msra.mxu0 0
        %1867 = vmatprep.subr.bf16.mxu0 0
        %1868 = vmatpush1.bf16.msra.mxu0 0
        %1869 = vmatprep.subr.bf16.mxu0 %v1776
        %1870 = vmatpush1.bf16.msra.mxu0 %v1775
        %1871 = vmatprep.subr.bf16.mxu0 %v1774
        %1872 = vmatpush1.bf16.msra.mxu0 %v1773
        %1873 = vmatprep.subr.bf16.mxu0 %v1772
        %1874 = vmatpush1.bf16.msra.mxu0 %v1771
        %1875 = vmatprep.subr.bf16.mxu0 %v1770
        %1876 = vmatpush1.bf16.msra.mxu0 %v1769
        %1877 = vmatprep.subr.bf16.mxu0 0
        %1878 = vmatpush2.bf16.msra.mxu0 0
        %1879 = vmatprep.subr.bf16.mxu0 0
        %1880 = vmatpush2.bf16.msra.mxu0 0
        %1881 = vmatprep.subr.bf16.mxu0 0
        %1882 = vmatpush2.bf16.msra.mxu0 0
        %1883 = vmatprep.subr.bf16.mxu0 0
        %1884 = vmatpush2.bf16.msra.mxu0 0
        %1885 = vmatprep.subr.bf16.mxu0 0
        %1886 = vmatpush2.bf16.msra.mxu0 0
        %1887 = vmatprep.subr.bf16.mxu0 0
        %1888 = vmatpush2.bf16.msra.mxu0 0
        %1889 = vmatprep.subr.bf16.mxu0 0
        %1890 = vmatpush2.bf16.msra.mxu0 0
        %1891 = vmatprep.subr.bf16.mxu0 0
        %1892 = vmatpush2.bf16.msra.mxu0 0
        %1893 = vmatprep.mubr.bf16.mxu0 0
        %1894 = vmatmul.mubr.bf16.gmra.mxu0 %v1818
        %v1895 = vpop.f32.mrf.mxu0
        %v1896 = vadd.f32 %v1855, %v1895
        %v1897 = vpop.f32.mrf.mxu0
        %v1898 = vadd.f32 %v1857, %v1897
        %v1899 = vpop.f32.mrf.mxu0
        %v1900 = vpop.f32.mrf.mxu0
        %1901 = vdwg.mxu0
        %s1902 = scalar_lea.vmem %s4, 8
        %v1903 = vld [vmem:[%s1902] sm:$0xf]
        %v1905 = vsel %vm1065, %v1903, 0
        %1907 = vmatprep.subr.bf16.mxu0 0
        %1908 = vmatpush1.bf16.msra.mxu0 0
        %1909 = vmatprep.subr.bf16.mxu0 0
        %1910 = vmatpush1.bf16.msra.mxu0 0
        %1911 = vmatprep.subr.bf16.mxu0 0
        %1912 = vmatpush1.bf16.msra.mxu0 0
        %1913 = vmatprep.subr.bf16.mxu0 0
        %1914 = vmatpush1.bf16.msra.mxu0 0
        %1915 = vmatprep.subr.bf16.mxu0 0
        %1916 = vmatpush1.bf16.msra.mxu0 0
        %1917 = vmatprep.subr.bf16.mxu0 0
        %1918 = vmatpush1.bf16.msra.mxu0 0
        %1919 = vmatprep.subr.bf16.mxu0 %v1073
        %1920 = vmatpush1.bf16.msra.mxu0 %v1070
        %1921 = vmatprep.subr.bf16.mxu0 %v1059
        %1922 = vmatpush1.bf16.msra.mxu0 %v1058
        %1923 = vmatprep.subr.bf16.mxu0 0
        %1924 = vmatpush2.bf16.msra.mxu0 0
        %1925 = vmatprep.subr.bf16.mxu0 0
        %1926 = vmatpush2.bf16.msra.mxu0 0
        %1927 = vmatprep.subr.bf16.mxu0 0
        %1928 = vmatpush2.bf16.msra.mxu0 0
        %1929 = vmatprep.subr.bf16.mxu0 0
        %1930 = vmatpush2.bf16.msra.mxu0 0
        %1931 = vmatprep.subr.bf16.mxu0 0
        %1932 = vmatpush2.bf16.msra.mxu0 0
        %1933 = vmatprep.subr.bf16.mxu0 0
        %1934 = vmatpush2.bf16.msra.mxu0 0
        %1935 = vmatprep.subr.bf16.mxu0 0
        %1936 = vmatpush2.bf16.msra.mxu0 0
        %1937 = vmatprep.subr.bf16.mxu0 0
        %1938 = vmatpush2.bf16.msra.mxu0 0
        %1939 = vmatprep.mubr.bf16.mxu0 0
        %1940 = vmatmul.mubr.bf16.gmra.mxu0 %v1905
        %v1941 = vpop.f32.mrf.mxu0
        %v1942 = vadd.f32 0.0, %v1941
        %v1943 = vpop.f32.mrf.mxu0
        %v1944 = vadd.f32 0.0, %v1943
        %v1945 = vpop.f32.mrf.mxu0
        %v1946 = vpop.f32.mrf.mxu0
        %1947 = vdwg.mxu0
        %1948 = vmatprep.subr.bf16.mxu0 0
        %1949 = vmatpush1.bf16.msra.mxu0 0
        %1950 = vmatprep.subr.bf16.mxu0 0
        %1951 = vmatpush1.bf16.msra.mxu0 0
        %1952 = vmatprep.subr.bf16.mxu0 0
        %1953 = vmatpush1.bf16.msra.mxu0 0
        %1954 = vmatprep.subr.bf16.mxu0 0
        %1955 = vmatpush1.bf16.msra.mxu0 0
        %1956 = vmatprep.subr.bf16.mxu0 0
        %1957 = vmatpush1.bf16.msra.mxu0 0
        %1958 = vmatprep.subr.bf16.mxu0 0
        %1959 = vmatpush1.bf16.msra.mxu0 0
        %1960 = vmatprep.subr.bf16.mxu0 0
        %1961 = vmatpush1.bf16.msra.mxu0 %v1076
        %1962 = vmatprep.subr.bf16.mxu0 0
        %1963 = vmatpush1.bf16.msra.mxu0 %v1060
        %1964 = vmatprep.subr.bf16.mxu0 0
        %1965 = vmatpush2.bf16.msra.mxu0 0
        %1966 = vmatprep.subr.bf16.mxu0 0
        %1967 = vmatpush2.bf16.msra.mxu0 0
        %1968 = vmatprep.subr.bf16.mxu0 0
        %1969 = vmatpush2.bf16.msra.mxu0 0
        %1970 = vmatprep.subr.bf16.mxu0 0
        %1971 = vmatpush2.bf16.msra.mxu0 0
        %1972 = vmatprep.subr.bf16.mxu0 0
        %1973 = vmatpush2.bf16.msra.mxu0 0
        %1974 = vmatprep.subr.bf16.mxu0 0
        %1975 = vmatpush2.bf16.msra.mxu0 0
        %1976 = vmatprep.subr.bf16.mxu0 0
        %1977 = vmatpush2.bf16.msra.mxu0 0
        %1978 = vmatprep.subr.bf16.mxu0 0
        %1979 = vmatpush2.bf16.msra.mxu0 0
        %1980 = vmatprep.mubr.bf16.mxu0 0
        %1981 = vmatmul.mubr.bf16.gmra.mxu0 %v1905
        %v1982 = vpop.f32.mrf.mxu0
        %v1983 = vadd.f32 0.0, %v1982
        %v1984 = vpop.f32.mrf.mxu0
        %v1985 = vpop.f32.mrf.mxu0
        %v1986 = vpop.f32.mrf.mxu0
        %1987 = vdwg.mxu0
        %v1988 = vpack.c.bf16 %v1942, %v1942
        %v1989 = vpack.c.bf16 %v1944, %v1944
        %v1990 = vpack.c.bf16 %v1983, %v1983
        %s1991 = scalar_lea.vmem [#allocation2], 640
        %v1992 = vld [vmem:[%s1991] sm:$0xff]
        %v1993 = vld [vmem:[%s1991 + $0x8] sm:$0xff]
        %v1994 = vld [vmem:[%s1991 + $0x10] sm:$0xff]
        %v1995 = vld [vmem:[%s1991 + $0x18] sm:$0xff]
        %v1996 = vld [vmem:[%s1991 + $0x20] sm:$0xff]
        %v1997 = vld [vmem:[%s1991 + $0x28] sm:$0xff]
        %v1998 = vld [vmem:[%s1991 + $0x30] sm:$0xff]
        %v1999 = vld [vmem:[%s1991 + $0x38] sm:$0xff]
        %v2000 = vld [vmem:[%s1991 + $0x40] sm:$0xff]
        %v2001 = vld [vmem:[%s1991 + $0x48] sm:$0xff]
        %v2002 = vld [vmem:[%s1991 + $0x50] sm:$0xff]
        %v2003 = vld [vmem:[%s1991 + $0x58] sm:$0xff]
        %v2004 = vld [vmem:[%s1991 + $0x60] sm:$0xff]
        %v2005 = vld [vmem:[%s1991 + $0x68] sm:$0xff]
        %v2006 = vld [vmem:[%s1991 + $0x70] sm:$0xff]
        %v2007 = vld [vmem:[%s1991 + $0x78] sm:$0xff]
        %v2008 = vld [vmem:[%s1991 + $0x80] sm:$0xff]
        %v2009 = vld [vmem:[%s1991 + $0x88] sm:$0xff]
        %v2010 = vld [vmem:[%s1991 + $0x90] sm:$0xff]
        %v2011 = vld [vmem:[%s1991 + $0x98] sm:$0xff]
        %v2012 = vld [vmem:[%s1991 + $0xa0] sm:$0xff]
        %v2013 = vld [vmem:[%s1991 + $0xa8] sm:$0xff]
        %v2014 = vld [vmem:[%s1991 + $0xb0] sm:$0xff]
        %v2015 = vld [vmem:[%s1991 + $0xb8] sm:$0xff]
        %v2016 = vld [vmem:[%s1991 + $0xc0] sm:$0xff]
        %v2017 = vld [vmem:[%s1991 + $0xc8] sm:$0xff]
        %v2018 = vld [vmem:[%s1991 + $0xd0] sm:$0xff]
        %v2019 = vld [vmem:[%s1991 + $0xd8] sm:$0xff]
        %v2020 = vld [vmem:[%s1991 + $0xe0] sm:$0xff]
        %v2021 = vld [vmem:[%s1991 + $0xe8] sm:$0xff]
        %v2022 = vld [vmem:[%s1991 + $0xf0] sm:$0xff]
        %v2023 = vld [vmem:[%s1991 + $0xf8] sm:$0xff]
        %v2024 = vld [vmem:[%s1991 + $0x100] sm:$0xff]
        %v2025 = vld [vmem:[%s1991 + $0x108] sm:$0xff]
        %v2026 = vld [vmem:[%s1991 + $0x110] sm:$0xff]
        %v2027 = vld [vmem:[%s1991 + $0x118] sm:$0xff]
        %v2028 = vld [vmem:[%s1991 + $0x120] sm:$0xff]
        %v2029 = vld [vmem:[%s1991 + $0x128] sm:$0xff]
        %v2030 = vld [vmem:[%s1991 + $0x130] sm:$0xff]
        %v2031 = vld [vmem:[%s1991 + $0x138] sm:$0xff]
        %v2072 = vunpack.c.l.b16 %v1992
        %v2073 = vunpack.c.h.b16 %v1992
        %v2074 = vunpack.c.l.b16 %v1993
        %v2075 = vunpack.c.h.b16 %v1993
        %v2076 = vunpack.c.l.b16 %v1994
        %v2077 = vunpack.c.h.b16 %v1994
        %v2078 = vunpack.c.l.b16 %v1995
        %v2079 = vunpack.c.h.b16 %v1995
        %v2080 = vunpack.c.l.b16 %v1996
        %v2081 = vunpack.c.h.b16 %v1996
        %v2082 = vunpack.c.l.b16 %v1997
        %v2083 = vunpack.c.h.b16 %v1997
        %v2084 = vunpack.c.l.b16 %v1998
        %v2085 = vunpack.c.h.b16 %v1998
        %v2086 = vunpack.c.l.b16 %v1999
        %v2087 = vunpack.c.h.b16 %v1999
        %v2088 = vunpack.c.l.b16 %v2000
        %v2089 = vunpack.c.h.b16 %v2000
        %v2090 = vunpack.c.l.b16 %v2001
        %v2091 = vunpack.c.h.b16 %v2001
        %v2092 = vunpack.c.l.b16 %v2002
        %v2093 = vunpack.c.h.b16 %v2002
        %v2094 = vunpack.c.l.b16 %v2003
        %v2095 = vunpack.c.h.b16 %v2003
        %v2096 = vunpack.c.l.b16 %v2004
        %v2097 = vunpack.c.h.b16 %v2004
        %v2098 = vunpack.c.l.b16 %v2005
        %v2099 = vunpack.c.h.b16 %v2005
        %v2100 = vunpack.c.l.b16 %v2006
        %v2101 = vunpack.c.h.b16 %v2006
        %v2102 = vunpack.c.l.b16 %v2007
        %v2103 = vunpack.c.h.b16 %v2007
        %v2104 = vunpack.c.l.b16 %v2008
        %v2105 = vunpack.c.h.b16 %v2008
        %v2106 = vunpack.c.l.b16 %v2009
        %v2107 = vunpack.c.h.b16 %v2009
        %v2108 = vunpack.c.l.b16 %v2010
        %v2109 = vunpack.c.h.b16 %v2010
        %v2110 = vunpack.c.l.b16 %v2011
        %v2111 = vunpack.c.h.b16 %v2011
        %v2112 = vunpack.c.l.b16 %v2012
        %v2113 = vunpack.c.h.b16 %v2012
        %v2114 = vunpack.c.l.b16 %v2013
        %v2115 = vunpack.c.h.b16 %v2013
        %v2116 = vunpack.c.l.b16 %v2014
        %v2117 = vunpack.c.h.b16 %v2014
        %v2118 = vunpack.c.l.b16 %v2015
        %v2119 = vunpack.c.h.b16 %v2015
        %v2120 = vunpack.c.l.b16 %v2016
        %v2121 = vunpack.c.h.b16 %v2016
        %v2122 = vunpack.c.l.b16 %v2017
        %v2123 = vunpack.c.h.b16 %v2017
        %v2124 = vunpack.c.l.b16 %v2018
        %v2125 = vunpack.c.h.b16 %v2018
        %v2126 = vunpack.c.l.b16 %v2019
        %v2127 = vunpack.c.h.b16 %v2019
        %v2128 = vunpack.c.l.b16 %v2020
        %v2129 = vunpack.c.h.b16 %v2020
        %v2130 = vunpack.c.l.b16 %v2021
        %v2131 = vunpack.c.h.b16 %v2021
        %v2132 = vunpack.c.l.b16 %v2022
        %v2133 = vunpack.c.h.b16 %v2022
        %v2134 = vunpack.c.l.b16 %v2023
        %v2135 = vunpack.c.h.b16 %v2023
        %v2136 = vunpack.c.l.b16 %v2024
        %v2137 = vunpack.c.h.b16 %v2024
        %v2138 = vunpack.c.l.b16 %v2025
        %v2139 = vunpack.c.h.b16 %v2025
        %v2140 = vunpack.c.l.b16 %v2026
        %v2141 = vunpack.c.h.b16 %v2026
        %v2142 = vunpack.c.l.b16 %v2027
        %v2143 = vunpack.c.h.b16 %v2027
        %v2144 = vunpack.c.l.b16 %v2028
        %v2145 = vunpack.c.h.b16 %v2028
        %v2146 = vunpack.c.l.b16 %v2029
        %v2147 = vunpack.c.h.b16 %v2029
        %v2148 = vunpack.c.l.b16 %v2030
        %v2149 = vunpack.c.h.b16 %v2030
        %v2150 = vunpack.c.l.b16 %v2031
        %v2151 = vunpack.c.h.b16 %v2031
        %v2152 = vpack.c.b16 %v2074, %v2072
        %v2153 = vpack.c.b16 %v2075, %v2073
        %v2154 = vpack.c.b16 %v2078, %v2076
        %v2155 = vpack.c.b16 %v2079, %v2077
        %v2156 = vpack.c.b16 %v2082, %v2080
        %v2157 = vpack.c.b16 %v2083, %v2081
        %v2158 = vpack.c.b16 %v2086, %v2084
        %v2159 = vpack.c.b16 %v2087, %v2085
        %v2160 = vpack.c.b16 %v2090, %v2088
        %v2161 = vpack.c.b16 %v2091, %v2089
        %v2162 = vpack.c.b16 %v2094, %v2092
        %v2163 = vpack.c.b16 %v2095, %v2093
        %v2164 = vpack.c.b16 %v2098, %v2096
        %v2165 = vpack.c.b16 %v2099, %v2097
        %v2166 = vpack.c.b16 %v2102, %v2100
        %v2167 = vpack.c.b16 %v2103, %v2101
        %v2168 = vpack.c.b16 %v2106, %v2104
        %v2169 = vpack.c.b16 %v2107, %v2105
        %v2170 = vpack.c.b16 %v2110, %v2108
        %v2171 = vpack.c.b16 %v2111, %v2109
        %v2172 = vpack.c.b16 %v2114, %v2112
        %v2173 = vpack.c.b16 %v2115, %v2113
        %v2174 = vpack.c.b16 %v2118, %v2116
        %v2175 = vpack.c.b16 %v2119, %v2117
        %v2176 = vpack.c.b16 %v2122, %v2120
        %v2177 = vpack.c.b16 %v2123, %v2121
        %v2178 = vpack.c.b16 %v2126, %v2124
        %v2179 = vpack.c.b16 %v2127, %v2125
        %v2180 = vpack.c.b16 %v2130, %v2128
        %v2181 = vpack.c.b16 %v2131, %v2129
        %v2182 = vpack.c.b16 %v2134, %v2132
        %v2183 = vpack.c.b16 %v2135, %v2133
        %v2184 = vpack.c.b16 %v2138, %v2136
        %v2185 = vpack.c.b16 %v2139, %v2137
        %v2186 = vpack.c.b16 %v2142, %v2140
        %v2187 = vpack.c.b16 %v2143, %v2141
        %v2188 = vpack.c.b16 %v2146, %v2144
        %v2189 = vpack.c.b16 %v2147, %v2145
        %v2190 = vpack.c.b16 %v2150, %v2148
        %v2191 = vpack.c.b16 %v2151, %v2149
        %v2233 = vsel %vm529, %v1990, 0
        %2235 = vmatprep.subr.bf16.mxu0 %v2167
        %2236 = vmatpush1.bf16.msra.mxu0 %v2166
        %2237 = vmatprep.subr.bf16.mxu0 %v2165
        %2238 = vmatpush1.bf16.msra.mxu0 %v2164
        %2239 = vmatprep.subr.bf16.mxu0 %v2163
        %2240 = vmatpush1.bf16.msra.mxu0 %v2162
        %2241 = vmatprep.subr.bf16.mxu0 %v2161
        %2242 = vmatpush1.bf16.msra.mxu0 %v2160
        %2243 = vmatprep.subr.bf16.mxu0 %v2159
        %2244 = vmatpush1.bf16.msra.mxu0 %v2158
        %2245 = vmatprep.subr.bf16.mxu0 %v2157
        %2246 = vmatpush1.bf16.msra.mxu0 %v2156
        %2247 = vmatprep.subr.bf16.mxu0 %v2155
        %2248 = vmatpush1.bf16.msra.mxu0 %v2154
        %2249 = vmatprep.subr.bf16.mxu0 %v2153
        %2250 = vmatpush1.bf16.msra.mxu0 %v2152
        %2251 = vmatprep.subr.bf16.mxu0 %v2183
        %2252 = vmatpush2.bf16.msra.mxu0 %v2182
        %2253 = vmatprep.subr.bf16.mxu0 %v2181
        %2254 = vmatpush2.bf16.msra.mxu0 %v2180
        %2255 = vmatprep.subr.bf16.mxu0 %v2179
        %2256 = vmatpush2.bf16.msra.mxu0 %v2178
        %2257 = vmatprep.subr.bf16.mxu0 %v2177
        %2258 = vmatpush2.bf16.msra.mxu0 %v2176
        %2259 = vmatprep.subr.bf16.mxu0 %v2175
        %2260 = vmatpush2.bf16.msra.mxu0 %v2174
        %2261 = vmatprep.subr.bf16.mxu0 %v2173
        %2262 = vmatpush2.bf16.msra.mxu0 %v2172
        %2263 = vmatprep.subr.bf16.mxu0 %v2171
        %2264 = vmatpush2.bf16.msra.mxu0 %v2170
        %2265 = vmatprep.subr.bf16.mxu0 %v2169
        %2266 = vmatpush2.bf16.msra.mxu0 %v2168
        %2267 = vmatprep.mubr.bf16.mxu0 %v1989
        %2268 = vmatmul.mubr.bf16.gmra.mxu0 %v1988
        %v2269 = vpop.f32.mrf.mxu0
        %v2270 = vadd.f32 0.0, %v2269
        %v2271 = vpop.f32.mrf.mxu0
        %v2272 = vadd.f32 0.0, %v2271
        %v2273 = vpop.f32.mrf.mxu0
        %v2274 = vpop.f32.mrf.mxu0
        %2275 = vdwg.mxu0
        %2276 = vmatprep.subr.bf16.mxu0 0
        %2277 = vmatpush1.bf16.msra.mxu0 0
        %2278 = vmatprep.subr.bf16.mxu0 0
        %2279 = vmatpush1.bf16.msra.mxu0 0
        %2280 = vmatprep.subr.bf16.mxu0 0
        %2281 = vmatpush1.bf16.msra.mxu0 0
        %2282 = vmatprep.subr.bf16.mxu0 0
        %2283 = vmatpush1.bf16.msra.mxu0 0
        %2284 = vmatprep.subr.bf16.mxu0 %v2191
        %2285 = vmatpush1.bf16.msra.mxu0 %v2190
        %2286 = vmatprep.subr.bf16.mxu0 %v2189
        %2287 = vmatpush1.bf16.msra.mxu0 %v2188
        %2288 = vmatprep.subr.bf16.mxu0 %v2187
        %2289 = vmatpush1.bf16.msra.mxu0 %v2186
        %2290 = vmatprep.subr.bf16.mxu0 %v2185
        %2291 = vmatpush1.bf16.msra.mxu0 %v2184
        %2292 = vmatprep.subr.bf16.mxu0 0
        %2293 = vmatpush2.bf16.msra.mxu0 0
        %2294 = vmatprep.subr.bf16.mxu0 0
        %2295 = vmatpush2.bf16.msra.mxu0 0
        %2296 = vmatprep.subr.bf16.mxu0 0
        %2297 = vmatpush2.bf16.msra.mxu0 0
        %2298 = vmatprep.subr.bf16.mxu0 0
        %2299 = vmatpush2.bf16.msra.mxu0 0
        %2300 = vmatprep.subr.bf16.mxu0 0
        %2301 = vmatpush2.bf16.msra.mxu0 0
        %2302 = vmatprep.subr.bf16.mxu0 0
        %2303 = vmatpush2.bf16.msra.mxu0 0
        %2304 = vmatprep.subr.bf16.mxu0 0
        %2305 = vmatpush2.bf16.msra.mxu0 0
        %2306 = vmatprep.subr.bf16.mxu0 0
        %2307 = vmatpush2.bf16.msra.mxu0 0
        %2308 = vmatprep.mubr.bf16.mxu0 0
        %2309 = vmatmul.mubr.bf16.gmra.mxu0 %v2233
        %v2310 = vpop.f32.mrf.mxu0
        %v2311 = vadd.f32 %v2270, %v2310
        %v2312 = vpop.f32.mrf.mxu0
        %v2313 = vadd.f32 %v2272, %v2312
        %v2314 = vpop.f32.mrf.mxu0
        %v2315 = vpop.f32.mrf.mxu0
        %2316 = vdwg.mxu0
        %v2317 = vadd.f32 %v1896, %v2311
        %v2318 = vadd.f32 %v1898, %v2313
        %s2319 = scalar_lea.vmem %s4, 12
        %v2320 = vld [vmem:[%s2319] sm:$0xf]
        %v2322 = vsel %vm1065, %v2320, 0
        %2324 = vmatprep.subr.bf16.mxu0 0
        %2325 = vmatpush1.bf16.msra.mxu0 0
        %2326 = vmatprep.subr.bf16.mxu0 0
        %2327 = vmatpush1.bf16.msra.mxu0 0
        %2328 = vmatprep.subr.bf16.mxu0 0
        %2329 = vmatpush1.bf16.msra.mxu0 0
        %2330 = vmatprep.subr.bf16.mxu0 0
        %2331 = vmatpush1.bf16.msra.mxu0 0
        %2332 = vmatprep.subr.bf16.mxu0 0
        %2333 = vmatpush1.bf16.msra.mxu0 0
        %2334 = vmatprep.subr.bf16.mxu0 0
        %2335 = vmatpush1.bf16.msra.mxu0 0
        %2336 = vmatprep.subr.bf16.mxu0 %v1073
        %2337 = vmatpush1.bf16.msra.mxu0 %v1070
        %2338 = vmatprep.subr.bf16.mxu0 %v1059
        %2339 = vmatpush1.bf16.msra.mxu0 %v1058
        %2340 = vmatprep.subr.bf16.mxu0 0
        %2341 = vmatpush2.bf16.msra.mxu0 0
        %2342 = vmatprep.subr.bf16.mxu0 0
        %2343 = vmatpush2.bf16.msra.mxu0 0
        %2344 = vmatprep.subr.bf16.mxu0 0
        %2345 = vmatpush2.bf16.msra.mxu0 0
        %2346 = vmatprep.subr.bf16.mxu0 0
        %2347 = vmatpush2.bf16.msra.mxu0 0
        %2348 = vmatprep.subr.bf16.mxu0 0
        %2349 = vmatpush2.bf16.msra.mxu0 0
        %2350 = vmatprep.subr.bf16.mxu0 0
        %2351 = vmatpush2.bf16.msra.mxu0 0
        %2352 = vmatprep.subr.bf16.mxu0 0
        %2353 = vmatpush2.bf16.msra.mxu0 0
        %2354 = vmatprep.subr.bf16.mxu0 0
        %2355 = vmatpush2.bf16.msra.mxu0 0
        %2356 = vmatprep.mubr.bf16.mxu0 0
        %2357 = vmatmul.mubr.bf16.gmra.mxu0 %v2322
        %v2358 = vpop.f32.mrf.mxu0
        %v2359 = vadd.f32 0.0, %v2358
        %v2360 = vpop.f32.mrf.mxu0
        %v2361 = vadd.f32 0.0, %v2360
        %v2362 = vpop.f32.mrf.mxu0
        %v2363 = vpop.f32.mrf.mxu0
        %2364 = vdwg.mxu0
        %2365 = vmatprep.subr.bf16.mxu0 0
        %2366 = vmatpush1.bf16.msra.mxu0 0
        %2367 = vmatprep.subr.bf16.mxu0 0
        %2368 = vmatpush1.bf16.msra.mxu0 0
        %2369 = vmatprep.subr.bf16.mxu0 0
        %2370 = vmatpush1.bf16.msra.mxu0 0
        %2371 = vmatprep.subr.bf16.mxu0 0
        %2372 = vmatpush1.bf16.msra.mxu0 0
        %2373 = vmatprep.subr.bf16.mxu0 0
        %2374 = vmatpush1.bf16.msra.mxu0 0
        %2375 = vmatprep.subr.bf16.mxu0 0
        %2376 = vmatpush1.bf16.msra.mxu0 0
        %2377 = vmatprep.subr.bf16.mxu0 0
        %2378 = vmatpush1.bf16.msra.mxu0 %v1076
        %2379 = vmatprep.subr.bf16.mxu0 0
        %2380 = vmatpush1.bf16.msra.mxu0 %v1060
        %2381 = vmatprep.subr.bf16.mxu0 0
        %2382 = vmatpush2.bf16.msra.mxu0 0
        %2383 = vmatprep.subr.bf16.mxu0 0
        %2384 = vmatpush2.bf16.msra.mxu0 0
        %2385 = vmatprep.subr.bf16.mxu0 0
        %2386 = vmatpush2.bf16.msra.mxu0 0
        %2387 = vmatprep.subr.bf16.mxu0 0
        %2388 = vmatpush2.bf16.msra.mxu0 0
        %2389 = vmatprep.subr.bf16.mxu0 0
        %2390 = vmatpush2.bf16.msra.mxu0 0
        %2391 = vmatprep.subr.bf16.mxu0 0
        %2392 = vmatpush2.bf16.msra.mxu0 0
        %2393 = vmatprep.subr.bf16.mxu0 0
        %2394 = vmatpush2.bf16.msra.mxu0 0
        %2395 = vmatprep.subr.bf16.mxu0 0
        %2396 = vmatpush2.bf16.msra.mxu0 0
        %2397 = vmatprep.mubr.bf16.mxu0 0
        %2398 = vmatmul.mubr.bf16.gmra.mxu0 %v2322
        %v2399 = vpop.f32.mrf.mxu0
        %v2400 = vadd.f32 0.0, %v2399
        %v2401 = vpop.f32.mrf.mxu0
        %v2402 = vpop.f32.mrf.mxu0
        %v2403 = vpop.f32.mrf.mxu0
        %2404 = vdwg.mxu0
        %v2405 = vpack.c.bf16 %v2359, %v2359
        %v2406 = vpack.c.bf16 %v2361, %v2361
        %v2407 = vpack.c.bf16 %v2400, %v2400
        %s2408 = scalar_lea.vmem [#allocation2], 960
        %v2409 = vld [vmem:[%s2408] sm:$0xff]
        %v2410 = vld [vmem:[%s2408 + $0x8] sm:$0xff]
        %v2411 = vld [vmem:[%s2408 + $0x10] sm:$0xff]
        %v2412 = vld [vmem:[%s2408 + $0x18] sm:$0xff]
        %v2413 = vld [vmem:[%s2408 + $0x20] sm:$0xff]
        %v2414 = vld [vmem:[%s2408 + $0x28] sm:$0xff]
        %v2415 = vld [vmem:[%s2408 + $0x30] sm:$0xff]
        %v2416 = vld [vmem:[%s2408 + $0x38] sm:$0xff]
        %v2417 = vld [vmem:[%s2408 + $0x40] sm:$0xff]
        %v2418 = vld [vmem:[%s2408 + $0x48] sm:$0xff]
        %v2419 = vld [vmem:[%s2408 + $0x50] sm:$0xff]
        %v2420 = vld [vmem:[%s2408 + $0x58] sm:$0xff]
        %v2421 = vld [vmem:[%s2408 + $0x60] sm:$0xff]
        %v2422 = vld [vmem:[%s2408 + $0x68] sm:$0xff]
        %v2423 = vld [vmem:[%s2408 + $0x70] sm:$0xff]
        %v2424 = vld [vmem:[%s2408 + $0x78] sm:$0xff]
        %v2425 = vld [vmem:[%s2408 + $0x80] sm:$0xff]
        %v2426 = vld [vmem:[%s2408 + $0x88] sm:$0xff]
        %v2427 = vld [vmem:[%s2408 + $0x90] sm:$0xff]
        %v2428 = vld [vmem:[%s2408 + $0x98] sm:$0xff]
        %v2429 = vld [vmem:[%s2408 + $0xa0] sm:$0xff]
        %v2430 = vld [vmem:[%s2408 + $0xa8] sm:$0xff]
        %v2431 = vld [vmem:[%s2408 + $0xb0] sm:$0xff]
        %v2432 = vld [vmem:[%s2408 + $0xb8] sm:$0xff]
        %v2433 = vld [vmem:[%s2408 + $0xc0] sm:$0xff]
        %v2434 = vld [vmem:[%s2408 + $0xc8] sm:$0xff]
        %v2435 = vld [vmem:[%s2408 + $0xd0] sm:$0xff]
        %v2436 = vld [vmem:[%s2408 + $0xd8] sm:$0xff]
        %v2437 = vld [vmem:[%s2408 + $0xe0] sm:$0xff]
        %v2438 = vld [vmem:[%s2408 + $0xe8] sm:$0xff]
        %v2439 = vld [vmem:[%s2408 + $0xf0] sm:$0xff]
        %v2440 = vld [vmem:[%s2408 + $0xf8] sm:$0xff]
        %v2441 = vld [vmem:[%s2408 + $0x100] sm:$0xff]
        %v2442 = vld [vmem:[%s2408 + $0x108] sm:$0xff]
        %v2443 = vld [vmem:[%s2408 + $0x110] sm:$0xff]
        %v2444 = vld [vmem:[%s2408 + $0x118] sm:$0xff]
        %v2445 = vld [vmem:[%s2408 + $0x120] sm:$0xff]
        %v2446 = vld [vmem:[%s2408 + $0x128] sm:$0xff]
        %v2447 = vld [vmem:[%s2408 + $0x130] sm:$0xff]
        %v2448 = vld [vmem:[%s2408 + $0x138] sm:$0xff]
        %v2489 = vunpack.c.l.b16 %v2409
        %v2490 = vunpack.c.h.b16 %v2409
        %v2491 = vunpack.c.l.b16 %v2410
        %v2492 = vunpack.c.h.b16 %v2410
        %v2493 = vunpack.c.l.b16 %v2411
        %v2494 = vunpack.c.h.b16 %v2411
        %v2495 = vunpack.c.l.b16 %v2412
        %v2496 = vunpack.c.h.b16 %v2412
        %v2497 = vunpack.c.l.b16 %v2413
        %v2498 = vunpack.c.h.b16 %v2413
        %v2499 = vunpack.c.l.b16 %v2414
        %v2500 = vunpack.c.h.b16 %v2414
        %v2501 = vunpack.c.l.b16 %v2415
        %v2502 = vunpack.c.h.b16 %v2415
        %v2503 = vunpack.c.l.b16 %v2416
        %v2504 = vunpack.c.h.b16 %v2416
        %v2505 = vunpack.c.l.b16 %v2417
        %v2506 = vunpack.c.h.b16 %v2417
        %v2507 = vunpack.c.l.b16 %v2418
        %v2508 = vunpack.c.h.b16 %v2418
        %v2509 = vunpack.c.l.b16 %v2419
        %v2510 = vunpack.c.h.b16 %v2419
        %v2511 = vunpack.c.l.b16 %v2420
        %v2512 = vunpack.c.h.b16 %v2420
        %v2513 = vunpack.c.l.b16 %v2421
        %v2514 = vunpack.c.h.b16 %v2421
        %v2515 = vunpack.c.l.b16 %v2422
        %v2516 = vunpack.c.h.b16 %v2422
        %v2517 = vunpack.c.l.b16 %v2423
        %v2518 = vunpack.c.h.b16 %v2423
        %v2519 = vunpack.c.l.b16 %v2424
        %v2520 = vunpack.c.h.b16 %v2424
        %v2521 = vunpack.c.l.b16 %v2425
        %v2522 = vunpack.c.h.b16 %v2425
        %v2523 = vunpack.c.l.b16 %v2426
        %v2524 = vunpack.c.h.b16 %v2426
        %v2525 = vunpack.c.l.b16 %v2427
        %v2526 = vunpack.c.h.b16 %v2427
        %v2527 = vunpack.c.l.b16 %v2428
        %v2528 = vunpack.c.h.b16 %v2428
        %v2529 = vunpack.c.l.b16 %v2429
        %v2530 = vunpack.c.h.b16 %v2429
        %v2531 = vunpack.c.l.b16 %v2430
        %v2532 = vunpack.c.h.b16 %v2430
        %v2533 = vunpack.c.l.b16 %v2431
        %v2534 = vunpack.c.h.b16 %v2431
        %v2535 = vunpack.c.l.b16 %v2432
        %v2536 = vunpack.c.h.b16 %v2432
        %v2537 = vunpack.c.l.b16 %v2433
        %v2538 = vunpack.c.h.b16 %v2433
        %v2539 = vunpack.c.l.b16 %v2434
        %v2540 = vunpack.c.h.b16 %v2434
        %v2541 = vunpack.c.l.b16 %v2435
        %v2542 = vunpack.c.h.b16 %v2435
        %v2543 = vunpack.c.l.b16 %v2436
        %v2544 = vunpack.c.h.b16 %v2436
        %v2545 = vunpack.c.l.b16 %v2437
        %v2546 = vunpack.c.h.b16 %v2437
        %v2547 = vunpack.c.l.b16 %v2438
        %v2548 = vunpack.c.h.b16 %v2438
        %v2549 = vunpack.c.l.b16 %v2439
        %v2550 = vunpack.c.h.b16 %v2439
        %v2551 = vunpack.c.l.b16 %v2440
        %v2552 = vunpack.c.h.b16 %v2440
        %v2553 = vunpack.c.l.b16 %v2441
        %v2554 = vunpack.c.h.b16 %v2441
        %v2555 = vunpack.c.l.b16 %v2442
        %v2556 = vunpack.c.h.b16 %v2442
        %v2557 = vunpack.c.l.b16 %v2443
        %v2558 = vunpack.c.h.b16 %v2443
        %v2559 = vunpack.c.l.b16 %v2444
        %v2560 = vunpack.c.h.b16 %v2444
        %v2561 = vunpack.c.l.b16 %v2445
        %v2562 = vunpack.c.h.b16 %v2445
        %v2563 = vunpack.c.l.b16 %v2446
        %v2564 = vunpack.c.h.b16 %v2446
        %v2565 = vunpack.c.l.b16 %v2447
        %v2566 = vunpack.c.h.b16 %v2447
        %v2567 = vunpack.c.l.b16 %v2448
        %v2568 = vunpack.c.h.b16 %v2448
        %v2569 = vpack.c.b16 %v2491, %v2489
        %v2570 = vpack.c.b16 %v2492, %v2490
        %v2571 = vpack.c.b16 %v2495, %v2493
        %v2572 = vpack.c.b16 %v2496, %v2494
        %v2573 = vpack.c.b16 %v2499, %v2497
        %v2574 = vpack.c.b16 %v2500, %v2498
        %v2575 = vpack.c.b16 %v2503, %v2501
        %v2576 = vpack.c.b16 %v2504, %v2502
        %v2577 = vpack.c.b16 %v2507, %v2505
        %v2578 = vpack.c.b16 %v2508, %v2506
        %v2579 = vpack.c.b16 %v2511, %v2509
        %v2580 = vpack.c.b16 %v2512, %v2510
        %v2581 = vpack.c.b16 %v2515, %v2513
        %v2582 = vpack.c.b16 %v2516, %v2514
        %v2583 = vpack.c.b16 %v2519, %v2517
        %v2584 = vpack.c.b16 %v2520, %v2518
        %v2585 = vpack.c.b16 %v2523, %v2521
        %v2586 = vpack.c.b16 %v2524, %v2522
        %v2587 = vpack.c.b16 %v2527, %v2525
        %v2588 = vpack.c.b16 %v2528, %v2526
        %v2589 = vpack.c.b16 %v2531, %v2529
        %v2590 = vpack.c.b16 %v2532, %v2530
        %v2591 = vpack.c.b16 %v2535, %v2533
        %v2592 = vpack.c.b16 %v2536, %v2534
        %v2593 = vpack.c.b16 %v2539, %v2537
        %v2594 = vpack.c.b16 %v2540, %v2538
        %v2595 = vpack.c.b16 %v2543, %v2541
        %v2596 = vpack.c.b16 %v2544, %v2542
        %v2597 = vpack.c.b16 %v2547, %v2545
        %v2598 = vpack.c.b16 %v2548, %v2546
        %v2599 = vpack.c.b16 %v2551, %v2549
        %v2600 = vpack.c.b16 %v2552, %v2550
        %v2601 = vpack.c.b16 %v2555, %v2553
        %v2602 = vpack.c.b16 %v2556, %v2554
        %v2603 = vpack.c.b16 %v2559, %v2557
        %v2604 = vpack.c.b16 %v2560, %v2558
        %v2605 = vpack.c.b16 %v2563, %v2561
        %v2606 = vpack.c.b16 %v2564, %v2562
        %v2607 = vpack.c.b16 %v2567, %v2565
        %v2608 = vpack.c.b16 %v2568, %v2566
        %v2650 = vsel %vm529, %v2407, 0
        %2652 = vmatprep.subr.bf16.mxu0 %v2584
        %2653 = vmatpush1.bf16.msra.mxu0 %v2583
        %2654 = vmatprep.subr.bf16.mxu0 %v2582
        %2655 = vmatpush1.bf16.msra.mxu0 %v2581
        %2656 = vmatprep.subr.bf16.mxu0 %v2580
        %2657 = vmatpush1.bf16.msra.mxu0 %v2579
        %2658 = vmatprep.subr.bf16.mxu0 %v2578
        %2659 = vmatpush1.bf16.msra.mxu0 %v2577
        %2660 = vmatprep.subr.bf16.mxu0 %v2576
        %2661 = vmatpush1.bf16.msra.mxu0 %v2575
        %2662 = vmatprep.subr.bf16.mxu0 %v2574
        %2663 = vmatpush1.bf16.msra.mxu0 %v2573
        %2664 = vmatprep.subr.bf16.mxu0 %v2572
        %2665 = vmatpush1.bf16.msra.mxu0 %v2571
        %2666 = vmatprep.subr.bf16.mxu0 %v2570
        %2667 = vmatpush1.bf16.msra.mxu0 %v2569
        %2668 = vmatprep.subr.bf16.mxu0 %v2600
        %2669 = vmatpush2.bf16.msra.mxu0 %v2599
        %2670 = vmatprep.subr.bf16.mxu0 %v2598
        %2671 = vmatpush2.bf16.msra.mxu0 %v2597
        %2672 = vmatprep.subr.bf16.mxu0 %v2596
        %2673 = vmatpush2.bf16.msra.mxu0 %v2595
        %2674 = vmatprep.subr.bf16.mxu0 %v2594
        %2675 = vmatpush2.bf16.msra.mxu0 %v2593
        %2676 = vmatprep.subr.bf16.mxu0 %v2592
        %2677 = vmatpush2.bf16.msra.mxu0 %v2591
        %2678 = vmatprep.subr.bf16.mxu0 %v2590
        %2679 = vmatpush2.bf16.msra.mxu0 %v2589
        %2680 = vmatprep.subr.bf16.mxu0 %v2588
        %2681 = vmatpush2.bf16.msra.mxu0 %v2587
        %2682 = vmatprep.subr.bf16.mxu0 %v2586
        %2683 = vmatpush2.bf16.msra.mxu0 %v2585
        %2684 = vmatprep.mubr.bf16.mxu0 %v2406
        %2685 = vmatmul.mubr.bf16.gmra.mxu0 %v2405
        %v2686 = vpop.f32.mrf.mxu0
        %v2687 = vadd.f32 0.0, %v2686
        %v2688 = vpop.f32.mrf.mxu0
        %v2689 = vadd.f32 0.0, %v2688
        %v2690 = vpop.f32.mrf.mxu0
        %v2691 = vpop.f32.mrf.mxu0
        %2692 = vdwg.mxu0
        %2693 = vmatprep.subr.bf16.mxu0 0
        %2694 = vmatpush1.bf16.msra.mxu0 0
        %2695 = vmatprep.subr.bf16.mxu0 0
        %2696 = vmatpush1.bf16.msra.mxu0 0
        %2697 = vmatprep.subr.bf16.mxu0 0
        %2698 = vmatpush1.bf16.msra.mxu0 0
        %2699 = vmatprep.subr.bf16.mxu0 0
        %2700 = vmatpush1.bf16.msra.mxu0 0
        %2701 = vmatprep.subr.bf16.mxu0 %v2608
        %2702 = vmatpush1.bf16.msra.mxu0 %v2607
        %2703 = vmatprep.subr.bf16.mxu0 %v2606
        %2704 = vmatpush1.bf16.msra.mxu0 %v2605
        %2705 = vmatprep.subr.bf16.mxu0 %v2604
        %2706 = vmatpush1.bf16.msra.mxu0 %v2603
        %2707 = vmatprep.subr.bf16.mxu0 %v2602
        %2708 = vmatpush1.bf16.msra.mxu0 %v2601
        %2709 = vmatprep.subr.bf16.mxu0 0
        %2710 = vmatpush2.bf16.msra.mxu0 0
        %2711 = vmatprep.subr.bf16.mxu0 0
        %2712 = vmatpush2.bf16.msra.mxu0 0
        %2713 = vmatprep.subr.bf16.mxu0 0
        %2714 = vmatpush2.bf16.msra.mxu0 0
        %2715 = vmatprep.subr.bf16.mxu0 0
        %2716 = vmatpush2.bf16.msra.mxu0 0
        %2717 = vmatprep.subr.bf16.mxu0 0
        %2718 = vmatpush2.bf16.msra.mxu0 0
        %2719 = vmatprep.subr.bf16.mxu0 0
        %2720 = vmatpush2.bf16.msra.mxu0 0
        %2721 = vmatprep.subr.bf16.mxu0 0
        %2722 = vmatpush2.bf16.msra.mxu0 0
        %2723 = vmatprep.subr.bf16.mxu0 0
        %2724 = vmatpush2.bf16.msra.mxu0 0
        %2725 = vmatprep.mubr.bf16.mxu0 0
        %2726 = vmatmul.mubr.bf16.gmra.mxu0 %v2650
        %v2727 = vpop.f32.mrf.mxu0
        %v2728 = vadd.f32 %v2687, %v2727
        %v2729 = vpop.f32.mrf.mxu0
        %v2730 = vadd.f32 %v2689, %v2729
        %v2731 = vpop.f32.mrf.mxu0
        %v2732 = vpop.f32.mrf.mxu0
        %2733 = vdwg.mxu0
        %v2734 = vadd.f32 %v2317, %v2728
        %v2735 = vadd.f32 %v2318, %v2730
        %s2736 = scalar_lea.vmem %s4, 16
        %v2737 = vld [vmem:[%s2736] sm:$0xf]
        %v2739 = vsel %vm1065, %v2737, 0
        %2741 = vmatprep.subr.bf16.mxu0 0
        %2742 = vmatpush1.bf16.msra.mxu0 0
        %2743 = vmatprep.subr.bf16.mxu0 0
        %2744 = vmatpush1.bf16.msra.mxu0 0
        %2745 = vmatprep.subr.bf16.mxu0 0
        %2746 = vmatpush1.bf16.msra.mxu0 0
        %2747 = vmatprep.subr.bf16.mxu0 0
        %2748 = vmatpush1.bf16.msra.mxu0 0
        %2749 = vmatprep.subr.bf16.mxu0 0
        %2750 = vmatpush1.bf16.msra.mxu0 0
        %2751 = vmatprep.subr.bf16.mxu0 0
        %2752 = vmatpush1.bf16.msra.mxu0 0
        %2753 = vmatprep.subr.bf16.mxu0 %v1073
        %2754 = vmatpush1.bf16.msra.mxu0 %v1070
        %2755 = vmatprep.subr.bf16.mxu0 %v1059
        %2756 = vmatpush1.bf16.msra.mxu0 %v1058
        %2757 = vmatprep.subr.bf16.mxu0 0
        %2758 = vmatpush2.bf16.msra.mxu0 0
        %2759 = vmatprep.subr.bf16.mxu0 0
        %2760 = vmatpush2.bf16.msra.mxu0 0
        %2761 = vmatprep.subr.bf16.mxu0 0
        %2762 = vmatpush2.bf16.msra.mxu0 0
        %2763 = vmatprep.subr.bf16.mxu0 0
        %2764 = vmatpush2.bf16.msra.mxu0 0
        %2765 = vmatprep.subr.bf16.mxu0 0
        %2766 = vmatpush2.bf16.msra.mxu0 0
        %2767 = vmatprep.subr.bf16.mxu0 0
        %2768 = vmatpush2.bf16.msra.mxu0 0
        %2769 = vmatprep.subr.bf16.mxu0 0
        %2770 = vmatpush2.bf16.msra.mxu0 0
        %2771 = vmatprep.subr.bf16.mxu0 0
        %2772 = vmatpush2.bf16.msra.mxu0 0
        %2773 = vmatprep.mubr.bf16.mxu0 0
        %2774 = vmatmul.mubr.bf16.gmra.mxu0 %v2739
        %v2775 = vpop.f32.mrf.mxu0
        %v2776 = vadd.f32 0.0, %v2775
        %v2777 = vpop.f32.mrf.mxu0
        %v2778 = vadd.f32 0.0, %v2777
        %v2779 = vpop.f32.mrf.mxu0
        %v2780 = vpop.f32.mrf.mxu0
        %2781 = vdwg.mxu0
        %2782 = vmatprep.subr.bf16.mxu0 0
        %2783 = vmatpush1.bf16.msra.mxu0 0
        %2784 = vmatprep.subr.bf16.mxu0 0
        %2785 = vmatpush1.bf16.msra.mxu0 0
        %2786 = vmatprep.subr.bf16.mxu0 0
        %2787 = vmatpush1.bf16.msra.mxu0 0
        %2788 = vmatprep.subr.bf16.mxu0 0
        %2789 = vmatpush1.bf16.msra.mxu0 0
        %2790 = vmatprep.subr.bf16.mxu0 0
        %2791 = vmatpush1.bf16.msra.mxu0 0
        %2792 = vmatprep.subr.bf16.mxu0 0
        %2793 = vmatpush1.bf16.msra.mxu0 0
        %2794 = vmatprep.subr.bf16.mxu0 0
        %2795 = vmatpush1.bf16.msra.mxu0 %v1076
        %2796 = vmatprep.subr.bf16.mxu0 0
        %2797 = vmatpush1.bf16.msra.mxu0 %v1060
        %2798 = vmatprep.subr.bf16.mxu0 0
        %2799 = vmatpush2.bf16.msra.mxu0 0
        %2800 = vmatprep.subr.bf16.mxu0 0
        %2801 = vmatpush2.bf16.msra.mxu0 0
        %2802 = vmatprep.subr.bf16.mxu0 0
        %2803 = vmatpush2.bf16.msra.mxu0 0
        %2804 = vmatprep.subr.bf16.mxu0 0
        %2805 = vmatpush2.bf16.msra.mxu0 0
        %2806 = vmatprep.subr.bf16.mxu0 0
        %2807 = vmatpush2.bf16.msra.mxu0 0
        %2808 = vmatprep.subr.bf16.mxu0 0
        %2809 = vmatpush2.bf16.msra.mxu0 0
        %2810 = vmatprep.subr.bf16.mxu0 0
        %2811 = vmatpush2.bf16.msra.mxu0 0
        %2812 = vmatprep.subr.bf16.mxu0 0
        %2813 = vmatpush2.bf16.msra.mxu0 0
        %2814 = vmatprep.mubr.bf16.mxu0 0
        %2815 = vmatmul.mubr.bf16.gmra.mxu0 %v2739
        %v2816 = vpop.f32.mrf.mxu0
        %v2817 = vadd.f32 0.0, %v2816
        %v2818 = vpop.f32.mrf.mxu0
        %v2819 = vpop.f32.mrf.mxu0
        %v2820 = vpop.f32.mrf.mxu0
        %2821 = vdwg.mxu0
        %v2822 = vpack.c.bf16 %v2776, %v2776
        %v2823 = vpack.c.bf16 %v2778, %v2778
        %v2824 = vpack.c.bf16 %v2817, %v2817
        %s2825 = scalar_lea.vmem [#allocation2], 1280
        %v2826 = vld [vmem:[%s2825] sm:$0xff]
        %v2827 = vld [vmem:[%s2825 + $0x8] sm:$0xff]
        %v2828 = vld [vmem:[%s2825 + $0x10] sm:$0xff]
        %v2829 = vld [vmem:[%s2825 + $0x18] sm:$0xff]
        %v2830 = vld [vmem:[%s2825 + $0x20] sm:$0xff]
        %v2831 = vld [vmem:[%s2825 + $0x28] sm:$0xff]
        %v2832 = vld [vmem:[%s2825 + $0x30] sm:$0xff]
        %v2833 = vld [vmem:[%s2825 + $0x38] sm:$0xff]
        %v2834 = vld [vmem:[%s2825 + $0x40] sm:$0xff]
        %v2835 = vld [vmem:[%s2825 + $0x48] sm:$0xff]
        %v2836 = vld [vmem:[%s2825 + $0x50] sm:$0xff]
        %v2837 = vld [vmem:[%s2825 + $0x58] sm:$0xff]
        %v2838 = vld [vmem:[%s2825 + $0x60] sm:$0xff]
        %v2839 = vld [vmem:[%s2825 + $0x68] sm:$0xff]
        %v2840 = vld [vmem:[%s2825 + $0x70] sm:$0xff]
        %v2841 = vld [vmem:[%s2825 + $0x78] sm:$0xff]
        %v2842 = vld [vmem:[%s2825 + $0x80] sm:$0xff]
        %v2843 = vld [vmem:[%s2825 + $0x88] sm:$0xff]
        %v2844 = vld [vmem:[%s2825 + $0x90] sm:$0xff]
        %v2845 = vld [vmem:[%s2825 + $0x98] sm:$0xff]
        %v2846 = vld [vmem:[%s2825 + $0xa0] sm:$0xff]
        %v2847 = vld [vmem:[%s2825 + $0xa8] sm:$0xff]
        %v2848 = vld [vmem:[%s2825 + $0xb0] sm:$0xff]
        %v2849 = vld [vmem:[%s2825 + $0xb8] sm:$0xff]
        %v2850 = vld [vmem:[%s2825 + $0xc0] sm:$0xff]
        %v2851 = vld [vmem:[%s2825 + $0xc8] sm:$0xff]
        %v2852 = vld [vmem:[%s2825 + $0xd0] sm:$0xff]
        %v2853 = vld [vmem:[%s2825 + $0xd8] sm:$0xff]
        %v2854 = vld [vmem:[%s2825 + $0xe0] sm:$0xff]
        %v2855 = vld [vmem:[%s2825 + $0xe8] sm:$0xff]
        %v2856 = vld [vmem:[%s2825 + $0xf0] sm:$0xff]
        %v2857 = vld [vmem:[%s2825 + $0xf8] sm:$0xff]
        %v2858 = vld [vmem:[%s2825 + $0x100] sm:$0xff]
        %v2859 = vld [vmem:[%s2825 + $0x108] sm:$0xff]
        %v2860 = vld [vmem:[%s2825 + $0x110] sm:$0xff]
        %v2861 = vld [vmem:[%s2825 + $0x118] sm:$0xff]
        %v2862 = vld [vmem:[%s2825 + $0x120] sm:$0xff]
        %v2863 = vld [vmem:[%s2825 + $0x128] sm:$0xff]
        %v2864 = vld [vmem:[%s2825 + $0x130] sm:$0xff]
        %v2865 = vld [vmem:[%s2825 + $0x138] sm:$0xff]
        %v2906 = vunpack.c.l.b16 %v2826
        %v2907 = vunpack.c.h.b16 %v2826
        %v2908 = vunpack.c.l.b16 %v2827
        %v2909 = vunpack.c.h.b16 %v2827
        %v2910 = vunpack.c.l.b16 %v2828
        %v2911 = vunpack.c.h.b16 %v2828
        %v2912 = vunpack.c.l.b16 %v2829
        %v2913 = vunpack.c.h.b16 %v2829
        %v2914 = vunpack.c.l.b16 %v2830
        %v2915 = vunpack.c.h.b16 %v2830
        %v2916 = vunpack.c.l.b16 %v2831
        %v2917 = vunpack.c.h.b16 %v2831
        %v2918 = vunpack.c.l.b16 %v2832
        %v2919 = vunpack.c.h.b16 %v2832
        %v2920 = vunpack.c.l.b16 %v2833
        %v2921 = vunpack.c.h.b16 %v2833
        %v2922 = vunpack.c.l.b16 %v2834
        %v2923 = vunpack.c.h.b16 %v2834
        %v2924 = vunpack.c.l.b16 %v2835
        %v2925 = vunpack.c.h.b16 %v2835
        %v2926 = vunpack.c.l.b16 %v2836
        %v2927 = vunpack.c.h.b16 %v2836
        %v2928 = vunpack.c.l.b16 %v2837
        %v2929 = vunpack.c.h.b16 %v2837
        %v2930 = vunpack.c.l.b16 %v2838
        %v2931 = vunpack.c.h.b16 %v2838
        %v2932 = vunpack.c.l.b16 %v2839
        %v2933 = vunpack.c.h.b16 %v2839
        %v2934 = vunpack.c.l.b16 %v2840
        %v2935 = vunpack.c.h.b16 %v2840
        %v2936 = vunpack.c.l.b16 %v2841
        %v2937 = vunpack.c.h.b16 %v2841
        %v2938 = vunpack.c.l.b16 %v2842
        %v2939 = vunpack.c.h.b16 %v2842
        %v2940 = vunpack.c.l.b16 %v2843
        %v2941 = vunpack.c.h.b16 %v2843
        %v2942 = vunpack.c.l.b16 %v2844
        %v2943 = vunpack.c.h.b16 %v2844
        %v2944 = vunpack.c.l.b16 %v2845
        %v2945 = vunpack.c.h.b16 %v2845
        %v2946 = vunpack.c.l.b16 %v2846
        %v2947 = vunpack.c.h.b16 %v2846
        %v2948 = vunpack.c.l.b16 %v2847
        %v2949 = vunpack.c.h.b16 %v2847
        %v2950 = vunpack.c.l.b16 %v2848
        %v2951 = vunpack.c.h.b16 %v2848
        %v2952 = vunpack.c.l.b16 %v2849
        %v2953 = vunpack.c.h.b16 %v2849
        %v2954 = vunpack.c.l.b16 %v2850
        %v2955 = vunpack.c.h.b16 %v2850
        %v2956 = vunpack.c.l.b16 %v2851
        %v2957 = vunpack.c.h.b16 %v2851
        %v2958 = vunpack.c.l.b16 %v2852
        %v2959 = vunpack.c.h.b16 %v2852
        %v2960 = vunpack.c.l.b16 %v2853
        %v2961 = vunpack.c.h.b16 %v2853
        %v2962 = vunpack.c.l.b16 %v2854
        %v2963 = vunpack.c.h.b16 %v2854
        %v2964 = vunpack.c.l.b16 %v2855
        %v2965 = vunpack.c.h.b16 %v2855
        %v2966 = vunpack.c.l.b16 %v2856
        %v2967 = vunpack.c.h.b16 %v2856
        %v2968 = vunpack.c.l.b16 %v2857
        %v2969 = vunpack.c.h.b16 %v2857
        %v2970 = vunpack.c.l.b16 %v2858
        %v2971 = vunpack.c.h.b16 %v2858
        %v2972 = vunpack.c.l.b16 %v2859
        %v2973 = vunpack.c.h.b16 %v2859
        %v2974 = vunpack.c.l.b16 %v2860
        %v2975 = vunpack.c.h.b16 %v2860
        %v2976 = vunpack.c.l.b16 %v2861
        %v2977 = vunpack.c.h.b16 %v2861
        %v2978 = vunpack.c.l.b16 %v2862
        %v2979 = vunpack.c.h.b16 %v2862
        %v2980 = vunpack.c.l.b16 %v2863
        %v2981 = vunpack.c.h.b16 %v2863
        %v2982 = vunpack.c.l.b16 %v2864
        %v2983 = vunpack.c.h.b16 %v2864
        %v2984 = vunpack.c.l.b16 %v2865
        %v2985 = vunpack.c.h.b16 %v2865
        %v2986 = vpack.c.b16 %v2908, %v2906
        %v2987 = vpack.c.b16 %v2909, %v2907
        %v2988 = vpack.c.b16 %v2912, %v2910
        %v2989 = vpack.c.b16 %v2913, %v2911
        %v2990 = vpack.c.b16 %v2916, %v2914
        %v2991 = vpack.c.b16 %v2917, %v2915
        %v2992 = vpack.c.b16 %v2920, %v2918
        %v2993 = vpack.c.b16 %v2921, %v2919
        %v2994 = vpack.c.b16 %v2924, %v2922
        %v2995 = vpack.c.b16 %v2925, %v2923
        %v2996 = vpack.c.b16 %v2928, %v2926
        %v2997 = vpack.c.b16 %v2929, %v2927
        %v2998 = vpack.c.b16 %v2932, %v2930
        %v2999 = vpack.c.b16 %v2933, %v2931
        %v3000 = vpack.c.b16 %v2936, %v2934
        %v3001 = vpack.c.b16 %v2937, %v2935
        %v3002 = vpack.c.b16 %v2940, %v2938
        %v3003 = vpack.c.b16 %v2941, %v2939
        %v3004 = vpack.c.b16 %v2944, %v2942
        %v3005 = vpack.c.b16 %v2945, %v2943
        %v3006 = vpack.c.b16 %v2948, %v2946
        %v3007 = vpack.c.b16 %v2949, %v2947
        %v3008 = vpack.c.b16 %v2952, %v2950
        %v3009 = vpack.c.b16 %v2953, %v2951
        %v3010 = vpack.c.b16 %v2956, %v2954
        %v3011 = vpack.c.b16 %v2957, %v2955
        %v3012 = vpack.c.b16 %v2960, %v2958
        %v3013 = vpack.c.b16 %v2961, %v2959
        %v3014 = vpack.c.b16 %v2964, %v2962
        %v3015 = vpack.c.b16 %v2965, %v2963
        %v3016 = vpack.c.b16 %v2968, %v2966
        %v3017 = vpack.c.b16 %v2969, %v2967
        %v3018 = vpack.c.b16 %v2972, %v2970
        %v3019 = vpack.c.b16 %v2973, %v2971
        %v3020 = vpack.c.b16 %v2976, %v2974
        %v3021 = vpack.c.b16 %v2977, %v2975
        %v3022 = vpack.c.b16 %v2980, %v2978
        %v3023 = vpack.c.b16 %v2981, %v2979
        %v3024 = vpack.c.b16 %v2984, %v2982
        %v3025 = vpack.c.b16 %v2985, %v2983
        %v3067 = vsel %vm529, %v2824, 0
        %3069 = vmatprep.subr.bf16.mxu0 %v3001
        %3070 = vmatpush1.bf16.msra.mxu0 %v3000
        %3071 = vmatprep.subr.bf16.mxu0 %v2999
        %3072 = vmatpush1.bf16.msra.mxu0 %v2998
        %3073 = vmatprep.subr.bf16.mxu0 %v2997
        %3074 = vmatpush1.bf16.msra.mxu0 %v2996
        %3075 = vmatprep.subr.bf16.mxu0 %v2995
        %3076 = vmatpush1.bf16.msra.mxu0 %v2994
        %3077 = vmatprep.subr.bf16.mxu0 %v2993
        %3078 = vmatpush1.bf16.msra.mxu0 %v2992
        %3079 = vmatprep.subr.bf16.mxu0 %v2991
        %3080 = vmatpush1.bf16.msra.mxu0 %v2990
        %3081 = vmatprep.subr.bf16.mxu0 %v2989
        %3082 = vmatpush1.bf16.msra.mxu0 %v2988
        %3083 = vmatprep.subr.bf16.mxu0 %v2987
        %3084 = vmatpush1.bf16.msra.mxu0 %v2986
        %3085 = vmatprep.subr.bf16.mxu0 %v3017
        %3086 = vmatpush2.bf16.msra.mxu0 %v3016
        %3087 = vmatprep.subr.bf16.mxu0 %v3015
        %3088 = vmatpush2.bf16.msra.mxu0 %v3014
        %3089 = vmatprep.subr.bf16.mxu0 %v3013
        %3090 = vmatpush2.bf16.msra.mxu0 %v3012
        %3091 = vmatprep.subr.bf16.mxu0 %v3011
        %3092 = vmatpush2.bf16.msra.mxu0 %v3010
        %3093 = vmatprep.subr.bf16.mxu0 %v3009
        %3094 = vmatpush2.bf16.msra.mxu0 %v3008
        %3095 = vmatprep.subr.bf16.mxu0 %v3007
        %3096 = vmatpush2.bf16.msra.mxu0 %v3006
        %3097 = vmatprep.subr.bf16.mxu0 %v3005
        %3098 = vmatpush2.bf16.msra.mxu0 %v3004
        %3099 = vmatprep.subr.bf16.mxu0 %v3003
        %3100 = vmatpush2.bf16.msra.mxu0 %v3002
        %3101 = vmatprep.mubr.bf16.mxu0 %v2823
        %3102 = vmatmul.mubr.bf16.gmra.mxu0 %v2822
        %v3103 = vpop.f32.mrf.mxu0
        %v3104 = vadd.f32 0.0, %v3103
        %v3105 = vpop.f32.mrf.mxu0
        %v3106 = vadd.f32 0.0, %v3105
        %v3107 = vpop.f32.mrf.mxu0
        %v3108 = vpop.f32.mrf.mxu0
        %3109 = vdwg.mxu0
        %3110 = vmatprep.subr.bf16.mxu0 0
        %3111 = vmatpush1.bf16.msra.mxu0 0
        %3112 = vmatprep.subr.bf16.mxu0 0
        %3113 = vmatpush1.bf16.msra.mxu0 0
        %3114 = vmatprep.subr.bf16.mxu0 0
        %3115 = vmatpush1.bf16.msra.mxu0 0
        %3116 = vmatprep.subr.bf16.mxu0 0
        %3117 = vmatpush1.bf16.msra.mxu0 0
        %3118 = vmatprep.subr.bf16.mxu0 %v3025
        %3119 = vmatpush1.bf16.msra.mxu0 %v3024
        %3120 = vmatprep.subr.bf16.mxu0 %v3023
        %3121 = vmatpush1.bf16.msra.mxu0 %v3022
        %3122 = vmatprep.subr.bf16.mxu0 %v3021
        %3123 = vmatpush1.bf16.msra.mxu0 %v3020
        %3124 = vmatprep.subr.bf16.mxu0 %v3019
        %3125 = vmatpush1.bf16.msra.mxu0 %v3018
        %3126 = vmatprep.subr.bf16.mxu0 0
        %3127 = vmatpush2.bf16.msra.mxu0 0
        %3128 = vmatprep.subr.bf16.mxu0 0
        %3129 = vmatpush2.bf16.msra.mxu0 0
        %3130 = vmatprep.subr.bf16.mxu0 0
        %3131 = vmatpush2.bf16.msra.mxu0 0
        %3132 = vmatprep.subr.bf16.mxu0 0
        %3133 = vmatpush2.bf16.msra.mxu0 0
        %3134 = vmatprep.subr.bf16.mxu0 0
        %3135 = vmatpush2.bf16.msra.mxu0 0
        %3136 = vmatprep.subr.bf16.mxu0 0
        %3137 = vmatpush2.bf16.msra.mxu0 0
        %3138 = vmatprep.subr.bf16.mxu0 0
        %3139 = vmatpush2.bf16.msra.mxu0 0
        %3140 = vmatprep.subr.bf16.mxu0 0
        %3141 = vmatpush2.bf16.msra.mxu0 0
        %3142 = vmatprep.mubr.bf16.mxu0 0
        %3143 = vmatmul.mubr.bf16.gmra.mxu0 %v3067
        %v3144 = vpop.f32.mrf.mxu0
        %v3145 = vadd.f32 %v3104, %v3144
        %v3146 = vpop.f32.mrf.mxu0
        %v3147 = vadd.f32 %v3106, %v3146
        %v3148 = vpop.f32.mrf.mxu0
        %v3149 = vpop.f32.mrf.mxu0
        %3150 = vdwg.mxu0
        %v3151 = vadd.f32 %v2734, %v3145
        %v3152 = vadd.f32 %v2735, %v3147
        %v3153 = vld [vmem:[%s5] sm:$0x3]
        %v3155 = vlaneseq
        %v3156 = vshrl.u32 %v3155, 7
        %v3157 = vsub.s32 0, %v3156
        %v3158 = vrot.slane %v3153, %v3157
        %v3159 = vlaneseq
        %v3160 = vshrl.u32 %v3159, 7
        %v3161 = vsub.s32 1, %v3160
        %v3162 = vrot.slane %v3153, %v3161
        %v3165 = vadd.f32 %v3151, %v3158
        %v3166 = vadd.f32 %v3152, %v3162
        %vm3167 = vcmp.ge.f32.partialorder %v3165, 0.0
        %vm3168 = vcmp.ge.f32.partialorder %v3166, 0.0
        %v3169 = vmul.f32 %v3165, 0.01
        %v3170 = vmul.f32 %v3166, 0.01
        %v3171 = vsel %vm3167, %v3165, %v3169
        %v3172 = vsel %vm3168, %v3166, %v3170
        %3175 = vrot.lane.b32.xlu0 %v3171, 32
        %v3176 = vpop.permute.xlu0 %3175
        %3177 = vrot.lane.b32.xlu0 %v3172, 32
        %v3178 = vpop.permute.xlu0 %3177
        %v3179 = vsel %vm1018, %v3176, %v3178
        %v3182 = vsel %vm1018, 0.0, %v3176
        %v3183 = vsel %vm1018, %v3178, 0.0
        %v3186 = vrot.slane %v3182, 7
        %v3187 = vrot.slane %v3179, 7
        %v3188 = vrot.slane %v3183, 7
        %vm3192 = vcmask 1040384
        %v3193 = vsel %vm3192, 0.0, %v3186
        %v3194 = vsel %vm3192, 0.0, %v3187
        %v3195 = vsel %vm3192, 0.0, %v3188
        %v3196 = vsel %vm3192, %v3186, 0.0
        %v3197 = vsel %vm3192, %v3187, 0.0
        %v3198 = vsel %vm3192, %v3188, 0.0
        %v3199 = vpack.c.bf16 %v3196, %v3193
        %v3200 = vpack.c.bf16 %v3197, %v3194
        %v3201 = vpack.c.bf16 %v3198, %v3195
        %v3202 = vld [vmem:[%s7] sm:$0x3]
        %vm3203 = vcmask 80896
        %v3205 = vsel %vm3203, %v3202, 0
        %vm3207 = vcmask 1044480
        %v3209 = vsel %vm3207, %v3199, 0
        %v3212 = vsel %vm3207, %v3200, 0
        %v3215 = vsel %vm3207, %v3201, 0
        %3217 = vmatprep.subr.bf16.mxu0 0
        %3218 = vmatpush1.bf16.msra.mxu0 0
        %3219 = vmatprep.subr.bf16.mxu0 0
        %3220 = vmatpush1.bf16.msra.mxu0 0
        %3221 = vmatprep.subr.bf16.mxu0 0
        %3222 = vmatpush1.bf16.msra.mxu0 0
        %3223 = vmatprep.subr.bf16.mxu0 0
        %3224 = vmatpush1.bf16.msra.mxu0 0
        %3225 = vmatprep.subr.bf16.mxu0 0
        %3226 = vmatpush1.bf16.msra.mxu0 0
        %3227 = vmatprep.subr.bf16.mxu0 0
        %3228 = vmatpush1.bf16.msra.mxu0 0
        %3229 = vmatprep.subr.bf16.mxu0 0
        %3230 = vmatpush1.bf16.msra.mxu0 0
        %3231 = vmatprep.subr.bf16.mxu0 %v3212
        %3232 = vmatpush1.bf16.msra.mxu0 %v3209
        %3233 = vmatprep.subr.bf16.mxu0 0
        %3234 = vmatpush2.bf16.msra.mxu0 0
        %3235 = vmatprep.subr.bf16.mxu0 0
        %3236 = vmatpush2.bf16.msra.mxu0 0
        %3237 = vmatprep.subr.bf16.mxu0 0
        %3238 = vmatpush2.bf16.msra.mxu0 0
        %3239 = vmatprep.subr.bf16.mxu0 0
        %3240 = vmatpush2.bf16.msra.mxu0 0
        %3241 = vmatprep.subr.bf16.mxu0 0
        %3242 = vmatpush2.bf16.msra.mxu0 0
        %3243 = vmatprep.subr.bf16.mxu0 0
        %3244 = vmatpush2.bf16.msra.mxu0 0
        %3245 = vmatprep.subr.bf16.mxu0 0
        %3246 = vmatpush2.bf16.msra.mxu0 0
        %3247 = vmatprep.subr.bf16.mxu0 0
        %3248 = vmatpush2.bf16.msra.mxu0 0
        %3249 = vmatprep.mubr.bf16.mxu0 0
        %3250 = vmatmul.mubr.bf16.gmra.mxu0 %v3205
        %v3251 = vpop.f32.mrf.mxu0
        %v3252 = vadd.f32 0.0, %v3251
        %v3253 = vpop.f32.mrf.mxu0
        %v3254 = vadd.f32 0.0, %v3253
        %v3255 = vpop.f32.mrf.mxu0
        %v3256 = vpop.f32.mrf.mxu0
        %3257 = vdwg.mxu0
        %3258 = vmatprep.subr.bf16.mxu0 0
        %3259 = vmatpush1.bf16.msra.mxu0 0
        %3260 = vmatprep.subr.bf16.mxu0 0
        %3261 = vmatpush1.bf16.msra.mxu0 0
        %3262 = vmatprep.subr.bf16.mxu0 0
        %3263 = vmatpush1.bf16.msra.mxu0 0
        %3264 = vmatprep.subr.bf16.mxu0 0
        %3265 = vmatpush1.bf16.msra.mxu0 0
        %3266 = vmatprep.subr.bf16.mxu0 0
        %3267 = vmatpush1.bf16.msra.mxu0 0
        %3268 = vmatprep.subr.bf16.mxu0 0
        %3269 = vmatpush1.bf16.msra.mxu0 0
        %3270 = vmatprep.subr.bf16.mxu0 0
        %3271 = vmatpush1.bf16.msra.mxu0 0
        %3272 = vmatprep.subr.bf16.mxu0 0
        %3273 = vmatpush1.bf16.msra.mxu0 %v3215
        %3274 = vmatprep.subr.bf16.mxu0 0
        %3275 = vmatpush2.bf16.msra.mxu0 0
        %3276 = vmatprep.subr.bf16.mxu0 0
        %3277 = vmatpush2.bf16.msra.mxu0 0
        %3278 = vmatprep.subr.bf16.mxu0 0
        %3279 = vmatpush2.bf16.msra.mxu0 0
        %3280 = vmatprep.subr.bf16.mxu0 0
        %3281 = vmatpush2.bf16.msra.mxu0 0
        %3282 = vmatprep.subr.bf16.mxu0 0
        %3283 = vmatpush2.bf16.msra.mxu0 0
        %3284 = vmatprep.subr.bf16.mxu0 0
        %3285 = vmatpush2.bf16.msra.mxu0 0
        %3286 = vmatprep.subr.bf16.mxu0 0
        %3287 = vmatpush2.bf16.msra.mxu0 0
        %3288 = vmatprep.subr.bf16.mxu0 0
        %3289 = vmatpush2.bf16.msra.mxu0 0
        %3290 = vmatprep.mubr.bf16.mxu0 0
        %3291 = vmatmul.mubr.bf16.gmra.mxu0 %v3205
        %v3292 = vpop.f32.mrf.mxu0
        %v3293 = vadd.f32 0.0, %v3292
        %v3294 = vpop.f32.mrf.mxu0
        %v3295 = vpop.f32.mrf.mxu0
        %v3296 = vpop.f32.mrf.mxu0
        %3297 = vdwg.mxu0
        %v3298 = vpack.c.bf16 %v3252, %v3252
        %v3299 = vpack.c.bf16 %v3254, %v3254
        %v3300 = vpack.c.bf16 %v3293, %v3293
        %v3301 = vld [vmem:[#allocation5] sm:$0xf]
        %v3302 = vld [vmem:[#allocation5 + $0x4] sm:$0xf]
        %v3303 = vld [vmem:[#allocation5 + $0x8] sm:$0xf]
        %v3304 = vld [vmem:[#allocation5 + $0xc] sm:$0xf]
        %v3305 = vld [vmem:[#allocation5 + $0x10] sm:$0xf]
        %v3306 = vld [vmem:[#allocation5 + $0x14] sm:$0xf]
        %v3307 = vld [vmem:[#allocation5 + $0x18] sm:$0xf]
        %v3308 = vld [vmem:[#allocation5 + $0x1c] sm:$0xf]
        %v3309 = vld [vmem:[#allocation5 + $0x20] sm:$0xf]
        %v3310 = vld [vmem:[#allocation5 + $0x24] sm:$0xf]
        %v3311 = vld [vmem:[#allocation5 + $0x28] sm:$0xf]
        %v3312 = vld [vmem:[#allocation5 + $0x2c] sm:$0xf]
        %v3313 = vld [vmem:[#allocation5 + $0x30] sm:$0xf]
        %v3314 = vld [vmem:[#allocation5 + $0x34] sm:$0xf]
        %v3315 = vld [vmem:[#allocation5 + $0x38] sm:$0xf]
        %v3316 = vld [vmem:[#allocation5 + $0x3c] sm:$0xf]
        %v3317 = vld [vmem:[#allocation5 + $0x40] sm:$0xf]
        %v3318 = vld [vmem:[#allocation5 + $0x44] sm:$0xf]
        %v3319 = vld [vmem:[#allocation5 + $0x48] sm:$0xf]
        %v3320 = vld [vmem:[#allocation5 + $0x4c] sm:$0xf]
        %v3321 = vld [vmem:[#allocation5 + $0x50] sm:$0xf]
        %v3322 = vld [vmem:[#allocation5 + $0x54] sm:$0xf]
        %v3323 = vld [vmem:[#allocation5 + $0x58] sm:$0xf]
        %v3324 = vld [vmem:[#allocation5 + $0x5c] sm:$0xf]
        %v3325 = vld [vmem:[#allocation5 + $0x60] sm:$0xf]
        %v3326 = vld [vmem:[#allocation5 + $0x64] sm:$0xf]
        %v3327 = vld [vmem:[#allocation5 + $0x68] sm:$0xf]
        %v3328 = vld [vmem:[#allocation5 + $0x6c] sm:$0xf]
        %v3329 = vld [vmem:[#allocation5 + $0x70] sm:$0xf]
        %v3330 = vld [vmem:[#allocation5 + $0x74] sm:$0xf]
        %v3331 = vld [vmem:[#allocation5 + $0x78] sm:$0xf]
        %v3332 = vld [vmem:[#allocation5 + $0x7c] sm:$0xf]
        %v3333 = vld [vmem:[#allocation5 + $0x80] sm:$0xf]
        %v3334 = vld [vmem:[#allocation5 + $0x84] sm:$0xf]
        %v3335 = vld [vmem:[#allocation5 + $0x88] sm:$0xf]
        %v3336 = vld [vmem:[#allocation5 + $0x8c] sm:$0xf]
        %v3337 = vld [vmem:[#allocation5 + $0x90] sm:$0xf]
        %v3338 = vld [vmem:[#allocation5 + $0x94] sm:$0xf]
        %v3339 = vld [vmem:[#allocation5 + $0x98] sm:$0xf]
        %v3340 = vld [vmem:[#allocation5 + $0x9c] sm:$0xf]
        %s3341 = scalar_lea.vmem %s7, 2
        %v3342 = vld [vmem:[%s3341] sm:$0x3]
        %v3344 = vsel %vm3203, %v3342, 0
        %3346 = vmatprep.subr.bf16.mxu0 0
        %3347 = vmatpush1.bf16.msra.mxu0 0
        %3348 = vmatprep.subr.bf16.mxu0 0
        %3349 = vmatpush1.bf16.msra.mxu0 0
        %3350 = vmatprep.subr.bf16.mxu0 0
        %3351 = vmatpush1.bf16.msra.mxu0 0
        %3352 = vmatprep.subr.bf16.mxu0 0
        %3353 = vmatpush1.bf16.msra.mxu0 0
        %3354 = vmatprep.subr.bf16.mxu0 0
        %3355 = vmatpush1.bf16.msra.mxu0 0
        %3356 = vmatprep.subr.bf16.mxu0 0
        %3357 = vmatpush1.bf16.msra.mxu0 0
        %3358 = vmatprep.subr.bf16.mxu0 0
        %3359 = vmatpush1.bf16.msra.mxu0 0
        %3360 = vmatprep.subr.bf16.mxu0 %v3212
        %3361 = vmatpush1.bf16.msra.mxu0 %v3209
        %3362 = vmatprep.subr.bf16.mxu0 0
        %3363 = vmatpush2.bf16.msra.mxu0 0
        %3364 = vmatprep.subr.bf16.mxu0 0
        %3365 = vmatpush2.bf16.msra.mxu0 0
        %3366 = vmatprep.subr.bf16.mxu0 0
        %3367 = vmatpush2.bf16.msra.mxu0 0
        %3368 = vmatprep.subr.bf16.mxu0 0
        %3369 = vmatpush2.bf16.msra.mxu0 0
        %3370 = vmatprep.subr.bf16.mxu0 0
        %3371 = vmatpush2.bf16.msra.mxu0 0
        %3372 = vmatprep.subr.bf16.mxu0 0
        %3373 = vmatpush2.bf16.msra.mxu0 0
        %3374 = vmatprep.subr.bf16.mxu0 0
        %3375 = vmatpush2.bf16.msra.mxu0 0
        %3376 = vmatprep.subr.bf16.mxu0 0
        %3377 = vmatpush2.bf16.msra.mxu0 0
        %3378 = vmatprep.mubr.bf16.mxu0 0
        %3379 = vmatmul.mubr.bf16.gmra.mxu0 %v3344
        %v3380 = vpop.f32.mrf.mxu0
        %v3381 = vadd.f32 0.0, %v3380
        %v3382 = vpop.f32.mrf.mxu0
        %v3383 = vadd.f32 0.0, %v3382
        %v3384 = vpop.f32.mrf.mxu0
        %v3385 = vpop.f32.mrf.mxu0
        %3386 = vdwg.mxu0
        %3387 = vmatprep.subr.bf16.mxu0 0
        %3388 = vmatpush1.bf16.msra.mxu0 0
        %3389 = vmatprep.subr.bf16.mxu0 0
        %3390 = vmatpush1.bf16.msra.mxu0 0
        %3391 = vmatprep.subr.bf16.mxu0 0
        %3392 = vmatpush1.bf16.msra.mxu0 0
        %3393 = vmatprep.subr.bf16.mxu0 0
        %3394 = vmatpush1.bf16.msra.mxu0 0
        %3395 = vmatprep.subr.bf16.mxu0 0
        %3396 = vmatpush1.bf16.msra.mxu0 0
        %3397 = vmatprep.subr.bf16.mxu0 0
        %3398 = vmatpush1.bf16.msra.mxu0 0
        %3399 = vmatprep.subr.bf16.mxu0 0
        %3400 = vmatpush1.bf16.msra.mxu0 0
        %3401 = vmatprep.subr.bf16.mxu0 0
        %3402 = vmatpush1.bf16.msra.mxu0 %v3215
        %3403 = vmatprep.subr.bf16.mxu0 0
        %3404 = vmatpush2.bf16.msra.mxu0 0
        %3405 = vmatprep.subr.bf16.mxu0 0
        %3406 = vmatpush2.bf16.msra.mxu0 0
        %3407 = vmatprep.subr.bf16.mxu0 0
        %3408 = vmatpush2.bf16.msra.mxu0 0
        %3409 = vmatprep.subr.bf16.mxu0 0
        %3410 = vmatpush2.bf16.msra.mxu0 0
        %3411 = vmatprep.subr.bf16.mxu0 0
        %3412 = vmatpush2.bf16.msra.mxu0 0
        %3413 = vmatprep.subr.bf16.mxu0 0
        %3414 = vmatpush2.bf16.msra.mxu0 0
        %3415 = vmatprep.subr.bf16.mxu0 0
        %3416 = vmatpush2.bf16.msra.mxu0 0
        %3417 = vmatprep.subr.bf16.mxu0 0
        %3418 = vmatpush2.bf16.msra.mxu0 0
        %3419 = vmatprep.mubr.bf16.mxu0 0
        %3420 = vmatmul.mubr.bf16.gmra.mxu0 %v3344
        %v3421 = vpop.f32.mrf.mxu0
        %v3422 = vadd.f32 0.0, %v3421
        %v3423 = vpop.f32.mrf.mxu0
        %v3424 = vpop.f32.mrf.mxu0
        %v3425 = vpop.f32.mrf.mxu0
        %3426 = vdwg.mxu0
        %v3427 = vpack.c.bf16 %v3381, %v3381
        %v3428 = vpack.c.bf16 %v3383, %v3383
        %v3429 = vpack.c.bf16 %v3422, %v3422
        %s3430 = scalar_lea.vmem [#allocation5], 160
        %v3431 = vld [vmem:[%s3430] sm:$0xf]
        %v3432 = vld [vmem:[%s3430 + $0x4] sm:$0xf]
        %v3433 = vld [vmem:[%s3430 + $0x8] sm:$0xf]
        %v3434 = vld [vmem:[%s3430 + $0xc] sm:$0xf]
        %v3435 = vld [vmem:[%s3430 + $0x10] sm:$0xf]
        %v3436 = vld [vmem:[%s3430 + $0x14] sm:$0xf]
        %v3437 = vld [vmem:[%s3430 + $0x18] sm:$0xf]
        %v3438 = vld [vmem:[%s3430 + $0x1c] sm:$0xf]
        %v3439 = vld [vmem:[%s3430 + $0x20] sm:$0xf]
        %v3440 = vld [vmem:[%s3430 + $0x24] sm:$0xf]
        %v3441 = vld [vmem:[%s3430 + $0x28] sm:$0xf]
        %v3442 = vld [vmem:[%s3430 + $0x2c] sm:$0xf]
        %v3443 = vld [vmem:[%s3430 + $0x30] sm:$0xf]
        %v3444 = vld [vmem:[%s3430 + $0x34] sm:$0xf]
        %v3445 = vld [vmem:[%s3430 + $0x38] sm:$0xf]
        %v3446 = vld [vmem:[%s3430 + $0x3c] sm:$0xf]
        %v3447 = vld [vmem:[%s3430 + $0x40] sm:$0xf]
        %v3448 = vld [vmem:[%s3430 + $0x44] sm:$0xf]
        %v3449 = vld [vmem:[%s3430 + $0x48] sm:$0xf]
        %v3450 = vld [vmem:[%s3430 + $0x4c] sm:$0xf]
        %v3451 = vld [vmem:[%s3430 + $0x50] sm:$0xf]
        %v3452 = vld [vmem:[%s3430 + $0x54] sm:$0xf]
        %v3453 = vld [vmem:[%s3430 + $0x58] sm:$0xf]
        %v3454 = vld [vmem:[%s3430 + $0x5c] sm:$0xf]
        %v3455 = vld [vmem:[%s3430 + $0x60] sm:$0xf]
        %v3456 = vld [vmem:[%s3430 + $0x64] sm:$0xf]
        %v3457 = vld [vmem:[%s3430 + $0x68] sm:$0xf]
        %v3458 = vld [vmem:[%s3430 + $0x6c] sm:$0xf]
        %v3459 = vld [vmem:[%s3430 + $0x70] sm:$0xf]
        %v3460 = vld [vmem:[%s3430 + $0x74] sm:$0xf]
        %v3461 = vld [vmem:[%s3430 + $0x78] sm:$0xf]
        %v3462 = vld [vmem:[%s3430 + $0x7c] sm:$0xf]
        %v3463 = vld [vmem:[%s3430 + $0x80] sm:$0xf]
        %v3464 = vld [vmem:[%s3430 + $0x84] sm:$0xf]
        %v3465 = vld [vmem:[%s3430 + $0x88] sm:$0xf]
        %v3466 = vld [vmem:[%s3430 + $0x8c] sm:$0xf]
        %v3467 = vld [vmem:[%s3430 + $0x90] sm:$0xf]
        %v3468 = vld [vmem:[%s3430 + $0x94] sm:$0xf]
        %v3469 = vld [vmem:[%s3430 + $0x98] sm:$0xf]
        %v3470 = vld [vmem:[%s3430 + $0x9c] sm:$0xf]
        %v3511 = vunpack.c.l.b16 %v3431
        %v3512 = vunpack.c.l.b16 %v3432
        %v3513 = vunpack.c.l.b16 %v3433
        %v3514 = vunpack.c.l.b16 %v3434
        %v3515 = vunpack.c.l.b16 %v3435
        %v3516 = vunpack.c.l.b16 %v3436
        %v3517 = vunpack.c.l.b16 %v3437
        %v3518 = vunpack.c.l.b16 %v3438
        %v3519 = vunpack.c.l.b16 %v3439
        %v3520 = vunpack.c.l.b16 %v3440
        %v3521 = vunpack.c.l.b16 %v3441
        %v3522 = vunpack.c.l.b16 %v3442
        %v3523 = vunpack.c.l.b16 %v3443
        %v3524 = vunpack.c.l.b16 %v3444
        %v3525 = vunpack.c.l.b16 %v3445
        %v3526 = vunpack.c.l.b16 %v3446
        %v3527 = vunpack.c.l.b16 %v3447
        %v3528 = vunpack.c.l.b16 %v3448
        %v3529 = vunpack.c.l.b16 %v3449
        %v3530 = vunpack.c.l.b16 %v3450
        %v3531 = vunpack.c.l.b16 %v3451
        %v3532 = vunpack.c.l.b16 %v3452
        %v3533 = vunpack.c.l.b16 %v3453
        %v3534 = vunpack.c.l.b16 %v3454
        %v3535 = vunpack.c.l.b16 %v3455
        %v3536 = vunpack.c.l.b16 %v3456
        %v3537 = vunpack.c.l.b16 %v3457
        %v3538 = vunpack.c.l.b16 %v3458
        %v3539 = vunpack.c.l.b16 %v3459
        %v3540 = vunpack.c.l.b16 %v3460
        %v3541 = vunpack.c.l.b16 %v3461
        %v3542 = vunpack.c.l.b16 %v3462
        %v3543 = vunpack.c.l.b16 %v3463
        %v3544 = vunpack.c.l.b16 %v3464
        %v3545 = vunpack.c.l.b16 %v3465
        %v3546 = vunpack.c.l.b16 %v3466
        %v3547 = vunpack.c.l.b16 %v3467
        %v3548 = vunpack.c.l.b16 %v3468
        %v3549 = vunpack.c.l.b16 %v3469
        %v3550 = vunpack.c.l.b16 %v3470
        %v3551 = vpack.c.b16 %v3512, %v3511
        %v3552 = vpack.c.b16 %v3514, %v3513
        %v3553 = vpack.c.b16 %v3516, %v3515
        %v3554 = vpack.c.b16 %v3518, %v3517
        %v3555 = vpack.c.b16 %v3520, %v3519
        %v3556 = vpack.c.b16 %v3522, %v3521
        %v3557 = vpack.c.b16 %v3524, %v3523
        %v3558 = vpack.c.b16 %v3526, %v3525
        %v3559 = vpack.c.b16 %v3528, %v3527
        %v3560 = vpack.c.b16 %v3530, %v3529
        %v3561 = vpack.c.b16 %v3532, %v3531
        %v3562 = vpack.c.b16 %v3534, %v3533
        %v3563 = vpack.c.b16 %v3536, %v3535
        %v3564 = vpack.c.b16 %v3538, %v3537
        %v3565 = vpack.c.b16 %v3540, %v3539
        %v3566 = vpack.c.b16 %v3542, %v3541
        %v3567 = vpack.c.b16 %v3544, %v3543
        %v3568 = vpack.c.b16 %v3546, %v3545
        %v3569 = vpack.c.b16 %v3548, %v3547
        %v3570 = vpack.c.b16 %v3550, %v3549
        %v3592 = vsel %vm529, %v3429, 0
        %3594 = vmatprep.subr.bf16.mxu0 0
        %3595 = vmatpush1.bf16.msra.mxu0 %v3558
        %3596 = vmatprep.subr.bf16.mxu0 0
        %3597 = vmatpush1.bf16.msra.mxu0 %v3557
        %3598 = vmatprep.subr.bf16.mxu0 0
        %3599 = vmatpush1.bf16.msra.mxu0 %v3556
        %3600 = vmatprep.subr.bf16.mxu0 0
        %3601 = vmatpush1.bf16.msra.mxu0 %v3555
        %3602 = vmatprep.subr.bf16.mxu0 0
        %3603 = vmatpush1.bf16.msra.mxu0 %v3554
        %3604 = vmatprep.subr.bf16.mxu0 0
        %3605 = vmatpush1.bf16.msra.mxu0 %v3553
        %3606 = vmatprep.subr.bf16.mxu0 0
        %3607 = vmatpush1.bf16.msra.mxu0 %v3552
        %3608 = vmatprep.subr.bf16.mxu0 0
        %3609 = vmatpush1.bf16.msra.mxu0 %v3551
        %3610 = vmatprep.subr.bf16.mxu0 0
        %3611 = vmatpush2.bf16.msra.mxu0 %v3566
        %3612 = vmatprep.subr.bf16.mxu0 0
        %3613 = vmatpush2.bf16.msra.mxu0 %v3565
        %3614 = vmatprep.subr.bf16.mxu0 0
        %3615 = vmatpush2.bf16.msra.mxu0 %v3564
        %3616 = vmatprep.subr.bf16.mxu0 0
        %3617 = vmatpush2.bf16.msra.mxu0 %v3563
        %3618 = vmatprep.subr.bf16.mxu0 0
        %3619 = vmatpush2.bf16.msra.mxu0 %v3562
        %3620 = vmatprep.subr.bf16.mxu0 0
        %3621 = vmatpush2.bf16.msra.mxu0 %v3561
        %3622 = vmatprep.subr.bf16.mxu0 0
        %3623 = vmatpush2.bf16.msra.mxu0 %v3560
        %3624 = vmatprep.subr.bf16.mxu0 0
        %3625 = vmatpush2.bf16.msra.mxu0 %v3559
        %3626 = vmatprep.mubr.bf16.mxu0 %v3428
        %3627 = vmatmul.mubr.bf16.gmra.mxu0 %v3427
        %v3628 = vpop.f32.mrf.mxu0
        %v3629 = vadd.f32 0.0, %v3628
        %v3630 = vpop.f32.mrf.mxu0
        %v3631 = vpop.f32.mrf.mxu0
        %v3632 = vpop.f32.mrf.mxu0
        %3633 = vdwg.mxu0
        %3634 = vmatprep.subr.bf16.mxu0 0
        %3635 = vmatpush1.bf16.msra.mxu0 0
        %3636 = vmatprep.subr.bf16.mxu0 0
        %3637 = vmatpush1.bf16.msra.mxu0 0
        %3638 = vmatprep.subr.bf16.mxu0 0
        %3639 = vmatpush1.bf16.msra.mxu0 0
        %3640 = vmatprep.subr.bf16.mxu0 0
        %3641 = vmatpush1.bf16.msra.mxu0 0
        %3642 = vmatprep.subr.bf16.mxu0 0
        %3643 = vmatpush1.bf16.msra.mxu0 %v3570
        %3644 = vmatprep.subr.bf16.mxu0 0
        %3645 = vmatpush1.bf16.msra.mxu0 %v3569
        %3646 = vmatprep.subr.bf16.mxu0 0
        %3647 = vmatpush1.bf16.msra.mxu0 %v3568
        %3648 = vmatprep.subr.bf16.mxu0 0
        %3649 = vmatpush1.bf16.msra.mxu0 %v3567
        %3650 = vmatprep.subr.bf16.mxu0 0
        %3651 = vmatpush2.bf16.msra.mxu0 0
        %3652 = vmatprep.subr.bf16.mxu0 0
        %3653 = vmatpush2.bf16.msra.mxu0 0
        %3654 = vmatprep.subr.bf16.mxu0 0
        %3655 = vmatpush2.bf16.msra.mxu0 0
        %3656 = vmatprep.subr.bf16.mxu0 0
        %3657 = vmatpush2.bf16.msra.mxu0 0
        %3658 = vmatprep.subr.bf16.mxu0 0
        %3659 = vmatpush2.bf16.msra.mxu0 0
        %3660 = vmatprep.subr.bf16.mxu0 0
        %3661 = vmatpush2.bf16.msra.mxu0 0
        %3662 = vmatprep.subr.bf16.mxu0 0
        %3663 = vmatpush2.bf16.msra.mxu0 0
        %3664 = vmatprep.subr.bf16.mxu0 0
        %3665 = vmatpush2.bf16.msra.mxu0 0
        %3666 = vmatprep.mubr.bf16.mxu0 0
        %3667 = vmatmul.mubr.bf16.gmra.mxu0 %v3592
        %v3668 = vpop.f32.mrf.mxu0
        %v3669 = vadd.f32 %v3629, %v3668
        %v3670 = vpop.f32.mrf.mxu0
        %v3671 = vpop.f32.mrf.mxu0
        %v3672 = vpop.f32.mrf.mxu0
        %3673 = vdwg.mxu0
        %v3714 = vunpack.c.l.b16 %v3301
        %v3715 = vunpack.c.l.b16 %v3302
        %v3716 = vunpack.c.l.b16 %v3303
        %v3717 = vunpack.c.l.b16 %v3304
        %v3718 = vunpack.c.l.b16 %v3305
        %v3719 = vunpack.c.l.b16 %v3306
        %v3720 = vunpack.c.l.b16 %v3307
        %v3721 = vunpack.c.l.b16 %v3308
        %v3722 = vunpack.c.l.b16 %v3309
        %v3723 = vunpack.c.l.b16 %v3310
        %v3724 = vunpack.c.l.b16 %v3311
        %v3725 = vunpack.c.l.b16 %v3312
        %v3726 = vunpack.c.l.b16 %v3313
        %v3727 = vunpack.c.l.b16 %v3314
        %v3728 = vunpack.c.l.b16 %v3315
        %v3729 = vunpack.c.l.b16 %v3316
        %v3730 = vunpack.c.l.b16 %v3317
        %v3731 = vunpack.c.l.b16 %v3318
        %v3732 = vunpack.c.l.b16 %v3319
        %v3733 = vunpack.c.l.b16 %v3320
        %v3734 = vunpack.c.l.b16 %v3321
        %v3735 = vunpack.c.l.b16 %v3322
        %v3736 = vunpack.c.l.b16 %v3323
        %v3737 = vunpack.c.l.b16 %v3324
        %v3738 = vunpack.c.l.b16 %v3325
        %v3739 = vunpack.c.l.b16 %v3326
        %v3740 = vunpack.c.l.b16 %v3327
        %v3741 = vunpack.c.l.b16 %v3328
        %v3742 = vunpack.c.l.b16 %v3329
        %v3743 = vunpack.c.l.b16 %v3330
        %v3744 = vunpack.c.l.b16 %v3331
        %v3745 = vunpack.c.l.b16 %v3332
        %v3746 = vunpack.c.l.b16 %v3333
        %v3747 = vunpack.c.l.b16 %v3334
        %v3748 = vunpack.c.l.b16 %v3335
        %v3749 = vunpack.c.l.b16 %v3336
        %v3750 = vunpack.c.l.b16 %v3337
        %v3751 = vunpack.c.l.b16 %v3338
        %v3752 = vunpack.c.l.b16 %v3339
        %v3753 = vunpack.c.l.b16 %v3340
        %v3754 = vpack.c.b16 %v3715, %v3714
        %v3755 = vpack.c.b16 %v3717, %v3716
        %v3756 = vpack.c.b16 %v3719, %v3718
        %v3757 = vpack.c.b16 %v3721, %v3720
        %v3758 = vpack.c.b16 %v3723, %v3722
        %v3759 = vpack.c.b16 %v3725, %v3724
        %v3760 = vpack.c.b16 %v3727, %v3726
        %v3761 = vpack.c.b16 %v3729, %v3728
        %v3762 = vpack.c.b16 %v3731, %v3730
        %v3763 = vpack.c.b16 %v3733, %v3732
        %v3764 = vpack.c.b16 %v3735, %v3734
        %v3765 = vpack.c.b16 %v3737, %v3736
        %v3766 = vpack.c.b16 %v3739, %v3738
        %v3767 = vpack.c.b16 %v3741, %v3740
        %v3768 = vpack.c.b16 %v3743, %v3742
        %v3769 = vpack.c.b16 %v3745, %v3744
        %v3770 = vpack.c.b16 %v3747, %v3746
        %v3771 = vpack.c.b16 %v3749, %v3748
        %v3772 = vpack.c.b16 %v3751, %v3750
        %v3773 = vpack.c.b16 %v3753, %v3752
        %v3795 = vsel %vm529, %v3300, 0
        %3797 = vmatprep.subr.bf16.mxu0 0
        %3798 = vmatpush1.bf16.msra.mxu0 %v3761
        %3799 = vmatprep.subr.bf16.mxu0 0
        %3800 = vmatpush1.bf16.msra.mxu0 %v3760
        %3801 = vmatprep.subr.bf16.mxu0 0
        %3802 = vmatpush1.bf16.msra.mxu0 %v3759
        %3803 = vmatprep.subr.bf16.mxu0 0
        %3804 = vmatpush1.bf16.msra.mxu0 %v3758
        %3805 = vmatprep.subr.bf16.mxu0 0
        %3806 = vmatpush1.bf16.msra.mxu0 %v3757
        %3807 = vmatprep.subr.bf16.mxu0 0
        %3808 = vmatpush1.bf16.msra.mxu0 %v3756
        %3809 = vmatprep.subr.bf16.mxu0 0
        %3810 = vmatpush1.bf16.msra.mxu0 %v3755
        %3811 = vmatprep.subr.bf16.mxu0 0
        %3812 = vmatpush1.bf16.msra.mxu0 %v3754
        %3813 = vmatprep.subr.bf16.mxu0 0
        %3814 = vmatpush2.bf16.msra.mxu0 %v3769
        %3815 = vmatprep.subr.bf16.mxu0 0
        %3816 = vmatpush2.bf16.msra.mxu0 %v3768
        %3817 = vmatprep.subr.bf16.mxu0 0
        %3818 = vmatpush2.bf16.msra.mxu0 %v3767
        %3819 = vmatprep.subr.bf16.mxu0 0
        %3820 = vmatpush2.bf16.msra.mxu0 %v3766
        %3821 = vmatprep.subr.bf16.mxu0 0
        %3822 = vmatpush2.bf16.msra.mxu0 %v3765
        %3823 = vmatprep.subr.bf16.mxu0 0
        %3824 = vmatpush2.bf16.msra.mxu0 %v3764
        %3825 = vmatprep.subr.bf16.mxu0 0
        %3826 = vmatpush2.bf16.msra.mxu0 %v3763
        %3827 = vmatprep.subr.bf16.mxu0 0
        %3828 = vmatpush2.bf16.msra.mxu0 %v3762
        %3829 = vmatprep.mubr.bf16.mxu0 %v3299
        %3830 = vmatmul.mubr.bf16.gmra.mxu0 %v3298
        %v3831 = vpop.f32.mrf.mxu0
        %v3832 = vadd.f32 %v3669, %v3831
        %v3833 = vpop.f32.mrf.mxu0
        %v3834 = vpop.f32.mrf.mxu0
        %v3835 = vpop.f32.mrf.mxu0
        %3836 = vdwg.mxu0
        %3837 = vmatprep.subr.bf16.mxu0 0
        %3838 = vmatpush1.bf16.msra.mxu0 0
        %3839 = vmatprep.subr.bf16.mxu0 0
        %3840 = vmatpush1.bf16.msra.mxu0 0
        %3841 = vmatprep.subr.bf16.mxu0 0
        %3842 = vmatpush1.bf16.msra.mxu0 0
        %3843 = vmatprep.subr.bf16.mxu0 0
        %3844 = vmatpush1.bf16.msra.mxu0 0
        %3845 = vmatprep.subr.bf16.mxu0 0
        %3846 = vmatpush1.bf16.msra.mxu0 %v3773
        %3847 = vmatprep.subr.bf16.mxu0 0
        %3848 = vmatpush1.bf16.msra.mxu0 %v3772
        %3849 = vmatprep.subr.bf16.mxu0 0
        %3850 = vmatpush1.bf16.msra.mxu0 %v3771
        %3851 = vmatprep.subr.bf16.mxu0 0
        %3852 = vmatpush1.bf16.msra.mxu0 %v3770
        %3853 = vmatprep.subr.bf16.mxu0 0
        %3854 = vmatpush2.bf16.msra.mxu0 0
        %3855 = vmatprep.subr.bf16.mxu0 0
        %3856 = vmatpush2.bf16.msra.mxu0 0
        %3857 = vmatprep.subr.bf16.mxu0 0
        %3858 = vmatpush2.bf16.msra.mxu0 0
        %3859 = vmatprep.subr.bf16.mxu0 0
        %3860 = vmatpush2.bf16.msra.mxu0 0
        %3861 = vmatprep.subr.bf16.mxu0 0
        %3862 = vmatpush2.bf16.msra.mxu0 0
        %3863 = vmatprep.subr.bf16.mxu0 0
        %3864 = vmatpush2.bf16.msra.mxu0 0
        %3865 = vmatprep.subr.bf16.mxu0 0
        %3866 = vmatpush2.bf16.msra.mxu0 0
        %3867 = vmatprep.subr.bf16.mxu0 0
        %3868 = vmatpush2.bf16.msra.mxu0 0
        %3869 = vmatprep.mubr.bf16.mxu0 0
        %3870 = vmatmul.mubr.bf16.gmra.mxu0 %v3795
        %v3871 = vpop.f32.mrf.mxu0
        %v3872 = vadd.f32 %v3832, %v3871
        %v3873 = vpop.f32.mrf.mxu0
        %v3874 = vpop.f32.mrf.mxu0
        %v3875 = vpop.f32.mrf.mxu0
        %3876 = vdwg.mxu0
        %s3877 = scalar_lea.vmem %s7, 4
        %v3878 = vld [vmem:[%s3877] sm:$0x3]
        %v3880 = vsel %vm3203, %v3878, 0
        %3882 = vmatprep.subr.bf16.mxu0 0
        %3883 = vmatpush1.bf16.msra.mxu0 0
        %3884 = vmatprep.subr.bf16.mxu0 0
        %3885 = vmatpush1.bf16.msra.mxu0 0
        %3886 = vmatprep.subr.bf16.mxu0 0
        %3887 = vmatpush1.bf16.msra.mxu0 0
        %3888 = vmatprep.subr.bf16.mxu0 0
        %3889 = vmatpush1.bf16.msra.mxu0 0
        %3890 = vmatprep.subr.bf16.mxu0 0
        %3891 = vmatpush1.bf16.msra.mxu0 0
        %3892 = vmatprep.subr.bf16.mxu0 0
        %3893 = vmatpush1.bf16.msra.mxu0 0
        %3894 = vmatprep.subr.bf16.mxu0 0
        %3895 = vmatpush1.bf16.msra.mxu0 0
        %3896 = vmatprep.subr.bf16.mxu0 %v3212
        %3897 = vmatpush1.bf16.msra.mxu0 %v3209
        %3898 = vmatprep.subr.bf16.mxu0 0
        %3899 = vmatpush2.bf16.msra.mxu0 0
        %3900 = vmatprep.subr.bf16.mxu0 0
        %3901 = vmatpush2.bf16.msra.mxu0 0
        %3902 = vmatprep.subr.bf16.mxu0 0
        %3903 = vmatpush2.bf16.msra.mxu0 0
        %3904 = vmatprep.subr.bf16.mxu0 0
        %3905 = vmatpush2.bf16.msra.mxu0 0
        %3906 = vmatprep.subr.bf16.mxu0 0
        %3907 = vmatpush2.bf16.msra.mxu0 0
        %3908 = vmatprep.subr.bf16.mxu0 0
        %3909 = vmatpush2.bf16.msra.mxu0 0
        %3910 = vmatprep.subr.bf16.mxu0 0
        %3911 = vmatpush2.bf16.msra.mxu0 0
        %3912 = vmatprep.subr.bf16.mxu0 0
        %3913 = vmatpush2.bf16.msra.mxu0 0
        %3914 = vmatprep.mubr.bf16.mxu0 0
        %3915 = vmatmul.mubr.bf16.gmra.mxu0 %v3880
        %v3916 = vpop.f32.mrf.mxu0
        %v3917 = vadd.f32 0.0, %v3916
        %v3918 = vpop.f32.mrf.mxu0
        %v3919 = vadd.f32 0.0, %v3918
        %v3920 = vpop.f32.mrf.mxu0
        %v3921 = vpop.f32.mrf.mxu0
        %3922 = vdwg.mxu0
        %3923 = vmatprep.subr.bf16.mxu0 0
        %3924 = vmatpush1.bf16.msra.mxu0 0
        %3925 = vmatprep.subr.bf16.mxu0 0
        %3926 = vmatpush1.bf16.msra.mxu0 0
        %3927 = vmatprep.subr.bf16.mxu0 0
        %3928 = vmatpush1.bf16.msra.mxu0 0
        %3929 = vmatprep.subr.bf16.mxu0 0
        %3930 = vmatpush1.bf16.msra.mxu0 0
        %3931 = vmatprep.subr.bf16.mxu0 0
        %3932 = vmatpush1.bf16.msra.mxu0 0
        %3933 = vmatprep.subr.bf16.mxu0 0
        %3934 = vmatpush1.bf16.msra.mxu0 0
        %3935 = vmatprep.subr.bf16.mxu0 0
        %3936 = vmatpush1.bf16.msra.mxu0 0
        %3937 = vmatprep.subr.bf16.mxu0 0
        %3938 = vmatpush1.bf16.msra.mxu0 %v3215
        %3939 = vmatprep.subr.bf16.mxu0 0
        %3940 = vmatpush2.bf16.msra.mxu0 0
        %3941 = vmatprep.subr.bf16.mxu0 0
        %3942 = vmatpush2.bf16.msra.mxu0 0
        %3943 = vmatprep.subr.bf16.mxu0 0
        %3944 = vmatpush2.bf16.msra.mxu0 0
        %3945 = vmatprep.subr.bf16.mxu0 0
        %3946 = vmatpush2.bf16.msra.mxu0 0
        %3947 = vmatprep.subr.bf16.mxu0 0
        %3948 = vmatpush2.bf16.msra.mxu0 0
        %3949 = vmatprep.subr.bf16.mxu0 0
        %3950 = vmatpush2.bf16.msra.mxu0 0
        %3951 = vmatprep.subr.bf16.mxu0 0
        %3952 = vmatpush2.bf16.msra.mxu0 0
        %3953 = vmatprep.subr.bf16.mxu0 0
        %3954 = vmatpush2.bf16.msra.mxu0 0
        %3955 = vmatprep.mubr.bf16.mxu0 0
        %3956 = vmatmul.mubr.bf16.gmra.mxu0 %v3880
        %v3957 = vpop.f32.mrf.mxu0
        %v3958 = vadd.f32 0.0, %v3957
        %v3959 = vpop.f32.mrf.mxu0
        %v3960 = vpop.f32.mrf.mxu0
        %v3961 = vpop.f32.mrf.mxu0
        %3962 = vdwg.mxu0
        %v3963 = vpack.c.bf16 %v3917, %v3917
        %v3964 = vpack.c.bf16 %v3919, %v3919
        %v3965 = vpack.c.bf16 %v3958, %v3958
        %s3966 = scalar_lea.vmem [#allocation5], 320
        %v3967 = vld [vmem:[%s3966] sm:$0xf]
        %v3968 = vld [vmem:[%s3966 + $0x4] sm:$0xf]
        %v3969 = vld [vmem:[%s3966 + $0x8] sm:$0xf]
        %v3970 = vld [vmem:[%s3966 + $0xc] sm:$0xf]
        %v3971 = vld [vmem:[%s3966 + $0x10] sm:$0xf]
        %v3972 = vld [vmem:[%s3966 + $0x14] sm:$0xf]
        %v3973 = vld [vmem:[%s3966 + $0x18] sm:$0xf]
        %v3974 = vld [vmem:[%s3966 + $0x1c] sm:$0xf]
        %v3975 = vld [vmem:[%s3966 + $0x20] sm:$0xf]
        %v3976 = vld [vmem:[%s3966 + $0x24] sm:$0xf]
        %v3977 = vld [vmem:[%s3966 + $0x28] sm:$0xf]
        %v3978 = vld [vmem:[%s3966 + $0x2c] sm:$0xf]
        %v3979 = vld [vmem:[%s3966 + $0x30] sm:$0xf]
        %v3980 = vld [vmem:[%s3966 + $0x34] sm:$0xf]
        %v3981 = vld [vmem:[%s3966 + $0x38] sm:$0xf]
        %v3982 = vld [vmem:[%s3966 + $0x3c] sm:$0xf]
        %v3983 = vld [vmem:[%s3966 + $0x40] sm:$0xf]
        %v3984 = vld [vmem:[%s3966 + $0x44] sm:$0xf]
        %v3985 = vld [vmem:[%s3966 + $0x48] sm:$0xf]
        %v3986 = vld [vmem:[%s3966 + $0x4c] sm:$0xf]
        %v3987 = vld [vmem:[%s3966 + $0x50] sm:$0xf]
        %v3988 = vld [vmem:[%s3966 + $0x54] sm:$0xf]
        %v3989 = vld [vmem:[%s3966 + $0x58] sm:$0xf]
        %v3990 = vld [vmem:[%s3966 + $0x5c] sm:$0xf]
        %v3991 = vld [vmem:[%s3966 + $0x60] sm:$0xf]
        %v3992 = vld [vmem:[%s3966 + $0x64] sm:$0xf]
        %v3993 = vld [vmem:[%s3966 + $0x68] sm:$0xf]
        %v3994 = vld [vmem:[%s3966 + $0x6c] sm:$0xf]
        %v3995 = vld [vmem:[%s3966 + $0x70] sm:$0xf]
        %v3996 = vld [vmem:[%s3966 + $0x74] sm:$0xf]
        %v3997 = vld [vmem:[%s3966 + $0x78] sm:$0xf]
        %v3998 = vld [vmem:[%s3966 + $0x7c] sm:$0xf]
        %v3999 = vld [vmem:[%s3966 + $0x80] sm:$0xf]
        %v4000 = vld [vmem:[%s3966 + $0x84] sm:$0xf]
        %v4001 = vld [vmem:[%s3966 + $0x88] sm:$0xf]
        %v4002 = vld [vmem:[%s3966 + $0x8c] sm:$0xf]
        %v4003 = vld [vmem:[%s3966 + $0x90] sm:$0xf]
        %v4004 = vld [vmem:[%s3966 + $0x94] sm:$0xf]
        %v4005 = vld [vmem:[%s3966 + $0x98] sm:$0xf]
        %v4006 = vld [vmem:[%s3966 + $0x9c] sm:$0xf]
        %v4047 = vunpack.c.l.b16 %v3967
        %v4048 = vunpack.c.l.b16 %v3968
        %v4049 = vunpack.c.l.b16 %v3969
        %v4050 = vunpack.c.l.b16 %v3970
        %v4051 = vunpack.c.l.b16 %v3971
        %v4052 = vunpack.c.l.b16 %v3972
        %v4053 = vunpack.c.l.b16 %v3973
        %v4054 = vunpack.c.l.b16 %v3974
        %v4055 = vunpack.c.l.b16 %v3975
        %v4056 = vunpack.c.l.b16 %v3976
        %v4057 = vunpack.c.l.b16 %v3977
        %v4058 = vunpack.c.l.b16 %v3978
        %v4059 = vunpack.c.l.b16 %v3979
        %v4060 = vunpack.c.l.b16 %v3980
        %v4061 = vunpack.c.l.b16 %v3981
        %v4062 = vunpack.c.l.b16 %v3982
        %v4063 = vunpack.c.l.b16 %v3983
        %v4064 = vunpack.c.l.b16 %v3984
        %v4065 = vunpack.c.l.b16 %v3985
        %v4066 = vunpack.c.l.b16 %v3986
        %v4067 = vunpack.c.l.b16 %v3987
        %v4068 = vunpack.c.l.b16 %v3988
        %v4069 = vunpack.c.l.b16 %v3989
        %v4070 = vunpack.c.l.b16 %v3990
        %v4071 = vunpack.c.l.b16 %v3991
        %v4072 = vunpack.c.l.b16 %v3992
        %v4073 = vunpack.c.l.b16 %v3993
        %v4074 = vunpack.c.l.b16 %v3994
        %v4075 = vunpack.c.l.b16 %v3995
        %v4076 = vunpack.c.l.b16 %v3996
        %v4077 = vunpack.c.l.b16 %v3997
        %v4078 = vunpack.c.l.b16 %v3998
        %v4079 = vunpack.c.l.b16 %v3999
        %v4080 = vunpack.c.l.b16 %v4000
        %v4081 = vunpack.c.l.b16 %v4001
        %v4082 = vunpack.c.l.b16 %v4002
        %v4083 = vunpack.c.l.b16 %v4003
        %v4084 = vunpack.c.l.b16 %v4004
        %v4085 = vunpack.c.l.b16 %v4005
        %v4086 = vunpack.c.l.b16 %v4006
        %v4087 = vpack.c.b16 %v4048, %v4047
        %v4088 = vpack.c.b16 %v4050, %v4049
        %v4089 = vpack.c.b16 %v4052, %v4051
        %v4090 = vpack.c.b16 %v4054, %v4053
        %v4091 = vpack.c.b16 %v4056, %v4055
        %v4092 = vpack.c.b16 %v4058, %v4057
        %v4093 = vpack.c.b16 %v4060, %v4059
        %v4094 = vpack.c.b16 %v4062, %v4061
        %v4095 = vpack.c.b16 %v4064, %v4063
        %v4096 = vpack.c.b16 %v4066, %v4065
        %v4097 = vpack.c.b16 %v4068, %v4067
        %v4098 = vpack.c.b16 %v4070, %v4069
        %v4099 = vpack.c.b16 %v4072, %v4071
        %v4100 = vpack.c.b16 %v4074, %v4073
        %v4101 = vpack.c.b16 %v4076, %v4075
        %v4102 = vpack.c.b16 %v4078, %v4077
        %v4103 = vpack.c.b16 %v4080, %v4079
        %v4104 = vpack.c.b16 %v4082, %v4081
        %v4105 = vpack.c.b16 %v4084, %v4083
        %v4106 = vpack.c.b16 %v4086, %v4085
        %v4128 = vsel %vm529, %v3965, 0
        %4130 = vmatprep.subr.bf16.mxu0 0
        %4131 = vmatpush1.bf16.msra.mxu0 %v4094
        %4132 = vmatprep.subr.bf16.mxu0 0
        %4133 = vmatpush1.bf16.msra.mxu0 %v4093
        %4134 = vmatprep.subr.bf16.mxu0 0
        %4135 = vmatpush1.bf16.msra.mxu0 %v4092
        %4136 = vmatprep.subr.bf16.mxu0 0
        %4137 = vmatpush1.bf16.msra.mxu0 %v4091
        %4138 = vmatprep.subr.bf16.mxu0 0
        %4139 = vmatpush1.bf16.msra.mxu0 %v4090
        %4140 = vmatprep.subr.bf16.mxu0 0
        %4141 = vmatpush1.bf16.msra.mxu0 %v4089
        %4142 = vmatprep.subr.bf16.mxu0 0
        %4143 = vmatpush1.bf16.msra.mxu0 %v4088
        %4144 = vmatprep.subr.bf16.mxu0 0
        %4145 = vmatpush1.bf16.msra.mxu0 %v4087
        %4146 = vmatprep.subr.bf16.mxu0 0
        %4147 = vmatpush2.bf16.msra.mxu0 %v4102
        %4148 = vmatprep.subr.bf16.mxu0 0
        %4149 = vmatpush2.bf16.msra.mxu0 %v4101
        %4150 = vmatprep.subr.bf16.mxu0 0
        %4151 = vmatpush2.bf16.msra.mxu0 %v4100
        %4152 = vmatprep.subr.bf16.mxu0 0
        %4153 = vmatpush2.bf16.msra.mxu0 %v4099
        %4154 = vmatprep.subr.bf16.mxu0 0
        %4155 = vmatpush2.bf16.msra.mxu0 %v4098
        %4156 = vmatprep.subr.bf16.mxu0 0
        %4157 = vmatpush2.bf16.msra.mxu0 %v4097
        %4158 = vmatprep.subr.bf16.mxu0 0
        %4159 = vmatpush2.bf16.msra.mxu0 %v4096
        %4160 = vmatprep.subr.bf16.mxu0 0
        %4161 = vmatpush2.bf16.msra.mxu0 %v4095
        %4162 = vmatprep.mubr.bf16.mxu0 %v3964
        %4163 = vmatmul.mubr.bf16.gmra.mxu0 %v3963
        %v4164 = vpop.f32.mrf.mxu0
        %v4165 = vadd.f32 0.0, %v4164
        %v4166 = vpop.f32.mrf.mxu0
        %v4167 = vpop.f32.mrf.mxu0
        %v4168 = vpop.f32.mrf.mxu0
        %4169 = vdwg.mxu0
        %4170 = vmatprep.subr.bf16.mxu0 0
        %4171 = vmatpush1.bf16.msra.mxu0 0
        %4172 = vmatprep.subr.bf16.mxu0 0
        %4173 = vmatpush1.bf16.msra.mxu0 0
        %4174 = vmatprep.subr.bf16.mxu0 0
        %4175 = vmatpush1.bf16.msra.mxu0 0
        %4176 = vmatprep.subr.bf16.mxu0 0
        %4177 = vmatpush1.bf16.msra.mxu0 0
        %4178 = vmatprep.subr.bf16.mxu0 0
        %4179 = vmatpush1.bf16.msra.mxu0 %v4106
        %4180 = vmatprep.subr.bf16.mxu0 0
        %4181 = vmatpush1.bf16.msra.mxu0 %v4105
        %4182 = vmatprep.subr.bf16.mxu0 0
        %4183 = vmatpush1.bf16.msra.mxu0 %v4104
        %4184 = vmatprep.subr.bf16.mxu0 0
        %4185 = vmatpush1.bf16.msra.mxu0 %v4103
        %4186 = vmatprep.subr.bf16.mxu0 0
        %4187 = vmatpush2.bf16.msra.mxu0 0
        %4188 = vmatprep.subr.bf16.mxu0 0
        %4189 = vmatpush2.bf16.msra.mxu0 0
        %4190 = vmatprep.subr.bf16.mxu0 0
        %4191 = vmatpush2.bf16.msra.mxu0 0
        %4192 = vmatprep.subr.bf16.mxu0 0
        %4193 = vmatpush2.bf16.msra.mxu0 0
        %4194 = vmatprep.subr.bf16.mxu0 0
        %4195 = vmatpush2.bf16.msra.mxu0 0
        %4196 = vmatprep.subr.bf16.mxu0 0
        %4197 = vmatpush2.bf16.msra.mxu0 0
        %4198 = vmatprep.subr.bf16.mxu0 0
        %4199 = vmatpush2.bf16.msra.mxu0 0
        %4200 = vmatprep.subr.bf16.mxu0 0
        %4201 = vmatpush2.bf16.msra.mxu0 0
        %4202 = vmatprep.mubr.bf16.mxu0 0
        %4203 = vmatmul.mubr.bf16.gmra.mxu0 %v4128
        %v4204 = vpop.f32.mrf.mxu0
        %v4205 = vadd.f32 %v4165, %v4204
        %v4206 = vpop.f32.mrf.mxu0
        %v4207 = vpop.f32.mrf.mxu0
        %v4208 = vpop.f32.mrf.mxu0
        %4209 = vdwg.mxu0
        %v4210 = vadd.f32 %v3872, %v4205
        %v4211 = vld [vmem:[%s8] sm:$0x1]
        %v4213 = vlaneseq
        %v4214 = vshrl.u32 %v4213, 7
        %v4215 = vsub.s32 0, %v4214
        %v4216 = vrot.slane %v4211, %v4215
        %v4218 = vadd.f32 %v4210, %v4216
        %vm4219 = vcmp.ge.f32.partialorder %v4218, 0.0
        %v4220 = vmul.f32 %v4218, 0.01
        %v4221 = vsel %vm4219, %v4218, %v4220
        %4223 = vrot.lane.b32.xlu0 %v4221, 32
        %v4224 = vpop.permute.xlu0 %4223
        %v4226 = vsel %vm1018, 0.0, %v4224
        %v4227 = vsel %vm1018, %v4224, 0.0
        %v4230 = vrot.slane %v4226, 7
        %v4231 = vrot.slane %v4227, 7
        %v4234 = vsel %vm3192, 0.0, %v4230
        %v4235 = vsel %vm3192, 0.0, %v4231
        %v4236 = vsel %vm3207, %v4234, 0.0
        %v4237 = vsel %vm3207, %v4235, 0.0
        %v4238 = vpack.c.bf16 %v4236, %v4236
        %v4239 = vpack.c.bf16 %v4237, %v4237
        %v4240 = vld [vmem:[%s9] sm:$0xf]
        %v4241 = vld [vmem:[%s9 + $0x4] sm:$0xf]
        %v4242 = vld [vmem:[%s9 + $0x8] sm:$0xf]
        %v4243 = vld [vmem:[%s9 + $0xc] sm:$0xf]
        %v4244 = vld [vmem:[%s9 + $0x10] sm:$0xf]
        %v4245 = vld [vmem:[%s9 + $0x14] sm:$0xf]
        %v4246 = vld [vmem:[%s9 + $0x18] sm:$0xf]
        %v4247 = vld [vmem:[%s9 + $0x1c] sm:$0xf]
        %v4248 = vld [vmem:[%s9 + $0x20] sm:$0xf]
        %v4249 = vld [vmem:[%s9 + $0x24] sm:$0xf]
        %v4250 = vld [vmem:[%s9 + $0x28] sm:$0xf]
        %v4251 = vld [vmem:[%s9 + $0x2c] sm:$0xf]
        %v4252 = vld [vmem:[%s9 + $0x30] sm:$0xf]
        %v4253 = vld [vmem:[%s9 + $0x34] sm:$0xf]
        %v4254 = vld [vmem:[%s9 + $0x38] sm:$0xf]
        %v4255 = vld [vmem:[%s9 + $0x3c] sm:$0xf]
        %v4256 = vld [vmem:[%s9 + $0x40] sm:$0xf]
        %v4257 = vld [vmem:[%s9 + $0x44] sm:$0xf]
        %v4258 = vld [vmem:[%s9 + $0x48] sm:$0xf]
        %v4259 = vld [vmem:[%s9 + $0x4c] sm:$0xf]
        %v4260 = vld [vmem:[%s9 + $0x50] sm:$0xf]
        %v4261 = vld [vmem:[%s9 + $0x54] sm:$0xf]
        %v4262 = vld [vmem:[%s9 + $0x58] sm:$0xf]
        %v4263 = vld [vmem:[%s9 + $0x5c] sm:$0xf]
        %s4264 = scalar_lea.vmem %s9, 96
        %v4265 = vld [vmem:[%s4264] sm:$0xf]
        %v4266 = vld [vmem:[%s4264 + $0x4] sm:$0xf]
        %v4267 = vld [vmem:[%s4264 + $0x8] sm:$0xf]
        %v4268 = vld [vmem:[%s4264 + $0xc] sm:$0xf]
        %v4269 = vld [vmem:[%s4264 + $0x10] sm:$0xf]
        %v4270 = vld [vmem:[%s4264 + $0x14] sm:$0xf]
        %v4271 = vld [vmem:[%s4264 + $0x18] sm:$0xf]
        %v4272 = vld [vmem:[%s4264 + $0x1c] sm:$0xf]
        %v4273 = vld [vmem:[%s4264 + $0x20] sm:$0xf]
        %v4274 = vld [vmem:[%s4264 + $0x24] sm:$0xf]
        %v4275 = vld [vmem:[%s4264 + $0x28] sm:$0xf]
        %v4276 = vld [vmem:[%s4264 + $0x2c] sm:$0xf]
        %v4277 = vld [vmem:[%s4264 + $0x30] sm:$0xf]
        %v4278 = vld [vmem:[%s4264 + $0x34] sm:$0xf]
        %v4279 = vld [vmem:[%s4264 + $0x38] sm:$0xf]
        %v4280 = vld [vmem:[%s4264 + $0x3c] sm:$0xf]
        %v4281 = vld [vmem:[%s4264 + $0x40] sm:$0xf]
        %v4282 = vld [vmem:[%s4264 + $0x44] sm:$0xf]
        %v4283 = vld [vmem:[%s4264 + $0x48] sm:$0xf]
        %v4284 = vld [vmem:[%s4264 + $0x4c] sm:$0xf]
        %v4285 = vld [vmem:[%s4264 + $0x50] sm:$0xf]
        %v4286 = vld [vmem:[%s4264 + $0x54] sm:$0xf]
        %v4287 = vld [vmem:[%s4264 + $0x58] sm:$0xf]
        %v4288 = vld [vmem:[%s4264 + $0x5c] sm:$0xf]
        %v4290 = vshrl.u32 %v4238, 16
        %v4292 = vshll.u32 %v4238, 16
        %v4294 = vrot.slane %v4292, 1
        %v4295 = vor.u32 %v4290, %v4294
        %v4297 = vshrl.u32 %v4239, 16
        %v4299 = vshll.u32 %v4239, 16
        %v4301 = vrot.slane %v4299, 1
        %v4302 = vor.u32 %v4297, %v4301
        %v4328 = vunpack.c.l.b16 %v4265
        %v4329 = vunpack.c.l.b16 %v4266
        %v4330 = vunpack.c.l.b16 %v4267
        %v4331 = vunpack.c.l.b16 %v4268
        %v4332 = vunpack.c.l.b16 %v4269
        %v4333 = vunpack.c.l.b16 %v4270
        %v4334 = vunpack.c.l.b16 %v4271
        %v4335 = vunpack.c.l.b16 %v4272
        %v4336 = vunpack.c.l.b16 %v4273
        %v4337 = vunpack.c.l.b16 %v4274
        %v4338 = vunpack.c.l.b16 %v4275
        %v4339 = vunpack.c.l.b16 %v4276
        %v4340 = vunpack.c.l.b16 %v4277
        %v4341 = vunpack.c.l.b16 %v4278
        %v4342 = vunpack.c.l.b16 %v4279
        %v4343 = vunpack.c.l.b16 %v4280
        %v4344 = vunpack.c.l.b16 %v4281
        %v4345 = vunpack.c.l.b16 %v4282
        %v4346 = vunpack.c.l.b16 %v4283
        %v4347 = vunpack.c.l.b16 %v4284
        %v4348 = vunpack.c.l.b16 %v4285
        %v4349 = vunpack.c.l.b16 %v4286
        %v4350 = vunpack.c.l.b16 %v4287
        %v4351 = vunpack.c.l.b16 %v4288
        %v4352 = vpack.c.b16 %v4329, %v4328
        %v4353 = vpack.c.b16 %v4331, %v4330
        %v4354 = vpack.c.b16 %v4333, %v4332
        %v4355 = vpack.c.b16 %v4335, %v4334
        %v4356 = vpack.c.b16 %v4337, %v4336
        %v4357 = vpack.c.b16 %v4339, %v4338
        %v4358 = vpack.c.b16 %v4341, %v4340
        %v4359 = vpack.c.b16 %v4343, %v4342
        %v4360 = vpack.c.b16 %v4345, %v4344
        %v4361 = vpack.c.b16 %v4347, %v4346
        %v4362 = vpack.c.b16 %v4349, %v4348
        %v4363 = vpack.c.b16 %v4351, %v4350
        %v4377 = vsel %vm529, %v4302, 0
        %4379 = vmatprep.subr.bf16.mxu0 0
        %4380 = vmatpush1.bf16.msra.mxu0 %v4359
        %4381 = vmatprep.subr.bf16.mxu0 0
        %4382 = vmatpush1.bf16.msra.mxu0 %v4358
        %4383 = vmatprep.subr.bf16.mxu0 0
        %4384 = vmatpush1.bf16.msra.mxu0 %v4357
        %4385 = vmatprep.subr.bf16.mxu0 0
        %4386 = vmatpush1.bf16.msra.mxu0 %v4356
        %4387 = vmatprep.subr.bf16.mxu0 0
        %4388 = vmatpush1.bf16.msra.mxu0 %v4355
        %4389 = vmatprep.subr.bf16.mxu0 0
        %4390 = vmatpush1.bf16.msra.mxu0 %v4354
        %4391 = vmatprep.subr.bf16.mxu0 0
        %4392 = vmatpush1.bf16.msra.mxu0 %v4353
        %4393 = vmatprep.subr.bf16.mxu0 0
        %4394 = vmatpush1.bf16.msra.mxu0 %v4352
        %4395 = vmatprep.subr.bf16.mxu0 0
        %4396 = vmatpush2.bf16.msra.mxu0 0
        %4397 = vmatprep.subr.bf16.mxu0 0
        %4398 = vmatpush2.bf16.msra.mxu0 0
        %4399 = vmatprep.subr.bf16.mxu0 0
        %4400 = vmatpush2.bf16.msra.mxu0 0
        %4401 = vmatprep.subr.bf16.mxu0 0
        %4402 = vmatpush2.bf16.msra.mxu0 0
        %4403 = vmatprep.subr.bf16.mxu0 0
        %4404 = vmatpush2.bf16.msra.mxu0 %v4363
        %4405 = vmatprep.subr.bf16.mxu0 0
        %4406 = vmatpush2.bf16.msra.mxu0 %v4362
        %4407 = vmatprep.subr.bf16.mxu0 0
        %4408 = vmatpush2.bf16.msra.mxu0 %v4361
        %4409 = vmatprep.subr.bf16.mxu0 0
        %4410 = vmatpush2.bf16.msra.mxu0 %v4360
        %4411 = vmatprep.mubr.bf16.mxu0 %v4377
        %4412 = vmatmul.mubr.bf16.gmra.mxu0 %v4295
        %v4413 = vpop.f32.mrf.mxu0
        %v4414 = vadd.f32 0.0, %v4413
        %v4415 = vpop.f32.mrf.mxu0
        %v4416 = vpop.f32.mrf.mxu0
        %v4417 = vpop.f32.mrf.mxu0
        %4418 = vdwg.mxu0
        %v4443 = vunpack.c.l.b16 %v4240
        %v4444 = vunpack.c.l.b16 %v4241
        %v4445 = vunpack.c.l.b16 %v4242
        %v4446 = vunpack.c.l.b16 %v4243
        %v4447 = vunpack.c.l.b16 %v4244
        %v4448 = vunpack.c.l.b16 %v4245
        %v4449 = vunpack.c.l.b16 %v4246
        %v4450 = vunpack.c.l.b16 %v4247
        %v4451 = vunpack.c.l.b16 %v4248
        %v4452 = vunpack.c.l.b16 %v4249
        %v4453 = vunpack.c.l.b16 %v4250
        %v4454 = vunpack.c.l.b16 %v4251
        %v4455 = vunpack.c.l.b16 %v4252
        %v4456 = vunpack.c.l.b16 %v4253
        %v4457 = vunpack.c.l.b16 %v4254
        %v4458 = vunpack.c.l.b16 %v4255
        %v4459 = vunpack.c.l.b16 %v4256
        %v4460 = vunpack.c.l.b16 %v4257
        %v4461 = vunpack.c.l.b16 %v4258
        %v4462 = vunpack.c.l.b16 %v4259
        %v4463 = vunpack.c.l.b16 %v4260
        %v4464 = vunpack.c.l.b16 %v4261
        %v4465 = vunpack.c.l.b16 %v4262
        %v4466 = vunpack.c.l.b16 %v4263
        %v4467 = vpack.c.b16 %v4444, %v4443
        %v4468 = vpack.c.b16 %v4446, %v4445
        %v4469 = vpack.c.b16 %v4448, %v4447
        %v4470 = vpack.c.b16 %v4450, %v4449
        %v4471 = vpack.c.b16 %v4452, %v4451
        %v4472 = vpack.c.b16 %v4454, %v4453
        %v4473 = vpack.c.b16 %v4456, %v4455
        %v4474 = vpack.c.b16 %v4458, %v4457
        %v4475 = vpack.c.b16 %v4460, %v4459
        %v4476 = vpack.c.b16 %v4462, %v4461
        %v4477 = vpack.c.b16 %v4464, %v4463
        %v4478 = vpack.c.b16 %v4466, %v4465
        %v4491 = vsel %vm529, %v4239, 0
        %4493 = vmatprep.subr.bf16.mxu0 0
        %4494 = vmatpush1.bf16.msra.mxu0 %v4474
        %4495 = vmatprep.subr.bf16.mxu0 0
        %4496 = vmatpush1.bf16.msra.mxu0 %v4473
        %4497 = vmatprep.subr.bf16.mxu0 0
        %4498 = vmatpush1.bf16.msra.mxu0 %v4472
        %4499 = vmatprep.subr.bf16.mxu0 0
        %4500 = vmatpush1.bf16.msra.mxu0 %v4471
        %4501 = vmatprep.subr.bf16.mxu0 0
        %4502 = vmatpush1.bf16.msra.mxu0 %v4470
        %4503 = vmatprep.subr.bf16.mxu0 0
        %4504 = vmatpush1.bf16.msra.mxu0 %v4469
        %4505 = vmatprep.subr.bf16.mxu0 0
        %4506 = vmatpush1.bf16.msra.mxu0 %v4468
        %4507 = vmatprep.subr.bf16.mxu0 0
        %4508 = vmatpush1.bf16.msra.mxu0 %v4467
        %4509 = vmatprep.subr.bf16.mxu0 0
        %4510 = vmatpush2.bf16.msra.mxu0 0
        %4511 = vmatprep.subr.bf16.mxu0 0
        %4512 = vmatpush2.bf16.msra.mxu0 0
        %4513 = vmatprep.subr.bf16.mxu0 0
        %4514 = vmatpush2.bf16.msra.mxu0 0
        %4515 = vmatprep.subr.bf16.mxu0 0
        %4516 = vmatpush2.bf16.msra.mxu0 0
        %4517 = vmatprep.subr.bf16.mxu0 0
        %4518 = vmatpush2.bf16.msra.mxu0 %v4478
        %4519 = vmatprep.subr.bf16.mxu0 0
        %4520 = vmatpush2.bf16.msra.mxu0 %v4477
        %4521 = vmatprep.subr.bf16.mxu0 0
        %4522 = vmatpush2.bf16.msra.mxu0 %v4476
        %4523 = vmatprep.subr.bf16.mxu0 0
        %4524 = vmatpush2.bf16.msra.mxu0 %v4475
        %4525 = vmatprep.mubr.bf16.mxu0 %v4491
        %4526 = vmatmul.mubr.bf16.gmra.mxu0 %v4238
        %v4527 = vpop.f32.mrf.mxu0
        %v4528 = vadd.f32 %v4414, %v4527
        %v4529 = vpop.f32.mrf.mxu0
        %v4530 = vpop.f32.mrf.mxu0
        %v4531 = vpop.f32.mrf.mxu0
        %4532 = vdwg.mxu0
        %s4533 = scalar_lea.vmem %s9, 192
        %v4534 = vld [vmem:[%s4533] sm:$0xf]
        %v4535 = vld [vmem:[%s4533 + $0x4] sm:$0xf]
        %v4536 = vld [vmem:[%s4533 + $0x8] sm:$0xf]
        %v4537 = vld [vmem:[%s4533 + $0xc] sm:$0xf]
        %v4538 = vld [vmem:[%s4533 + $0x10] sm:$0xf]
        %v4539 = vld [vmem:[%s4533 + $0x14] sm:$0xf]
        %v4540 = vld [vmem:[%s4533 + $0x18] sm:$0xf]
        %v4541 = vld [vmem:[%s4533 + $0x1c] sm:$0xf]
        %v4542 = vld [vmem:[%s4533 + $0x20] sm:$0xf]
        %v4543 = vld [vmem:[%s4533 + $0x24] sm:$0xf]
        %v4544 = vld [vmem:[%s4533 + $0x28] sm:$0xf]
        %v4545 = vld [vmem:[%s4533 + $0x2c] sm:$0xf]
        %v4546 = vld [vmem:[%s4533 + $0x30] sm:$0xf]
        %v4547 = vld [vmem:[%s4533 + $0x34] sm:$0xf]
        %v4548 = vld [vmem:[%s4533 + $0x38] sm:$0xf]
        %v4549 = vld [vmem:[%s4533 + $0x3c] sm:$0xf]
        %v4550 = vld [vmem:[%s4533 + $0x40] sm:$0xf]
        %v4551 = vld [vmem:[%s4533 + $0x44] sm:$0xf]
        %v4552 = vld [vmem:[%s4533 + $0x48] sm:$0xf]
        %v4553 = vld [vmem:[%s4533 + $0x4c] sm:$0xf]
        %v4554 = vld [vmem:[%s4533 + $0x50] sm:$0xf]
        %v4555 = vld [vmem:[%s4533 + $0x54] sm:$0xf]
        %v4556 = vld [vmem:[%s4533 + $0x58] sm:$0xf]
        %v4557 = vld [vmem:[%s4533 + $0x5c] sm:$0xf]
        %v4560 = vrot.slane %v4238, 1
        %v4561 = vrot.slane %v4239, 1
        %v4587 = vunpack.c.l.b16 %v4534
        %v4588 = vunpack.c.l.b16 %v4535
        %v4589 = vunpack.c.l.b16 %v4536
        %v4590 = vunpack.c.l.b16 %v4537
        %v4591 = vunpack.c.l.b16 %v4538
        %v4592 = vunpack.c.l.b16 %v4539
        %v4593 = vunpack.c.l.b16 %v4540
        %v4594 = vunpack.c.l.b16 %v4541
        %v4595 = vunpack.c.l.b16 %v4542
        %v4596 = vunpack.c.l.b16 %v4543
        %v4597 = vunpack.c.l.b16 %v4544
        %v4598 = vunpack.c.l.b16 %v4545
        %v4599 = vunpack.c.l.b16 %v4546
        %v4600 = vunpack.c.l.b16 %v4547
        %v4601 = vunpack.c.l.b16 %v4548
        %v4602 = vunpack.c.l.b16 %v4549
        %v4603 = vunpack.c.l.b16 %v4550
        %v4604 = vunpack.c.l.b16 %v4551
        %v4605 = vunpack.c.l.b16 %v4552
        %v4606 = vunpack.c.l.b16 %v4553
        %v4607 = vunpack.c.l.b16 %v4554
        %v4608 = vunpack.c.l.b16 %v4555
        %v4609 = vunpack.c.l.b16 %v4556
        %v4610 = vunpack.c.l.b16 %v4557
        %v4611 = vpack.c.b16 %v4588, %v4587
        %v4612 = vpack.c.b16 %v4590, %v4589
        %v4613 = vpack.c.b16 %v4592, %v4591
        %v4614 = vpack.c.b16 %v4594, %v4593
        %v4615 = vpack.c.b16 %v4596, %v4595
        %v4616 = vpack.c.b16 %v4598, %v4597
        %v4617 = vpack.c.b16 %v4600, %v4599
        %v4618 = vpack.c.b16 %v4602, %v4601
        %v4619 = vpack.c.b16 %v4604, %v4603
        %v4620 = vpack.c.b16 %v4606, %v4605
        %v4621 = vpack.c.b16 %v4608, %v4607
        %v4622 = vpack.c.b16 %v4610, %v4609
        %v4636 = vsel %vm529, %v4561, 0
        %4638 = vmatprep.subr.bf16.mxu0 0
        %4639 = vmatpush1.bf16.msra.mxu0 %v4618
        %4640 = vmatprep.subr.bf16.mxu0 0
        %4641 = vmatpush1.bf16.msra.mxu0 %v4617
        %4642 = vmatprep.subr.bf16.mxu0 0
        %4643 = vmatpush1.bf16.msra.mxu0 %v4616
        %4644 = vmatprep.subr.bf16.mxu0 0
        %4645 = vmatpush1.bf16.msra.mxu0 %v4615
        %4646 = vmatprep.subr.bf16.mxu0 0
        %4647 = vmatpush1.bf16.msra.mxu0 %v4614
        %4648 = vmatprep.subr.bf16.mxu0 0
        %4649 = vmatpush1.bf16.msra.mxu0 %v4613
        %4650 = vmatprep.subr.bf16.mxu0 0
        %4651 = vmatpush1.bf16.msra.mxu0 %v4612
        %4652 = vmatprep.subr.bf16.mxu0 0
        %4653 = vmatpush1.bf16.msra.mxu0 %v4611
        %4654 = vmatprep.subr.bf16.mxu0 0
        %4655 = vmatpush2.bf16.msra.mxu0 0
        %4656 = vmatprep.subr.bf16.mxu0 0
        %4657 = vmatpush2.bf16.msra.mxu0 0
        %4658 = vmatprep.subr.bf16.mxu0 0
        %4659 = vmatpush2.bf16.msra.mxu0 0
        %4660 = vmatprep.subr.bf16.mxu0 0
        %4661 = vmatpush2.bf16.msra.mxu0 0
        %4662 = vmatprep.subr.bf16.mxu0 0
        %4663 = vmatpush2.bf16.msra.mxu0 %v4622
        %4664 = vmatprep.subr.bf16.mxu0 0
        %4665 = vmatpush2.bf16.msra.mxu0 %v4621
        %4666 = vmatprep.subr.bf16.mxu0 0
        %4667 = vmatpush2.bf16.msra.mxu0 %v4620
        %4668 = vmatprep.subr.bf16.mxu0 0
        %4669 = vmatpush2.bf16.msra.mxu0 %v4619
        %4670 = vmatprep.mubr.bf16.mxu0 %v4636
        %4671 = vmatmul.mubr.bf16.gmra.mxu0 %v4560
        %v4672 = vpop.f32.mrf.mxu0
        %v4673 = vadd.f32 0.0, %v4672
        %v4674 = vpop.f32.mrf.mxu0
        %v4675 = vpop.f32.mrf.mxu0
        %v4676 = vpop.f32.mrf.mxu0
        %4677 = vdwg.mxu0
        %v4678 = vadd.f32 %v4528, %v4673
        %v4679 = vld [vmem:[%s10] sm:$0x1]
        %v4681 = vlaneseq
        %v4682 = vshrl.u32 %v4681, 7
        %v4683 = vsub.s32 0, %v4682
        %v4684 = vrot.slane %v4679, %v4683
        %v4686 = vadd.f32 %v4678, %v4684
        %v4687 = vtanh.pop %v4686
        %vm4688 = vcmask 191488
        %4689 = vst.msk [vmem:[%s447] sm:$0xf] %vm4688, %v4687
        %v4690 = vceil.f32 %v4687
        %4691 = vst.msk [vmem:[%s440] sm:$0xf] %vm4688, %v4690
        %s4692 = sand.u32 %s276, 1
        %s4693 = scalar_lea.sflag [#allocation4], %s4692
        %s4694 = sand.u32 %s276, 1
        %s4695 = smul.addr %s4694, 4
        %s4696 = scalar_lea.vmem [#allocation7], %s4695
        %s4697 = sand.u32 %s302, 1
        %s4698 = scalar_lea.sflag [#allocation9], %s4697
        %s4699 = sand.u32 %s302, 1
        %s4700 = smul.addr %s4699, 4
        %s4701 = scalar_lea.vmem [#allocation8], %s4700
        // Predicated region
        $region73: #{tpu_custom_call.1} parent=63 // pred_check
          %p4702 = pneg %p286
        $region74: #{tpu_custom_call.1} parent=63 // pred_check_branch
          %4704 = sbr.rel (%p4702) target = $region76
        $region75: #{tpu_custom_call.1} parent=63 // pred_region
          %s4706 = ssub.s32 64, 64
          %4707 = vsyncadd %s4693, %s4706
          %s4708 = smul.addr %s32, 64
          %s4709 = scalar_lea.hbm %s11, %s4708
          %s4711 = sshll.u32 %s4696, 4
          %s4712 = int_to_ptr.vmem [resolvable:$true] %s4711
          %4714 = dma.vmem_to_hbm [thread:$0]  %s4712, 64, %s4709, %s4693
        $region76: #{tpu_custom_call.1} parent=63 // pred_fallthru
          _
        // Predicated region
        $region77: #{tpu_custom_call.1} parent=63 // pred_check
          %p4715 = pneg %p312
        $region78: #{tpu_custom_call.1} parent=63 // pred_check_branch
          %4717 = sbr.rel (%p4715) target = $region80
        $region79: #{tpu_custom_call.1} parent=63 // pred_region
          %s4719 = ssub.s32 64, 64
          %4720 = vsyncadd %s4698, %s4719
          %s4721 = smul.addr %s32, 64
          %s4722 = scalar_lea.hbm %s12, %s4721
          %s4724 = sshll.u32 %s4701, 4
          %s4725 = int_to_ptr.vmem [resolvable:$true] %s4724
          %4727 = dma.vmem_to_hbm [thread:$0]  %s4725, 64, %s4722, %s4698
        $region80: #{tpu_custom_call.1} parent=63 // pred_fallthru
          _
      $region64: #{tpu_custom_call.1} parent=5 // pred_fallthru
        _
      %p4728 = scmp.le.s32.totalorder 2, %s27
      // Predicated region
      $region81: #{tpu_custom_call.1} parent=5 // pred_check
        %p4729 = pneg %p4728
      $region82: #{tpu_custom_call.1} parent=5 // pred_check_branch
        %4731 = sbr.rel (%p4729) target = $region84
      $region83: #{tpu_custom_call.1} parent=5 // pred_region
        %s4732 = ssub.s32 %s27, 2
        // Predicated region
        $region85: #{tpu_custom_call.1} parent=83 // pred_check
          %p4733 = pneg %p292
        $region86: #{tpu_custom_call.1} parent=83 // pred_check_branch
          %4735 = sbr.rel (%p4733) target = $region88
        $region87: #{tpu_custom_call.1} parent=83 // pred_region
          %s4736 = sand.u32 %s277, 1
          %s4737 = scalar_lea.sflag [#allocation4], %s4736
          %s4738 = sand.u32 %s277, 1
          %s4739 = smul.addr %s4738, 4
          %s4740 = scalar_lea.vmem [#allocation7], %s4739
          %4741 = dma.done %s4737, 64
        $region88: #{tpu_custom_call.1} parent=83 // pred_fallthru
          _
        // Predicated region
        $region89: #{tpu_custom_call.1} parent=83 // pred_check
          %p4742 = pneg %p318
        $region90: #{tpu_custom_call.1} parent=83 // pred_check_branch
          %4744 = sbr.rel (%p4742) target = $region92
        $region91: #{tpu_custom_call.1} parent=83 // pred_region
          %s4745 = sand.u32 %s303, 1
          %s4746 = scalar_lea.sflag [#allocation9], %s4745
          %s4747 = sand.u32 %s303, 1
          %s4748 = smul.addr %s4747, 4
          %s4749 = scalar_lea.vmem [#allocation8], %s4748
          %4750 = dma.done %s4746, 64
        $region92: #{tpu_custom_call.1} parent=83 // pred_fallthru
          _
      $region84: #{tpu_custom_call.1} parent=5 // pred_fallthru
        _
    $region6: #{tpu_custom_call.1} parent=1 // loop_footer
      %s31 = sadd.s32 1, %s27
    $region7: #{tpu_custom_call.1} parent=1 // loop_footer_branch
      %26 = sbr.rel target = $region3
    $region8: #{tpu_custom_call.1} parent=1 // loop_exit
      _
    %4751 = vsyncpa [#allocation3], 1
    %s4752 = scalar_lea.sflag [#allocation3], 1
    %4753 = vsyncpa %s4752, 1
    %4754 = vsyncpa [#allocation6], 1
    %4755 = vsyncpa [#allocation4], 1
    %s4756 = scalar_lea.sflag [#allocation4], 1
    %4757 = vsyncpa %s4756, 1
    %4758 = vsyncpa [#allocation9], 1
    %s4759 = scalar_lea.sflag [#allocation9], 1
    %4760 = vsyncpa %s4759, 1

</llo_original>
